<compile_context>
chip_gen: v7x
topology: tpu7x:2x2x1
jax: 0.10.0
libtpu: 0.0.40
codegen_flags: <defaults>
</compile_context>

<pallas_src>
import math

import jax
import jax.numpy as jnp
from jax.experimental import pallas as pl
from jax.experimental.pallas import tpu as pltpu

# ---- small model hyper-parameters (scaled-down Block defaults) ----
N = 2            # batch
L = 64           # tokens
D = 32           # dim
NH = 4           # num_heads
DH = D // NH     # head_dim
E = 4            # num_experts
SP = 4           # slots_per_expert
S = E * SP       # total slots
H = int(D * 4.0) # mlp hidden
LN_EPS = 1e-5
NORM_EPS = 1e-12


# ---------- elementwise helpers ----------
def _layernorm(x, g, b):
    mu = jnp.mean(x, axis=-1, keepdims=True)
    xc = x - mu
    var = jnp.mean(xc * xc, axis=-1, keepdims=True)
    return xc * jax.lax.rsqrt(var + LN_EPS) * g + b


def _softmax_last(x):
    # In-kernel softmax: exp on the EUP; denominator via approx reciprocal (EUP slot)
    # instead of an f32 VALU divide.  ~1e-3 rel error, inside the 2e-2 tolerance.
    m = jnp.max(x, axis=-1, keepdims=True)
    e = jnp.exp(x - m)
    return e * pl.reciprocal(jnp.sum(e, axis=-1, keepdims=True), approx=True)


def _gelu_tanh(x):
    # tanh-approx GELU: transcendental goes to the EUP; deviates from the exact
    # erf GELU by <1e-3 abs, well inside the test tolerance.
    c = math.sqrt(2.0 / math.pi)
    return 0.5 * x * (1.0 + jnp.tanh(c * (x + 0.044715 * (x * x * x))))


# --------------------------------- Pallas kernel ---------------------------------
def block_kernel(x_ref, g1_ref, b1_ref, a_ref, wvp_ref, bproj_ref,
                 g2_ref, b2_ref, wr_ref, w1_ref, b1f_ref, mask_ref,
                 w2_ref, b2f_ref, o_ref):
    f32, bf16 = jnp.float32, jnp.bfloat16
    B = x_ref.shape[0]                                  # batch elems in this block
    BL = B * L

    x = x_ref[...]                                      # (B, L, D) f32
    xf = x.reshape(BL, D)                               # fused token slab

    # ---- norm1 ----
    yf = _layernorm(xf, g1_ref[...], b1_ref[...])       # (BL, D) f32
    yb = yf.astype(bf16)
    y3 = yb.reshape(B, L, D)

    # ---- attention: head-stacked folded weights -> 2 lane-dense projections ----
    # a_ref[:, h*D:(h+1)*D]   = wq_h @ wk_h^T * scale   (pre-cast bf16)
    # wvp_ref[:, h*D:(h+1)*D] = wv_h @ wproj_h          (pre-cast bf16)
    t_all = jnp.dot(yb, a_ref[...], preferred_element_type=f32).astype(bf16)   # (BL, NH*D)
    v_all = jnp.dot(yb, wvp_ref[...], preferred_element_type=f32).astype(bf16) # (BL, NH*D)

    attend = jnp.zeros((B, L, D), f32)
    for h in range(NH):                                 # static loop; single-batch einsums
        th = t_all[:, h * D:(h + 1) * D].reshape(B, L, D)
        vh = v_all[:, h * D:(h + 1) * D].reshape(B, L, D)
        s = jnp.einsum('bqd,bkd->bqk', th, y3, preferred_element_type=f32)      # (B, L, L)
        p = _softmax_last(s).astype(bf16)
        attend = attend + jnp.einsum('bqk,bkd->bqd', p, vh,
                                     preferred_element_type=f32)

    x1f = xf + attend.reshape(BL, D) + bproj_ref[...]                           # (BL, D)
    x13 = x1f.reshape(B, L, D)

    # ---- norm2 + soft router (batched over the whole block, no Python loop) ----
    zf = _layernorm(x1f, g2_ref[...], b2_ref[...])                              # (BL, D)
    znf = zf * jax.lax.rsqrt(
        jnp.maximum(jnp.sum(zf * zf, axis=-1, keepdims=True), NORM_EPS * NORM_EPS))
    z3 = zf.astype(bf16).reshape(B, L, D)
    zn3 = znf.astype(bf16).reshape(B, L, D)
    wr_b = jnp.broadcast_to(wr_ref[...][None], (B, S, D))                       # bf16 weight

    # Both orientations via the flash-style batched einsum so each softmax is a lane
    # softmax and each matmul is the standard proven form (no transposed contractions).
    logits_sl = jnp.einsum('bsd,bld->bsl', wr_b, zn3, preferred_element_type=f32)  # (B,S,L)
    logits_ls = jnp.einsum('bld,bsd->bls', zn3, wr_b, preferred_element_type=f32)  # (B,L,S)
    dispatch = _softmax_last(logits_sl)                 # softmax over tokens
    combine = _softmax_last(logits_ls)                  # softmax over slots

    slots_in = jnp.einsum('bsl,bld->bsd', dispatch.astype(bf16), z3,
                          preferred_element_type=f32)                           # (B, S, D)
    slots_f = slots_in.reshape(B * S, D).astype(bf16)

    # ---- fused block-diagonal expert MLP: two dense matmuls + precomputed mask ----
    hdn = jnp.dot(slots_f, w1_ref[...], preferred_element_type=f32) + b1f_ref[...]  # (B*S, E*H)
    hdn = _gelu_tanh(hdn) * mask_ref[...]               # keep own expert's columns
    slots_out = jnp.dot(hdn.astype(bf16), w2_ref[...],
                        preferred_element_type=f32) + b2f_ref[...]               # (B*S, D)
    so3 = slots_out.astype(bf16).reshape(B, S, D)

    # ---- combine + residual, single full-block store ----
    moe = jnp.einsum('bls,bsd->bld', combine.astype(bf16), so3,
                     preferred_element_type=f32)                                 # (B, L, D)
    o_ref[...] = x13 + moe


# ------------------------------------ wrapper ------------------------------------
def _dual_tensorcore():
    """True on chips with 2 TensorCores (v7x) / megacore (v4, v5p)."""
    try:
        kind = jax.devices()[0].device_kind.lower().replace(" ", "")
    except Exception:
        return False
    if "lite" in kind or "v5e" in kind or "v6e" in kind:
        return False
    return any(t in kind for t in ("v7", "tpu7", "7x", "v4", "v5p"))


def _fold_params(params, bblk):
    """Parameter-only preprocessing (done once per model in a real deployment)."""
    (g1, b1, wqkv_t, wproj_t, bproj, g2, b2, wr_n, w1_t, b1m, w2_t, b2m) = params
    bf16 = jnp.bfloat16
    scale = 1.0 / math.sqrt(DH)
    wq = wqkv_t[:, 0 * D:1 * D].reshape(D, NH, DH)
    wk = wqkv_t[:, 1 * D:2 * D].reshape(D, NH, DH)
    wv = wqkv_t[:, 2 * D:3 * D].reshape(D, NH, DH)
    # A[h] = wq_h @ wk_h^T * scale; Wvp[h] = wv_h @ wproj[h*DH:(h+1)*DH, :]
    a = jnp.einsum('dhk,ehk->hde', wq, wk) * scale                       # (NH, D, D)
    wvp = jnp.einsum('dhk,hke->hde', wv, wproj_t.reshape(NH, DH, D))     # (NH, D, D)
    # head-stacked (D, NH*D) matrices, pre-cast to bf16 (MXU operands only)
    a_stack = jnp.transpose(a, (1, 0, 2)).reshape(D, NH * D).astype(bf16)
    wvp_stack = jnp.transpose(wvp, (1, 0, 2)).reshape(D, NH * D).astype(bf16)
    wr_bf = wr_n.astype(bf16)                                            # (S, D)
    # expert MLP: block-diagonal flattening, weights pre-cast to bf16
    w1_flat = jnp.transpose(w1_t, (1, 0, 2)).reshape(D, E * H).astype(bf16)  # (D, E*H)
    b1_flat = b1m.reshape(1, E * H)                                          # (1, E*H) f32
    w2_stack = w2_t.reshape(E * H, D).astype(bf16)                           # (E*H, D)
    b2_full = jnp.tile(jnp.repeat(b2m[:, 0, :], SP, axis=0), (bblk, 1))      # (bblk*S, D) f32
    # precomputed block-diagonal expert mask (row-slot expert == column expert)
    rows = (jnp.arange(bblk * S) % S) // SP
    cols = jnp.arange(E * H) // H
    mask = (rows[:, None] == cols[None, :]).astype(jnp.float32)              # (bblk*S, E*H)
    return (g1, b1, a_stack, wvp_stack, bproj, g2, b2, wr_bf,
            w1_flat, b1_flat, mask, w2_stack, b2_full)


def block_forward(x, params):
    n = x.shape[0]
    # Per review: splitting µs-scale work across TensorCores duplicates the weight
    # DMA and adds per-grid-step overhead, so only shard the batch across cores
    # once N is large enough to amortize it; at N=2 use a single fused grid step
    # on every generation (v5e / v6e / v7x).
    if _dual_tensorcore() and n >= 8:
        bblk, grid = 1, (n,)
    else:
        bblk, grid = n, (1,)

    kparams = _fold_params(params, bblk)

    x_spec = pl.BlockSpec((bblk, L, D), lambda i: (i, 0, 0))

    def full_spec(shape):
        nd = len(shape)
        return pl.BlockSpec(shape, lambda i, _nd=nd: (0,) * _nd)

    grid_spec = pltpu.PrefetchScalarGridSpec(
        num_scalar_prefetch=0,
        grid=grid,
        in_specs=[x_spec] + [full_spec(p.shape) for p in kparams],
        out_specs=x_spec,
    )
    # TODO(synk): a lane-dense (N, L*D) out_spec would avoid 32-lane masked stores,
    # but the in-kernel retile cost outweighs it at this tiny size; kept (N, L, D).
    return pl.pallas_call(
        block_kernel,
        out_shape=jax.ShapeDtypeStruct(x.shape, jnp.float32),
        grid_spec=grid_spec,
        compiler_params=pltpu.CompilerParams(dimension_semantics=("parallel",)),
    )(x, *kparams)


# ------------------------------ pure-JAX reference ------------------------------
def reference(x, params):
    g1, b1, wqkv_t, wproj_t, bproj, g2, b2, wr_n, w1_t, b1m, w2_t, b2m = params

    def one(xb):
        y = _layernorm(xb, g1, b1)
        qkv = y @ wqkv_t
        q, k, v = qkv[:, :D], qkv[:, D:2 * D], qkv[:, 2 * D:]
        qh = q.reshape(L, NH, DH).transpose(1, 0, 2)
        kh = k.reshape(L, NH, DH).transpose(1, 0, 2)
        vh = v.reshape(L, NH, DH).transpose(1, 0, 2)
        scores = jnp.einsum("hqd,hkd->hqk", qh, kh) / math.sqrt(DH)
        attn = jax.nn.softmax(scores, axis=-1)
        ao = jnp.einsum("hqk,hkd->hqd", attn, vh).transpose(1, 0, 2).reshape(L, D)
        x1 = xb + ao @ wproj_t + bproj
        z = _layernorm(x1, g2, b2)
        zn = z / jnp.maximum(jnp.linalg.norm(z, axis=-1, keepdims=True), NORM_EPS)
        logits = zn @ wr_n.T
        dispatch = jax.nn.softmax(logits, axis=0)
        combine = jax.nn.softmax(logits, axis=-1)
        slots_in = dispatch.T @ z
        se = slots_in.reshape(E, SP, D)
        h1 = jax.nn.gelu(jnp.einsum("esd,edh->esh", se, w1_t) + b1m,
                         approximate=False)
        so = jnp.einsum("esh,ehd->esd", h1, w2_t) + b2m
        return x1 + combine @ so.reshape(S, D)

    return jax.vmap(one)(x)


if __name__ == "__main__":
    key = jax.random.PRNGKey(0)
    ks = jax.random.split(key, 8)

    def tn(k, shape):  # trunc_normal_(std=0.02) analogue
        return (0.02 * jax.random.truncated_normal(k, -2.0, 2.0, shape)).astype(jnp.float32)

    x = jax.random.normal(ks[0], (N, L, D), dtype=jnp.float32)

    # norm1 / norm2 (PyTorch LayerNorm default affine init)
    g1 = jnp.ones((1, D), jnp.float32); b1 = jnp.zeros((1, D), jnp.float32)
    g2 = jnp.ones((1, D), jnp.float32); b2 = jnp.zeros((1, D), jnp.float32)

    # Attention: qkv (no bias), proj (with bias) — weights pre-transposed for y @ W^T
    wqkv_t = tn(ks[1], (3 * D, D)).T                       # (D, 3D)
    wproj_t = tn(ks[2], (D, D)).T                          # (D, D)
    bproj = (0.01 * jax.random.normal(ks[6], (1, D))).astype(jnp.float32)

    # SoftRouter: weight (S, D), scale scalar. Row-normalize * scale is
    # parameter-only preprocessing; the per-token normalize stays in-kernel.
    wr = tn(ks[3], (S, D)); r_scale = jnp.float32(1.0)
    wr_n = r_scale * wr / jnp.maximum(jnp.linalg.norm(wr, axis=-1, keepdims=True), NORM_EPS)

    # ExpertLinear MLP: fc1 (E, H, D) + zero bias, fc2 (E, D, H) + zero bias
    w1_t = jnp.transpose(tn(ks[4], (E, H, D)), (0, 2, 1))  # (E, D, H)
    b1m = jnp.zeros((E, 1, H), jnp.float32)
    w2_t = jnp.transpose(tn(ks[5], (E, D, H)), (0, 2, 1))  # (E, H, D)
    b2m = jnp.zeros((E, 1, D), jnp.float32)

    params = (g1, b1, wqkv_t, wproj_t, bproj, g2, b2, wr_n, w1_t, b1m, w2_t, b2m)

    out = jax.block_until_ready(block_forward(x, params))
    ref = reference(x, params)

    assert out.shape == (N, L, D)
    assert bool(jnp.all(jnp.isfinite(out)))
    assert bool(jnp.allclose(out, ref, atol=2e-2, rtol=2e-2)), \
        float(jnp.max(jnp.abs(out - ref)))
    # TODO(synk): the PyTorch Block also returns an attn_state/pool dict; only the
    # tensor output x is produced here.
    print("KERNEL_OK")
</pallas_src>

<mosaic_0001>
module attributes {stable_mosaic.version = 11 : i64} {
  func.func @block_kernel(%arg0: i32, %arg1: memref<2x64x32xf32, #tpu.memory_space<vmem>>, %arg2: memref<1x32xf32, #tpu.memory_space<vmem>>, %arg3: memref<1x32xf32, #tpu.memory_space<vmem>>, %arg4: memref<32x128xbf16, #tpu.memory_space<vmem>>, %arg5: memref<32x128xbf16, #tpu.memory_space<vmem>>, %arg6: memref<1x32xf32, #tpu.memory_space<vmem>>, %arg7: memref<1x32xf32, #tpu.memory_space<vmem>>, %arg8: memref<1x32xf32, #tpu.memory_space<vmem>>, %arg9: memref<16x32xbf16, #tpu.memory_space<vmem>>, %arg10: memref<32x512xbf16, #tpu.memory_space<vmem>>, %arg11: memref<1x512xf32, #tpu.memory_space<vmem>>, %arg12: memref<32x512xf32, #tpu.memory_space<vmem>>, %arg13: memref<512x32xbf16, #tpu.memory_space<vmem>>, %arg14: memref<32x32xf32, #tpu.memory_space<vmem>>, %arg15: memref<2x64x32xf32, #tpu.memory_space<vmem>>) attributes {dimension_semantics = [#tpu.dimension_semantics<parallel>], iteration_bounds = array<i64: 1>, scalar_prefetch = 0 : i64, scratch_operands = 0 : i64, tpu.core_type = #tpu.core_type<tc>, window_params = [{transform_indices = @transform_0, window_bounds = array<i64: 2, 64, 32>}, {pipeline_mode = #tpu.pipeline_mode<synchronous>, transform_indices = @transform_1, window_bounds = array<i64: 1, 32>}, {pipeline_mode = #tpu.pipeline_mode<synchronous>, transform_indices = @transform_2, window_bounds = array<i64: 1, 32>}, {pipeline_mode = #tpu.pipeline_mode<synchronous>, transform_indices = @transform_3, window_bounds = array<i64: 32, 128>}, {pipeline_mode = #tpu.pipeline_mode<synchronous>, transform_indices = @transform_4, window_bounds = array<i64: 32, 128>}, {pipeline_mode = #tpu.pipeline_mode<synchronous>, transform_indices = @transform_5, window_bounds = array<i64: 1, 32>}, {pipeline_mode = #tpu.pipeline_mode<synchronous>, transform_indices = @transform_6, window_bounds = array<i64: 1, 32>}, {pipeline_mode = #tpu.pipeline_mode<synchronous>, transform_indices = @transform_7, window_bounds = array<i64: 1, 32>}, {pipeline_mode = #tpu.pipeline_mode<synchronous>, transform_indices = @transform_8, window_bounds = array<i64: 16, 32>}, {pipeline_mode = #tpu.pipeline_mode<synchronous>, transform_indices = @transform_9, window_bounds = array<i64: 32, 512>}, {pipeline_mode = #tpu.pipeline_mode<synchronous>, transform_indices = @transform_10, window_bounds = array<i64: 1, 512>}, {pipeline_mode = #tpu.pipeline_mode<synchronous>, transform_indices = @transform_11, window_bounds = array<i64: 32, 512>}, {pipeline_mode = #tpu.pipeline_mode<synchronous>, transform_indices = @transform_12, window_bounds = array<i64: 512, 32>}, {pipeline_mode = #tpu.pipeline_mode<synchronous>, transform_indices = @transform_13, window_bounds = array<i64: 32, 32>}, {transform_indices = @transform_14, window_bounds = array<i64: 2, 64, 32>}]} {
    %c0 = arith.constant 0 : index
    %c0_0 = arith.constant 0 : index
    %c0_1 = arith.constant 0 : index
    %0 = vector.load %arg1[%c0, %c0_0, %c0_1] : memref<2x64x32xf32, #tpu.memory_space<vmem>>, vector<2x64x32xf32>
    %1 = vector.shape_cast %0 : vector<2x64x32xf32> to vector<128x32xf32>
    %c0_2 = arith.constant 0 : index
    %c0_3 = arith.constant 0 : index
    %2 = vector.load %arg2[%c0_2, %c0_3] : memref<1x32xf32, #tpu.memory_space<vmem>>, vector<1x32xf32>
    %c0_4 = arith.constant 0 : index
    %c0_5 = arith.constant 0 : index
    %3 = vector.load %arg3[%c0_4, %c0_5] : memref<1x32xf32, #tpu.memory_space<vmem>>, vector<1x32xf32>
    %cst = arith.constant dense<0.000000e+00> : vector<128xf32>
    %4 = vector.multi_reduction <add>, %1, %cst [1] : vector<128x32xf32> to vector<128xf32>
    %5 = vector.shape_cast %4 : vector<128xf32> to vector<128x1xf32>
    %cst_6 = arith.constant 3.200000e+01 : f32
    %6 = vector.broadcast %cst_6 : f32 to vector<128x1xf32>
    %7 = arith.divf %5, %6 : vector<128x1xf32>
    %8 = vector.broadcast %7 : vector<128x1xf32> to vector<128x32xf32>
    %9 = arith.subf %1, %8 : vector<128x32xf32>
    %10 = arith.mulf %9, %9 : vector<128x32xf32>
    %cst_7 = arith.constant dense<0.000000e+00> : vector<128xf32>
    %11 = vector.multi_reduction <add>, %10, %cst_7 [1] : vector<128x32xf32> to vector<128xf32>
    %12 = vector.shape_cast %11 : vector<128xf32> to vector<128x1xf32>
    %cst_8 = arith.constant 3.200000e+01 : f32
    %13 = vector.broadcast %cst_8 : f32 to vector<128x1xf32>
    %14 = arith.divf %12, %13 : vector<128x1xf32>
    %cst_9 = arith.constant 9.99999974E-6 : f32
    %15 = vector.broadcast %cst_9 : f32 to vector<128x1xf32>
    %16 = arith.addf %14, %15 : vector<128x1xf32>
    %17 = math.rsqrt %16 : vector<128x1xf32>
    %18 = vector.broadcast %17 : vector<128x1xf32> to vector<128x32xf32>
    %19 = arith.mulf %9, %18 : vector<128x32xf32>
    %20 = vector.broadcast %2 : vector<1x32xf32> to vector<128x32xf32>
    %21 = arith.mulf %19, %20 : vector<128x32xf32>
    %22 = vector.broadcast %3 : vector<1x32xf32> to vector<128x32xf32>
    %23 = arith.addf %21, %22 : vector<128x32xf32>
    %24 = arith.truncf %23 : vector<128x32xf32> to vector<128x32xbf16>
    %25 = vector.shape_cast %24 : vector<128x32xbf16> to vector<2x64x32xbf16>
    %c0_10 = arith.constant 0 : index
    %c0_11 = arith.constant 0 : index
    %26 = vector.load %arg4[%c0_10, %c0_11] : memref<32x128xbf16, #tpu.memory_space<vmem>>, vector<32x128xbf16>
    %cst_12 = arith.constant dense<0.000000e+00> : vector<128x128xf32>
    %27 = tpu.matmul %24, %26, %cst_12 {dimension_numbers = #tpu.dot_dimension_numbers<[1], [0], [0], [1], [0, 0, 1, 1], [], []>} : vector<128x32xbf16>, vector<32x128xbf16>, vector<128x128xf32> -> vector<128x128xf32>
    %28 = arith.truncf %27 : vector<128x128xf32> to vector<128x128xbf16>
    %c0_13 = arith.constant 0 : index
    %c0_14 = arith.constant 0 : index
    %29 = vector.load %arg5[%c0_13, %c0_14] : memref<32x128xbf16, #tpu.memory_space<vmem>>, vector<32x128xbf16>
    %cst_15 = arith.constant dense<0.000000e+00> : vector<128x128xf32>
    %30 = tpu.matmul %24, %29, %cst_15 {dimension_numbers = #tpu.dot_dimension_numbers<[1], [0], [0], [1], [0, 0, 1, 1], [], []>} : vector<128x32xbf16>, vector<32x128xbf16>, vector<128x128xf32> -> vector<128x128xf32>
    %31 = arith.truncf %30 : vector<128x128xf32> to vector<128x128xbf16>
    %cst_16 = arith.constant 0.000000e+00 : f32
    %32 = vector.broadcast %cst_16 : f32 to vector<2x64x32xf32>
    %33 = vector.extract_strided_slice %28 {offsets = [0, 0], sizes = [128, 32], strides = [1, 1]} : vector<128x128xbf16> to vector<128x32xbf16>
    %34 = vector.shape_cast %33 : vector<128x32xbf16> to vector<2x64x32xbf16>
    %35 = vector.extract_strided_slice %31 {offsets = [0, 0], sizes = [128, 32], strides = [1, 1]} : vector<128x128xbf16> to vector<128x32xbf16>
    %36 = vector.shape_cast %35 : vector<128x32xbf16> to vector<2x64x32xbf16>
    "tpu.trace_start"() <{level = 10 : i32, message = "bqd,bkd->bqk"}> : () -> ()
    %cst_17 = arith.constant dense<0.000000e+00> : vector<2x64x64xf32>
    %37 = tpu.matmul %34, %25, %cst_17 {dimension_numbers = #tpu.dot_dimension_numbers<[2], [2], [1], [1], [0, 0, 0, 1, 1, 1], [0], [0]>} : vector<2x64x32xbf16>, vector<2x64x32xbf16>, vector<2x64x64xf32> -> vector<2x64x64xf32>
    "tpu.trace_stop"() : () -> ()
    %cst_18 = arith.constant dense<0xFF800000> : vector<2x64xf32>
    %38 = vector.multi_reduction <maximumf>, %37, %cst_18 [2] : vector<2x64x64xf32> to vector<2x64xf32>
    %39 = vector.shape_cast %38 : vector<2x64xf32> to vector<2x64x1xf32>
    %40 = vector.broadcast %39 : vector<2x64x1xf32> to vector<2x64x64xf32>
    %41 = arith.subf %37, %40 : vector<2x64x64xf32>
    %42 = math.exp %41 : vector<2x64x64xf32>
    %cst_19 = arith.constant dense<0.000000e+00> : vector<2x64xf32>
    %43 = vector.multi_reduction <add>, %42, %cst_19 [2] : vector<2x64x64xf32> to vector<2x64xf32>
    %44 = vector.shape_cast %43 : vector<2x64xf32> to vector<2x64x1xf32>
    %45 = tpu.reciprocal %44 {approx = true} : vector<2x64x1xf32> -> vector<2x64x1xf32>
    %46 = vector.broadcast %45 : vector<2x64x1xf32> to vector<2x64x64xf32>
    %47 = arith.mulf %42, %46 : vector<2x64x64xf32>
    %48 = arith.truncf %47 : vector<2x64x64xf32> to vector<2x64x64xbf16>
    "tpu.trace_start"() <{level = 10 : i32, message = "bqk,bkd->bqd"}> : () -> ()
    %cst_20 = arith.constant dense<0.000000e+00> : vector<2x64x32xf32>
    %49 = tpu.matmul %48, %36, %cst_20 {dimension_numbers = #tpu.dot_dimension_numbers<[2], [1], [1], [2], [0, 0, 0, 1, 1, 2], [0], [0]>} : vector<2x64x64xbf16>, vector<2x64x32xbf16>, vector<2x64x32xf32> -> vector<2x64x32xf32>
    "tpu.trace_stop"() : () -> ()
    %50 = arith.addf %32, %49 : vector<2x64x32xf32>
    %51 = vector.extract_strided_slice %28 {offsets = [0, 32], sizes = [128, 32], strides = [1, 1]} : vector<128x128xbf16> to vector<128x32xbf16>
    %52 = vector.shape_cast %51 : vector<128x32xbf16> to vector<2x64x32xbf16>
    %53 = vector.extract_strided_slice %31 {offsets = [0, 32], sizes = [128, 32], strides = [1, 1]} : vector<128x128xbf16> to vector<128x32xbf16>
    %54 = vector.shape_cast %53 : vector<128x32xbf16> to vector<2x64x32xbf16>
    "tpu.trace_start"() <{level = 10 : i32, message = "bqd,bkd->bqk"}> : () -> ()
    %cst_21 = arith.constant dense<0.000000e+00> : vector<2x64x64xf32>
    %55 = tpu.matmul %52, %25, %cst_21 {dimension_numbers = #tpu.dot_dimension_numbers<[2], [2], [1], [1], [0, 0, 0, 1, 1, 1], [0], [0]>} : vector<2x64x32xbf16>, vector<2x64x32xbf16>, vector<2x64x64xf32> -> vector<2x64x64xf32>
    "tpu.trace_stop"() : () -> ()
    %cst_22 = arith.constant dense<0xFF800000> : vector<2x64xf32>
    %56 = vector.multi_reduction <maximumf>, %55, %cst_22 [2] : vector<2x64x64xf32> to vector<2x64xf32>
    %57 = vector.shape_cast %56 : vector<2x64xf32> to vector<2x64x1xf32>
    %58 = vector.broadcast %57 : vector<2x64x1xf32> to vector<2x64x64xf32>
    %59 = arith.subf %55, %58 : vector<2x64x64xf32>
    %60 = math.exp %59 : vector<2x64x64xf32>
    %cst_23 = arith.constant dense<0.000000e+00> : vector<2x64xf32>
    %61 = vector.multi_reduction <add>, %60, %cst_23 [2] : vector<2x64x64xf32> to vector<2x64xf32>
    %62 = vector.shape_cast %61 : vector<2x64xf32> to vector<2x64x1xf32>
    %63 = tpu.reciprocal %62 {approx = true} : vector<2x64x1xf32> -> vector<2x64x1xf32>
    %64 = vector.broadcast %63 : vector<2x64x1xf32> to vector<2x64x64xf32>
    %65 = arith.mulf %60, %64 : vector<2x64x64xf32>
    %66 = arith.truncf %65 : vector<2x64x64xf32> to vector<2x64x64xbf16>
    "tpu.trace_start"() <{level = 10 : i32, message = "bqk,bkd->bqd"}> : () -> ()
    %cst_24 = arith.constant dense<0.000000e+00> : vector<2x64x32xf32>
    %67 = tpu.matmul %66, %54, %cst_24 {dimension_numbers = #tpu.dot_dimension_numbers<[2], [1], [1], [2], [0, 0, 0, 1, 1, 2], [0], [0]>} : vector<2x64x64xbf16>, vector<2x64x32xbf16>, vector<2x64x32xf32> -> vector<2x64x32xf32>
    "tpu.trace_stop"() : () -> ()
    %68 = arith.addf %50, %67 : vector<2x64x32xf32>
    %69 = vector.extract_strided_slice %28 {offsets = [0, 64], sizes = [128, 32], strides = [1, 1]} : vector<128x128xbf16> to vector<128x32xbf16>
    %70 = vector.shape_cast %69 : vector<128x32xbf16> to vector<2x64x32xbf16>
    %71 = vector.extract_strided_slice %31 {offsets = [0, 64], sizes = [128, 32], strides = [1, 1]} : vector<128x128xbf16> to vector<128x32xbf16>
    %72 = vector.shape_cast %71 : vector<128x32xbf16> to vector<2x64x32xbf16>
    "tpu.trace_start"() <{level = 10 : i32, message = "bqd,bkd->bqk"}> : () -> ()
    %cst_25 = arith.constant dense<0.000000e+00> : vector<2x64x64xf32>
    %73 = tpu.matmul %70, %25, %cst_25 {dimension_numbers = #tpu.dot_dimension_numbers<[2], [2], [1], [1], [0, 0, 0, 1, 1, 1], [0], [0]>} : vector<2x64x32xbf16>, vector<2x64x32xbf16>, vector<2x64x64xf32> -> vector<2x64x64xf32>
    "tpu.trace_stop"() : () -> ()
    %cst_26 = arith.constant dense<0xFF800000> : vector<2x64xf32>
    %74 = vector.multi_reduction <maximumf>, %73, %cst_26 [2] : vector<2x64x64xf32> to vector<2x64xf32>
    %75 = vector.shape_cast %74 : vector<2x64xf32> to vector<2x64x1xf32>
    %76 = vector.broadcast %75 : vector<2x64x1xf32> to vector<2x64x64xf32>
    %77 = arith.subf %73, %76 : vector<2x64x64xf32>
    %78 = math.exp %77 : vector<2x64x64xf32>
    %cst_27 = arith.constant dense<0.000000e+00> : vector<2x64xf32>
    %79 = vector.multi_reduction <add>, %78, %cst_27 [2] : vector<2x64x64xf32> to vector<2x64xf32>
    %80 = vector.shape_cast %79 : vector<2x64xf32> to vector<2x64x1xf32>
    %81 = tpu.reciprocal %80 {approx = true} : vector<2x64x1xf32> -> vector<2x64x1xf32>
    %82 = vector.broadcast %81 : vector<2x64x1xf32> to vector<2x64x64xf32>
    %83 = arith.mulf %78, %82 : vector<2x64x64xf32>
    %84 = arith.truncf %83 : vector<2x64x64xf32> to vector<2x64x64xbf16>
    "tpu.trace_start"() <{level = 10 : i32, message = "bqk,bkd->bqd"}> : () -> ()
    %cst_28 = arith.constant dense<0.000000e+00> : vector<2x64x32xf32>
    %85 = tpu.matmul %84, %72, %cst_28 {dimension_numbers = #tpu.dot_dimension_numbers<[2], [1], [1], [2], [0, 0, 0, 1, 1, 2], [0], [0]>} : vector<2x64x64xbf16>, vector<2x64x32xbf16>, vector<2x64x32xf32> -> vector<2x64x32xf32>
    "tpu.trace_stop"() : () -> ()
    %86 = arith.addf %68, %85 : vector<2x64x32xf32>
    %87 = vector.extract_strided_slice %28 {offsets = [0, 96], sizes = [128, 32], strides = [1, 1]} : vector<128x128xbf16> to vector<128x32xbf16>
    %88 = vector.shape_cast %87 : vector<128x32xbf16> to vector<2x64x32xbf16>
    %89 = vector.extract_strided_slice %31 {offsets = [0, 96], sizes = [128, 32], strides = [1, 1]} : vector<128x128xbf16> to vector<128x32xbf16>
    %90 = vector.shape_cast %89 : vector<128x32xbf16> to vector<2x64x32xbf16>
    "tpu.trace_start"() <{level = 10 : i32, message = "bqd,bkd->bqk"}> : () -> ()
    %cst_29 = arith.constant dense<0.000000e+00> : vector<2x64x64xf32>
    %91 = tpu.matmul %88, %25, %cst_29 {dimension_numbers = #tpu.dot_dimension_numbers<[2], [2], [1], [1], [0, 0, 0, 1, 1, 1], [0], [0]>} : vector<2x64x32xbf16>, vector<2x64x32xbf16>, vector<2x64x64xf32> -> vector<2x64x64xf32>
    "tpu.trace_stop"() : () -> ()
    %cst_30 = arith.constant dense<0xFF800000> : vector<2x64xf32>
    %92 = vector.multi_reduction <maximumf>, %91, %cst_30 [2] : vector<2x64x64xf32> to vector<2x64xf32>
    %93 = vector.shape_cast %92 : vector<2x64xf32> to vector<2x64x1xf32>
    %94 = vector.broadcast %93 : vector<2x64x1xf32> to vector<2x64x64xf32>
    %95 = arith.subf %91, %94 : vector<2x64x64xf32>
    %96 = math.exp %95 : vector<2x64x64xf32>
    %cst_31 = arith.constant dense<0.000000e+00> : vector<2x64xf32>
    %97 = vector.multi_reduction <add>, %96, %cst_31 [2] : vector<2x64x64xf32> to vector<2x64xf32>
    %98 = vector.shape_cast %97 : vector<2x64xf32> to vector<2x64x1xf32>
    %99 = tpu.reciprocal %98 {approx = true} : vector<2x64x1xf32> -> vector<2x64x1xf32>
    %100 = vector.broadcast %99 : vector<2x64x1xf32> to vector<2x64x64xf32>
    %101 = arith.mulf %96, %100 : vector<2x64x64xf32>
    %102 = arith.truncf %101 : vector<2x64x64xf32> to vector<2x64x64xbf16>
    "tpu.trace_start"() <{level = 10 : i32, message = "bqk,bkd->bqd"}> : () -> ()
    %cst_32 = arith.constant dense<0.000000e+00> : vector<2x64x32xf32>
    %103 = tpu.matmul %102, %90, %cst_32 {dimension_numbers = #tpu.dot_dimension_numbers<[2], [1], [1], [2], [0, 0, 0, 1, 1, 2], [0], [0]>} : vector<2x64x64xbf16>, vector<2x64x32xbf16>, vector<2x64x32xf32> -> vector<2x64x32xf32>
    "tpu.trace_stop"() : () -> ()
    %104 = arith.addf %86, %103 : vector<2x64x32xf32>
    %105 = vector.shape_cast %104 : vector<2x64x32xf32> to vector<128x32xf32>
    %106 = arith.addf %1, %105 : vector<128x32xf32>
    %c0_33 = arith.constant 0 : index
    %c0_34 = arith.constant 0 : index
    %107 = vector.load %arg6[%c0_33, %c0_34] : memref<1x32xf32, #tpu.memory_space<vmem>>, vector<1x32xf32>
    %108 = vector.broadcast %107 : vector<1x32xf32> to vector<128x32xf32>
    %109 = arith.addf %106, %108 : vector<128x32xf32>
    %110 = vector.shape_cast %109 : vector<128x32xf32> to vector<2x64x32xf32>
    %c0_35 = arith.constant 0 : index
    %c0_36 = arith.constant 0 : index
    %111 = vector.load %arg7[%c0_35, %c0_36] : memref<1x32xf32, #tpu.memory_space<vmem>>, vector<1x32xf32>
    %c0_37 = arith.constant 0 : index
    %c0_38 = arith.constant 0 : index
    %112 = vector.load %arg8[%c0_37, %c0_38] : memref<1x32xf32, #tpu.memory_space<vmem>>, vector<1x32xf32>
    %cst_39 = arith.constant dense<0.000000e+00> : vector<128xf32>
    %113 = vector.multi_reduction <add>, %109, %cst_39 [1] : vector<128x32xf32> to vector<128xf32>
    %114 = vector.shape_cast %113 : vector<128xf32> to vector<128x1xf32>
    %cst_40 = arith.constant 3.200000e+01 : f32
    %115 = vector.broadcast %cst_40 : f32 to vector<128x1xf32>
    %116 = arith.divf %114, %115 : vector<128x1xf32>
    %117 = vector.broadcast %116 : vector<128x1xf32> to vector<128x32xf32>
    %118 = arith.subf %109, %117 : vector<128x32xf32>
    %119 = arith.mulf %118, %118 : vector<128x32xf32>
    %cst_41 = arith.constant dense<0.000000e+00> : vector<128xf32>
    %120 = vector.multi_reduction <add>, %119, %cst_41 [1] : vector<128x32xf32> to vector<128xf32>
    %121 = vector.shape_cast %120 : vector<128xf32> to vector<128x1xf32>
    %cst_42 = arith.constant 3.200000e+01 : f32
    %122 = vector.broadcast %cst_42 : f32 to vector<128x1xf32>
    %123 = arith.divf %121, %122 : vector<128x1xf32>
    %cst_43 = arith.constant 9.99999974E-6 : f32
    %124 = vector.broadcast %cst_43 : f32 to vector<128x1xf32>
    %125 = arith.addf %123, %124 : vector<128x1xf32>
    %126 = math.rsqrt %125 : vector<128x1xf32>
    %127 = vector.broadcast %126 : vector<128x1xf32> to vector<128x32xf32>
    %128 = arith.mulf %118, %127 : vector<128x32xf32>
    %129 = vector.broadcast %111 : vector<1x32xf32> to vector<128x32xf32>
    %130 = arith.mulf %128, %129 : vector<128x32xf32>
    %131 = vector.broadcast %112 : vector<1x32xf32> to vector<128x32xf32>
    %132 = arith.addf %130, %131 : vector<128x32xf32>
    %133 = arith.mulf %132, %132 : vector<128x32xf32>
    %cst_44 = arith.constant dense<0.000000e+00> : vector<128xf32>
    %134 = vector.multi_reduction <add>, %133, %cst_44 [1] : vector<128x32xf32> to vector<128xf32>
    %135 = vector.shape_cast %134 : vector<128xf32> to vector<128x1xf32>
    %cst_45 = arith.constant 1.000000e-24 : f32
    %136 = vector.broadcast %cst_45 : f32 to vector<128x1xf32>
    %137 = arith.maximumf %135, %136 : vector<128x1xf32>
    %138 = math.rsqrt %137 : vector<128x1xf32>
    %139 = vector.broadcast %138 : vector<128x1xf32> to vector<128x32xf32>
    %140 = arith.mulf %132, %139 : vector<128x32xf32>
    %141 = arith.truncf %132 : vector<128x32xf32> to vector<128x32xbf16>
    %142 = vector.shape_cast %141 : vector<128x32xbf16> to vector<2x64x32xbf16>
    %143 = arith.truncf %140 : vector<128x32xf32> to vector<128x32xbf16>
    %144 = vector.shape_cast %143 : vector<128x32xbf16> to vector<2x64x32xbf16>
    %c0_46 = arith.constant 0 : index
    %c0_47 = arith.constant 0 : index
    %145 = vector.load %arg9[%c0_46, %c0_47] : memref<16x32xbf16, #tpu.memory_space<vmem>>, vector<16x32xbf16>
    %146 = vector.shape_cast %145 : vector<16x32xbf16> to vector<1x16x32xbf16>
    %147 = vector.shape_cast %146 : vector<1x16x32xbf16> to vector<1x16x32xbf16>
    %148 = vector.broadcast %147 : vector<1x16x32xbf16> to vector<2x16x32xbf16>
    "tpu.trace_start"() <{level = 10 : i32, message = "bsd,bld->bsl"}> : () -> ()
    %cst_48 = arith.constant dense<0.000000e+00> : vector<2x16x64xf32>
    %149 = tpu.matmul %148, %144, %cst_48 {dimension_numbers = #tpu.dot_dimension_numbers<[2], [2], [1], [1], [0, 0, 0, 1, 1, 1], [0], [0]>} : vector<2x16x32xbf16>, vector<2x64x32xbf16>, vector<2x16x64xf32> -> vector<2x16x64xf32>
    "tpu.trace_stop"() : () -> ()
    "tpu.trace_start"() <{level = 10 : i32, message = "bld,bsd->bls"}> : () -> ()
    %cst_49 = arith.constant dense<0.000000e+00> : vector<2x64x16xf32>
    %150 = tpu.matmul %144, %148, %cst_49 {dimension_numbers = #tpu.dot_dimension_numbers<[2], [2], [1], [1], [0, 0, 0, 1, 1, 1], [0], [0]>} : vector<2x64x32xbf16>, vector<2x16x32xbf16>, vector<2x64x16xf32> -> vector<2x64x16xf32>
    "tpu.trace_stop"() : () -> ()
    %cst_50 = arith.constant dense<0xFF800000> : vector<2x16xf32>
    %151 = vector.multi_reduction <maximumf>, %149, %cst_50 [2] : vector<2x16x64xf32> to vector<2x16xf32>
    %152 = vector.shape_cast %151 : vector<2x16xf32> to vector<2x16x1xf32>
    %153 = vector.broadcast %152 : vector<2x16x1xf32> to vector<2x16x64xf32>
    %154 = arith.subf %149, %153 : vector<2x16x64xf32>
    %155 = math.exp %154 : vector<2x16x64xf32>
    %cst_51 = arith.constant dense<0.000000e+00> : vector<2x16xf32>
    %156 = vector.multi_reduction <add>, %155, %cst_51 [2] : vector<2x16x64xf32> to vector<2x16xf32>
    %157 = vector.shape_cast %156 : vector<2x16xf32> to vector<2x16x1xf32>
    %158 = tpu.reciprocal %157 {approx = true} : vector<2x16x1xf32> -> vector<2x16x1xf32>
    %159 = vector.broadcast %158 : vector<2x16x1xf32> to vector<2x16x64xf32>
    %160 = arith.mulf %155, %159 : vector<2x16x64xf32>
    %cst_52 = arith.constant dense<0xFF800000> : vector<2x64xf32>
    %161 = vector.multi_reduction <maximumf>, %150, %cst_52 [2] : vector<2x64x16xf32> to vector<2x64xf32>
    %162 = vector.shape_cast %161 : vector<2x64xf32> to vector<2x64x1xf32>
    %163 = vector.broadcast %162 : vector<2x64x1xf32> to vector<2x64x16xf32>
    %164 = arith.subf %150, %163 : vector<2x64x16xf32>
    %165 = math.exp %164 : vector<2x64x16xf32>
    %cst_53 = arith.constant dense<0.000000e+00> : vector<2x64xf32>
    %166 = vector.multi_reduction <add>, %165, %cst_53 [2] : vector<2x64x16xf32> to vector<2x64xf32>
    %167 = vector.shape_cast %166 : vector<2x64xf32> to vector<2x64x1xf32>
    %168 = tpu.reciprocal %167 {approx = true} : vector<2x64x1xf32> -> vector<2x64x1xf32>
    %169 = vector.broadcast %168 : vector<2x64x1xf32> to vector<2x64x16xf32>
    %170 = arith.mulf %165, %169 : vector<2x64x16xf32>
    %171 = arith.truncf %160 : vector<2x16x64xf32> to vector<2x16x64xbf16>
    "tpu.trace_start"() <{level = 10 : i32, message = "bsl,bld->bsd"}> : () -> ()
    %cst_54 = arith.constant dense<0.000000e+00> : vector<2x16x32xf32>
    %172 = tpu.matmul %171, %142, %cst_54 {dimension_numbers = #tpu.dot_dimension_numbers<[2], [1], [1], [2], [0, 0, 0, 1, 1, 2], [0], [0]>} : vector<2x16x64xbf16>, vector<2x64x32xbf16>, vector<2x16x32xf32> -> vector<2x16x32xf32>
    "tpu.trace_stop"() : () -> ()
    %173 = vector.shape_cast %172 : vector<2x16x32xf32> to vector<32x32xf32>
    %174 = arith.truncf %173 : vector<32x32xf32> to vector<32x32xbf16>
    %c0_55 = arith.constant 0 : index
    %c0_56 = arith.constant 0 : index
    %175 = vector.load %arg10[%c0_55, %c0_56] : memref<32x512xbf16, #tpu.memory_space<vmem>>, vector<32x512xbf16>
    %cst_57 = arith.constant dense<0.000000e+00> : vector<32x512xf32>
    %176 = tpu.matmul %174, %175, %cst_57 {dimension_numbers = #tpu.dot_dimension_numbers<[1], [0], [0], [1], [0, 0, 1, 1], [], []>} : vector<32x32xbf16>, vector<32x512xbf16>, vector<32x512xf32> -> vector<32x512xf32>
    %c0_58 = arith.constant 0 : index
    %c0_59 = arith.constant 0 : index
    %177 = vector.load %arg11[%c0_58, %c0_59] : memref<1x512xf32, #tpu.memory_space<vmem>>, vector<1x512xf32>
    %178 = vector.broadcast %177 : vector<1x512xf32> to vector<32x512xf32>
    %179 = arith.addf %176, %178 : vector<32x512xf32>
    %cst_60 = arith.constant 5.000000e-01 : f32
    %180 = vector.broadcast %cst_60 : f32 to vector<32x512xf32>
    %181 = arith.mulf %180, %179 : vector<32x512xf32>
    %182 = arith.mulf %179, %179 : vector<32x512xf32>
    %183 = arith.mulf %182, %179 : vector<32x512xf32>
    %cst_61 = arith.constant 4.471500e-02 : f32
    %184 = vector.broadcast %cst_61 : f32 to vector<32x512xf32>
    %185 = arith.mulf %184, %183 : vector<32x512xf32>
    %186 = arith.addf %179, %185 : vector<32x512xf32>
    %cst_62 = arith.constant 0.797884583 : f32
    %187 = vector.broadcast %cst_62 : f32 to vector<32x512xf32>
    %188 = arith.mulf %187, %186 : vector<32x512xf32>
    %189 = math.tanh %188 : vector<32x512xf32>
    %cst_63 = arith.constant 1.000000e+00 : f32
    %190 = vector.broadcast %cst_63 : f32 to vector<32x512xf32>
    %191 = arith.addf %190, %189 : vector<32x512xf32>
    %192 = arith.mulf %181, %191 : vector<32x512xf32>
    %c0_64 = arith.constant 0 : index
    %c0_65 = arith.constant 0 : index
    %193 = vector.load %arg12[%c0_64, %c0_65] : memref<32x512xf32, #tpu.memory_space<vmem>>, vector<32x512xf32>
    %194 = arith.mulf %192, %193 : vector<32x512xf32>
    %195 = arith.truncf %194 : vector<32x512xf32> to vector<32x512xbf16>
    %c0_66 = arith.constant 0 : index
    %c0_67 = arith.constant 0 : index
    %196 = vector.load %arg13[%c0_66, %c0_67] : memref<512x32xbf16, #tpu.memory_space<vmem>>, vector<512x32xbf16>
    %cst_68 = arith.constant dense<0.000000e+00> : vector<32x32xf32>
    %197 = tpu.matmul %195, %196, %cst_68 {dimension_numbers = #tpu.dot_dimension_numbers<[1], [0], [0], [1], [0, 0, 1, 1], [], []>} : vector<32x512xbf16>, vector<512x32xbf16>, vector<32x32xf32> -> vector<32x32xf32>
    %c0_69 = arith.constant 0 : index
    %c0_70 = arith.constant 0 : index
    %198 = vector.load %arg14[%c0_69, %c0_70] : memref<32x32xf32, #tpu.memory_space<vmem>>, vector<32x32xf32>
    %199 = arith.addf %197, %198 : vector<32x32xf32>
    %200 = arith.truncf %199 : vector<32x32xf32> to vector<32x32xbf16>
    %201 = vector.shape_cast %200 : vector<32x32xbf16> to vector<2x16x32xbf16>
    %202 = arith.truncf %170 : vector<2x64x16xf32> to vector<2x64x16xbf16>
    "tpu.trace_start"() <{level = 10 : i32, message = "bls,bsd->bld"}> : () -> ()
    %cst_71 = arith.constant dense<0.000000e+00> : vector<2x64x32xf32>
    %203 = tpu.matmul %202, %201, %cst_71 {dimension_numbers = #tpu.dot_dimension_numbers<[2], [1], [1], [2], [0, 0, 0, 1, 1, 2], [0], [0]>} : vector<2x64x16xbf16>, vector<2x16x32xbf16>, vector<2x64x32xf32> -> vector<2x64x32xf32>
    "tpu.trace_stop"() : () -> ()
    %204 = arith.addf %110, %203 : vector<2x64x32xf32>
    %c0_72 = arith.constant 0 : index
    %c0_73 = arith.constant 0 : index
    %c0_74 = arith.constant 0 : index
    %205 = vector.load %arg15[%c0_72, %c0_73, %c0_74] : memref<2x64x32xf32, #tpu.memory_space<vmem>>, vector<2x64x32xf32>
    tpu.vector_store %arg15[%c0_72, %c0_73, %c0_74], %204 {strides = array<i32>} : memref<2x64x32xf32, #tpu.memory_space<vmem>>, vector<2x64x32xf32>,
    return
  }
  func.func @transform_0(%arg0: i32) -> (i32, i32, i32) {
    %c0_i32 = arith.constant 0 : i32
    %c0_i32_0 = arith.constant 0 : i32
    %c0_i32_1 = arith.constant 0 : i32
    return %arg0, %c0_i32, %c0_i32_0 : i32, i32, i32
  }
  func.func @transform_1(%arg0: i32) -> (i32, i32) {
    %c0_i32 = arith.constant 0 : i32
    %c0_i32_0 = arith.constant 0 : i32
    %c0_i32_1 = arith.constant 0 : i32
    return %c0_i32, %c0_i32_0 : i32, i32
  }
  func.func @transform_2(%arg0: i32) -> (i32, i32) {
    %c0_i32 = arith.constant 0 : i32
    %c0_i32_0 = arith.constant 0 : i32
    %c0_i32_1 = arith.constant 0 : i32
    return %c0_i32, %c0_i32_0 : i32, i32
  }
  func.func @transform_3(%arg0: i32) -> (i32, i32) {
    %c0_i32 = arith.constant 0 : i32
    %c0_i32_0 = arith.constant 0 : i32
    %c0_i32_1 = arith.constant 0 : i32
    return %c0_i32, %c0_i32_0 : i32, i32
  }
  func.func @transform_4(%arg0: i32) -> (i32, i32) {
    %c0_i32 = arith.constant 0 : i32
    %c0_i32_0 = arith.constant 0 : i32
    %c0_i32_1 = arith.constant 0 : i32
    return %c0_i32, %c0_i32_0 : i32, i32
  }
  func.func @transform_5(%arg0: i32) -> (i32, i32) {
    %c0_i32 = arith.constant 0 : i32
    %c0_i32_0 = arith.constant 0 : i32
    %c0_i32_1 = arith.constant 0 : i32
    return %c0_i32, %c0_i32_0 : i32, i32
  }
  func.func @transform_6(%arg0: i32) -> (i32, i32) {
    %c0_i32 = arith.constant 0 : i32
    %c0_i32_0 = arith.constant 0 : i32
    %c0_i32_1 = arith.constant 0 : i32
    return %c0_i32, %c0_i32_0 : i32, i32
  }
  func.func @transform_7(%arg0: i32) -> (i32, i32) {
    %c0_i32 = arith.constant 0 : i32
    %c0_i32_0 = arith.constant 0 : i32
    %c0_i32_1 = arith.constant 0 : i32
    return %c0_i32, %c0_i32_0 : i32, i32
  }
  func.func @transform_8(%arg0: i32) -> (i32, i32) {
    %c0_i32 = arith.constant 0 : i32
    %c0_i32_0 = arith.constant 0 : i32
    %c0_i32_1 = arith.constant 0 : i32
    return %c0_i32, %c0_i32_0 : i32, i32
  }
  func.func @transform_9(%arg0: i32) -> (i32, i32) {
    %c0_i32 = arith.constant 0 : i32
    %c0_i32_0 = arith.constant 0 : i32
    %c0_i32_1 = arith.constant 0 : i32
    return %c0_i32, %c0_i32_0 : i32, i32
  }
  func.func @transform_10(%arg0: i32) -> (i32, i32) {
    %c0_i32 = arith.constant 0 : i32
    %c0_i32_0 = arith.constant 0 : i32
    %c0_i32_1 = arith.constant 0 : i32
    return %c0_i32, %c0_i32_0 : i32, i32
  }
  func.func @transform_11(%arg0: i32) -> (i32, i32) {
    %c0_i32 = arith.constant 0 : i32
    %c0_i32_0 = arith.constant 0 : i32
    %c0_i32_1 = arith.constant 0 : i32
    return %c0_i32, %c0_i32_0 : i32, i32
  }
  func.func @transform_12(%arg0: i32) -> (i32, i32) {
    %c0_i32 = arith.constant 0 : i32
    %c0_i32_0 = arith.constant 0 : i32
    %c0_i32_1 = arith.constant 0 : i32
    return %c0_i32, %c0_i32_0 : i32, i32
  }
  func.func @transform_13(%arg0: i32) -> (i32, i32) {
    %c0_i32 = arith.constant 0 : i32
    %c0_i32_0 = arith.constant 0 : i32
    %c0_i32_1 = arith.constant 0 : i32
    return %c0_i32, %c0_i32_0 : i32, i32
  }
  func.func @transform_14(%arg0: i32) -> (i32, i32, i32) {
    %c0_i32 = arith.constant 0 : i32
    %c0_i32_0 = arith.constant 0 : i32
    %c0_i32_1 = arith.constant 0 : i32
    return %arg0, %c0_i32, %c0_i32_0 : i32, i32, i32
  }
}

</mosaic_0001>

<llo_original>
// kernel: tpu_custom_call.1
$region0: #{tpu_custom_call.1}
  #allocation0 [shape = 'u32[]', space=smem, size = 0x4, offset = 0x4, fixed_abs, tag = 'smem constant byte address 0x4 - core index']
  #allocation1 [shape = 'u32[144,128]{1,0:T(1,128)}', space=vmem, size = 0x12000, scoped, tag = 'internal scratch']
  %s0 = inlined_call_operand.vmem [shape: f32[2,64,32], index: 0, kind: input, shape index: {}]
  %s1 = inlined_call_operand.vmem [shape: f32[1,32], index: 1, kind: input, shape index: {}]
  %s2 = inlined_call_operand.vmem [shape: f32[1,32], index: 2, kind: input, shape index: {}]
  %s3 = inlined_call_operand.vmem [shape: bf16[32,128], index: 3, kind: input, shape index: {}]
  %s4 = inlined_call_operand.vmem [shape: bf16[32,128], index: 4, kind: input, shape index: {}]
  %s5 = inlined_call_operand.vmem [shape: f32[1,32], index: 5, kind: input, shape index: {}]
  %s6 = inlined_call_operand.vmem [shape: f32[1,32], index: 6, kind: input, shape index: {}]
  %s7 = inlined_call_operand.vmem [shape: f32[1,32], index: 7, kind: input, shape index: {}]
  %s8 = inlined_call_operand.vmem [shape: bf16[16,32], index: 8, kind: input, shape index: {}]
  %s9 = inlined_call_operand.vmem [shape: bf16[32,512], index: 9, kind: input, shape index: {}]
  %s10 = inlined_call_operand.vmem [shape: f32[1,512], index: 10, kind: input, shape index: {}]
  %s11 = inlined_call_operand.vmem [shape: f32[32,512], index: 11, kind: input, shape index: {}]
  %s12 = inlined_call_operand.vmem [shape: bf16[512,32], index: 12, kind: input, shape index: {}]
  %s13 = inlined_call_operand.vmem [shape: f32[32,32], index: 13, kind: input, shape index: {}]
  %s14 = inlined_call_operand.vmem [shape: f32[2,64,32], index: 14, kind: output, shape index: {}]
  %s15 = sld [smem:[#allocation0]]
  $region66: #{tpu_custom_call.1} parent=0
    _
  %s17 = ssub.s32 1, %s15
  %s18 = scalar_select 0, %s17, %s15
  // Predicated region
  $region2: #{tpu_custom_call.1} parent=0 // pred_check
    _
  $region3: #{tpu_custom_call.1} parent=0 // pred_check_branch
    %20 = sbr.rel (0) target = $region5
  $region4: #{tpu_custom_call.1} parent=0 // pred_region
    _
  $region5: #{tpu_custom_call.1} parent=0 // pred_fallthru
    _
  // Predicated region
  $region6: #{tpu_custom_call.1} parent=0 // pred_check
    _
  $region7: #{tpu_custom_call.1} parent=0 // pred_check_branch
    %22 = sbr.rel (0) target = $region9
  $region8: #{tpu_custom_call.1} parent=0 // pred_region
    _
  $region9: #{tpu_custom_call.1} parent=0 // pred_fallthru
    _
  // Predicated region
  $region10: #{tpu_custom_call.1} parent=0 // pred_check
    _
  $region11: #{tpu_custom_call.1} parent=0 // pred_check_branch
    %24 = sbr.rel (0) target = $region13
  $region12: #{tpu_custom_call.1} parent=0 // pred_region
    _
  $region13: #{tpu_custom_call.1} parent=0 // pred_fallthru
    _
  // Predicated region
  $region14: #{tpu_custom_call.1} parent=0 // pred_check
    _
  $region15: #{tpu_custom_call.1} parent=0 // pred_check_branch
    %26 = sbr.rel (0) target = $region17
  $region16: #{tpu_custom_call.1} parent=0 // pred_region
    _
  $region17: #{tpu_custom_call.1} parent=0 // pred_fallthru
    _
  // Predicated region
  $region18: #{tpu_custom_call.1} parent=0 // pred_check
    _
  $region19: #{tpu_custom_call.1} parent=0 // pred_check_branch
    %28 = sbr.rel (0) target = $region21
  $region20: #{tpu_custom_call.1} parent=0 // pred_region
    _
  $region21: #{tpu_custom_call.1} parent=0 // pred_fallthru
    _
  // Predicated region
  $region22: #{tpu_custom_call.1} parent=0 // pred_check
    _
  $region23: #{tpu_custom_call.1} parent=0 // pred_check_branch
    %30 = sbr.rel (0) target = $region25
  $region24: #{tpu_custom_call.1} parent=0 // pred_region
    _
  $region25: #{tpu_custom_call.1} parent=0 // pred_fallthru
    _
  // Predicated region
  $region26: #{tpu_custom_call.1} parent=0 // pred_check
    _
  $region27: #{tpu_custom_call.1} parent=0 // pred_check_branch
    %32 = sbr.rel (0) target = $region29
  $region28: #{tpu_custom_call.1} parent=0 // pred_region
    _
  $region29: #{tpu_custom_call.1} parent=0 // pred_fallthru
    _
  // Predicated region
  $region30: #{tpu_custom_call.1} parent=0 // pred_check
    _
  $region31: #{tpu_custom_call.1} parent=0 // pred_check_branch
    %34 = sbr.rel (0) target = $region33
  $region32: #{tpu_custom_call.1} parent=0 // pred_region
    _
  $region33: #{tpu_custom_call.1} parent=0 // pred_fallthru
    _
  // Predicated region
  $region34: #{tpu_custom_call.1} parent=0 // pred_check
    _
  $region35: #{tpu_custom_call.1} parent=0 // pred_check_branch
    %36 = sbr.rel (0) target = $region37
  $region36: #{tpu_custom_call.1} parent=0 // pred_region
    _
  $region37: #{tpu_custom_call.1} parent=0 // pred_fallthru
    _
  // Predicated region
  $region38: #{tpu_custom_call.1} parent=0 // pred_check
    _
  $region39: #{tpu_custom_call.1} parent=0 // pred_check_branch
    %38 = sbr.rel (0) target = $region41
  $region40: #{tpu_custom_call.1} parent=0 // pred_region
    _
  $region41: #{tpu_custom_call.1} parent=0 // pred_fallthru
    _
  // Predicated region
  $region42: #{tpu_custom_call.1} parent=0 // pred_check
    _
  $region43: #{tpu_custom_call.1} parent=0 // pred_check_branch
    %40 = sbr.rel (0) target = $region45
  $region44: #{tpu_custom_call.1} parent=0 // pred_region
    _
  $region45: #{tpu_custom_call.1} parent=0 // pred_fallthru
    _
  // Predicated region
  $region46: #{tpu_custom_call.1} parent=0 // pred_check
    _
  $region47: #{tpu_custom_call.1} parent=0 // pred_check_branch
    %42 = sbr.rel (0) target = $region49
  $region48: #{tpu_custom_call.1} parent=0 // pred_region
    _
  $region49: #{tpu_custom_call.1} parent=0 // pred_fallthru
    _
  // Predicated region
  $region50: #{tpu_custom_call.1} parent=0 // pred_check
    _
  $region51: #{tpu_custom_call.1} parent=0 // pred_check_branch
    %44 = sbr.rel (0) target = $region53
  $region52: #{tpu_custom_call.1} parent=0 // pred_region
    _
  $region53: #{tpu_custom_call.1} parent=0 // pred_fallthru
    _
  // Predicated region
  $region54: #{tpu_custom_call.1} parent=0 // pred_check
    _
  $region55: #{tpu_custom_call.1} parent=0 // pred_check_branch
    %46 = sbr.rel (0) target = $region57
  $region56: #{tpu_custom_call.1} parent=0 // pred_region
    _
  $region57: #{tpu_custom_call.1} parent=0 // pred_fallthru
    _
  %v48 = vld [vmem:[%s0] sm:$0xff]
  %v49 = vld [vmem:[%s0 + $0x8] sm:$0xff]
  %v50 = vld [vmem:[%s0 + $0x10] sm:$0xff]
  %v51 = vld [vmem:[%s0 + $0x18] sm:$0xff]
  %v52 = vld [vmem:[%s0 + $0x20] sm:$0xff]
  %v53 = vld [vmem:[%s0 + $0x28] sm:$0xff]
  %v54 = vld [vmem:[%s0 + $0x30] sm:$0xff]
  %v55 = vld [vmem:[%s0 + $0x38] sm:$0xff]
  %v56 = vld [vmem:[%s0 + $0x40] sm:$0xff]
  %v57 = vld [vmem:[%s0 + $0x48] sm:$0xff]
  %v58 = vld [vmem:[%s0 + $0x50] sm:$0xff]
  %v59 = vld [vmem:[%s0 + $0x58] sm:$0xff]
  %v60 = vld [vmem:[%s0 + $0x60] sm:$0xff]
  %v61 = vld [vmem:[%s0 + $0x68] sm:$0xff]
  %v62 = vld [vmem:[%s0 + $0x70] sm:$0xff]
  %v63 = vld [vmem:[%s0 + $0x78] sm:$0xff]
  %v64 = vld [vmem:[%s1] sm:$0x1]
  %v65 = vld [vmem:[%s2] sm:$0x1]
  %vm66 = vcmask 261120
  %v67 = vsel %vm66, %v48, 0.0
  %68 = vadd.xlane.f32.xlu0 %v67
  %v69 = vpop.xlane.xlu0 %68
  %v70 = vsel %vm66, %v49, 0.0
  %71 = vadd.xlane.f32.xlu0 %v70
  %v72 = vpop.xlane.xlu0 %71
  %v73 = vsel %vm66, %v50, 0.0
  %74 = vadd.xlane.f32.xlu0 %v73
  %v75 = vpop.xlane.xlu0 %74
  %v76 = vsel %vm66, %v51, 0.0
  %77 = vadd.xlane.f32.xlu0 %v76
  %v78 = vpop.xlane.xlu0 %77
  %v79 = vsel %vm66, %v52, 0.0
  %80 = vadd.xlane.f32.xlu0 %v79
  %v81 = vpop.xlane.xlu0 %80
  %v82 = vsel %vm66, %v53, 0.0
  %83 = vadd.xlane.f32.xlu0 %v82
  %v84 = vpop.xlane.xlu0 %83
  %v85 = vsel %vm66, %v54, 0.0
  %86 = vadd.xlane.f32.xlu0 %v85
  %v87 = vpop.xlane.xlu0 %86
  %v88 = vsel %vm66, %v55, 0.0
  %89 = vadd.xlane.f32.xlu0 %v88
  %v90 = vpop.xlane.xlu0 %89
  %v91 = vsel %vm66, %v56, 0.0
  %92 = vadd.xlane.f32.xlu0 %v91
  %v93 = vpop.xlane.xlu0 %92
  %v94 = vsel %vm66, %v57, 0.0
  %95 = vadd.xlane.f32.xlu0 %v94
  %v96 = vpop.xlane.xlu0 %95
  %v97 = vsel %vm66, %v58, 0.0
  %98 = vadd.xlane.f32.xlu0 %v97
  %v99 = vpop.xlane.xlu0 %98
  %v100 = vsel %vm66, %v59, 0.0
  %101 = vadd.xlane.f32.xlu0 %v100
  %v102 = vpop.xlane.xlu0 %101
  %v103 = vsel %vm66, %v60, 0.0
  %104 = vadd.xlane.f32.xlu0 %v103
  %v105 = vpop.xlane.xlu0 %104
  %v106 = vsel %vm66, %v61, 0.0
  %107 = vadd.xlane.f32.xlu0 %v106
  %v108 = vpop.xlane.xlu0 %107
  %v109 = vsel %vm66, %v62, 0.0
  %110 = vadd.xlane.f32.xlu0 %v109
  %v111 = vpop.xlane.xlu0 %110
  %v112 = vsel %vm66, %v63, 0.0
  %113 = vadd.xlane.f32.xlu0 %v112
  %v114 = vpop.xlane.xlu0 %113
  %v115 = vrcp.pop 32.0
  %v116 = vmul.f32 %v69, %v115
  %v117 = vmul.f32 %v72, %v115
  %v118 = vmul.f32 %v75, %v115
  %v119 = vmul.f32 %v78, %v115
  %v120 = vmul.f32 %v81, %v115
  %v121 = vmul.f32 %v84, %v115
  %v122 = vmul.f32 %v87, %v115
  %v123 = vmul.f32 %v90, %v115
  %v124 = vmul.f32 %v93, %v115
  %v125 = vmul.f32 %v96, %v115
  %v126 = vmul.f32 %v99, %v115
  %v127 = vmul.f32 %v102, %v115
  %v128 = vmul.f32 %v105, %v115
  %v129 = vmul.f32 %v108, %v115
  %v130 = vmul.f32 %v111, %v115
  %v131 = vmul.f32 %v114, %v115
  %v132 = vsub.f32 %v48, %v116
  %v133 = vsub.f32 %v49, %v117
  %v134 = vsub.f32 %v50, %v118
  %v135 = vsub.f32 %v51, %v119
  %v136 = vsub.f32 %v52, %v120
  %v137 = vsub.f32 %v53, %v121
  %v138 = vsub.f32 %v54, %v122
  %v139 = vsub.f32 %v55, %v123
  %v140 = vsub.f32 %v56, %v124
  %v141 = vsub.f32 %v57, %v125
  %v142 = vsub.f32 %v58, %v126
  %v143 = vsub.f32 %v59, %v127
  %v144 = vsub.f32 %v60, %v128
  %v145 = vsub.f32 %v61, %v129
  %v146 = vsub.f32 %v62, %v130
  %v147 = vsub.f32 %v63, %v131
  %v148 = vmul.f32 %v132, %v132
  %v149 = vmul.f32 %v133, %v133
  %v150 = vmul.f32 %v134, %v134
  %v151 = vmul.f32 %v135, %v135
  %v152 = vmul.f32 %v136, %v136
  %v153 = vmul.f32 %v137, %v137
  %v154 = vmul.f32 %v138, %v138
  %v155 = vmul.f32 %v139, %v139
  %v156 = vmul.f32 %v140, %v140
  %v157 = vmul.f32 %v141, %v141
  %v158 = vmul.f32 %v142, %v142
  %v159 = vmul.f32 %v143, %v143
  %v160 = vmul.f32 %v144, %v144
  %v161 = vmul.f32 %v145, %v145
  %v162 = vmul.f32 %v146, %v146
  %v163 = vmul.f32 %v147, %v147
  %v164 = vsel %vm66, %v148, 0.0
  %165 = vadd.xlane.f32.xlu0 %v164
  %v166 = vpop.xlane.xlu0 %165
  %v167 = vsel %vm66, %v149, 0.0
  %168 = vadd.xlane.f32.xlu0 %v167
  %v169 = vpop.xlane.xlu0 %168
  %v170 = vsel %vm66, %v150, 0.0
  %171 = vadd.xlane.f32.xlu0 %v170
  %v172 = vpop.xlane.xlu0 %171
  %v173 = vsel %vm66, %v151, 0.0
  %174 = vadd.xlane.f32.xlu0 %v173
  %v175 = vpop.xlane.xlu0 %174
  %v176 = vsel %vm66, %v152, 0.0
  %177 = vadd.xlane.f32.xlu0 %v176
  %v178 = vpop.xlane.xlu0 %177
  %v179 = vsel %vm66, %v153, 0.0
  %180 = vadd.xlane.f32.xlu0 %v179
  %v181 = vpop.xlane.xlu0 %180
  %v182 = vsel %vm66, %v154, 0.0
  %183 = vadd.xlane.f32.xlu0 %v182
  %v184 = vpop.xlane.xlu0 %183
  %v185 = vsel %vm66, %v155, 0.0
  %186 = vadd.xlane.f32.xlu0 %v185
  %v187 = vpop.xlane.xlu0 %186
  %v188 = vsel %vm66, %v156, 0.0
  %189 = vadd.xlane.f32.xlu0 %v188
  %v190 = vpop.xlane.xlu0 %189
  %v191 = vsel %vm66, %v157, 0.0
  %192 = vadd.xlane.f32.xlu0 %v191
  %v193 = vpop.xlane.xlu0 %192
  %v194 = vsel %vm66, %v158, 0.0
  %195 = vadd.xlane.f32.xlu0 %v194
  %v196 = vpop.xlane.xlu0 %195
  %v197 = vsel %vm66, %v159, 0.0
  %198 = vadd.xlane.f32.xlu0 %v197
  %v199 = vpop.xlane.xlu0 %198
  %v200 = vsel %vm66, %v160, 0.0
  %201 = vadd.xlane.f32.xlu0 %v200
  %v202 = vpop.xlane.xlu0 %201
  %v203 = vsel %vm66, %v161, 0.0
  %204 = vadd.xlane.f32.xlu0 %v203
  %v205 = vpop.xlane.xlu0 %204
  %v206 = vsel %vm66, %v162, 0.0
  %207 = vadd.xlane.f32.xlu0 %v206
  %v208 = vpop.xlane.xlu0 %207
  %v209 = vsel %vm66, %v163, 0.0
  %210 = vadd.xlane.f32.xlu0 %v209
  %v211 = vpop.xlane.xlu0 %210
  %v212 = vmul.f32 %v166, %v115
  %v213 = vmul.f32 %v169, %v115
  %v214 = vmul.f32 %v172, %v115
  %v215 = vmul.f32 %v175, %v115
  %v216 = vmul.f32 %v178, %v115
  %v217 = vmul.f32 %v181, %v115
  %v218 = vmul.f32 %v184, %v115
  %v219 = vmul.f32 %v187, %v115
  %v220 = vmul.f32 %v190, %v115
  %v221 = vmul.f32 %v193, %v115
  %v222 = vmul.f32 %v196, %v115
  %v223 = vmul.f32 %v199, %v115
  %v224 = vmul.f32 %v202, %v115
  %v225 = vmul.f32 %v205, %v115
  %v226 = vmul.f32 %v208, %v115
  %v227 = vmul.f32 %v211, %v115
  %v228 = vadd.f32 %v212, 1e-05
  %v229 = vadd.f32 %v213, 1e-05
  %v230 = vadd.f32 %v214, 1e-05
  %v231 = vadd.f32 %v215, 1e-05
  %v232 = vadd.f32 %v216, 1e-05
  %v233 = vadd.f32 %v217, 1e-05
  %v234 = vadd.f32 %v218, 1e-05
  %v235 = vadd.f32 %v219, 1e-05
  %v236 = vadd.f32 %v220, 1e-05
  %v237 = vadd.f32 %v221, 1e-05
  %v238 = vadd.f32 %v222, 1e-05
  %v239 = vadd.f32 %v223, 1e-05
  %v240 = vadd.f32 %v224, 1e-05
  %v241 = vadd.f32 %v225, 1e-05
  %v242 = vadd.f32 %v226, 1e-05
  %v243 = vadd.f32 %v227, 1e-05
  %v244 = vrsqrt.pop %v228
  %v245 = vrsqrt.pop %v229
  %v246 = vrsqrt.pop %v230
  %v247 = vrsqrt.pop %v231
  %v248 = vrsqrt.pop %v232
  %v249 = vrsqrt.pop %v233
  %v250 = vrsqrt.pop %v234
  %v251 = vrsqrt.pop %v235
  %v252 = vrsqrt.pop %v236
  %v253 = vrsqrt.pop %v237
  %v254 = vrsqrt.pop %v238
  %v255 = vrsqrt.pop %v239
  %v256 = vrsqrt.pop %v240
  %v257 = vrsqrt.pop %v241
  %v258 = vrsqrt.pop %v242
  %v259 = vrsqrt.pop %v243
  %v260 = vmul.f32 %v132, %v244
  %v261 = vmul.f32 %v133, %v245
  %v262 = vmul.f32 %v134, %v246
  %v263 = vmul.f32 %v135, %v247
  %v264 = vmul.f32 %v136, %v248
  %v265 = vmul.f32 %v137, %v249
  %v266 = vmul.f32 %v138, %v250
  %v267 = vmul.f32 %v139, %v251
  %v268 = vmul.f32 %v140, %v252
  %v269 = vmul.f32 %v141, %v253
  %v270 = vmul.f32 %v142, %v254
  %v271 = vmul.f32 %v143, %v255
  %v272 = vmul.f32 %v144, %v256
  %v273 = vmul.f32 %v145, %v257
  %v274 = vmul.f32 %v146, %v258
  %v275 = vmul.f32 %v147, %v259
  %v277 = vlaneseq
  %v278 = vshrl.u32 %v277, 7
  %v279 = vsub.s32 0, %v278
  %v280 = vrot.slane %v64, %v279
  %v282 = vmul.f32 %v260, %v280
  %v283 = vmul.f32 %v261, %v280
  %v284 = vmul.f32 %v262, %v280
  %v285 = vmul.f32 %v263, %v280
  %v286 = vmul.f32 %v264, %v280
  %v287 = vmul.f32 %v265, %v280
  %v288 = vmul.f32 %v266, %v280
  %v289 = vmul.f32 %v267, %v280
  %v290 = vmul.f32 %v268, %v280
  %v291 = vmul.f32 %v269, %v280
  %v292 = vmul.f32 %v270, %v280
  %v293 = vmul.f32 %v271, %v280
  %v294 = vmul.f32 %v272, %v280
  %v295 = vmul.f32 %v273, %v280
  %v296 = vmul.f32 %v274, %v280
  %v297 = vmul.f32 %v275, %v280
  %v299 = vlaneseq
  %v300 = vshrl.u32 %v299, 7
  %v301 = vsub.s32 0, %v300
  %v302 = vrot.slane %v65, %v301
  %v304 = vadd.f32 %v282, %v302
  %v305 = vadd.f32 %v283, %v302
  %v306 = vadd.f32 %v284, %v302
  %v307 = vadd.f32 %v285, %v302
  %v308 = vadd.f32 %v286, %v302
  %v309 = vadd.f32 %v287, %v302
  %v310 = vadd.f32 %v288, %v302
  %v311 = vadd.f32 %v289, %v302
  %v312 = vadd.f32 %v290, %v302
  %v313 = vadd.f32 %v291, %v302
  %v314 = vadd.f32 %v292, %v302
  %v315 = vadd.f32 %v293, %v302
  %v316 = vadd.f32 %v294, %v302
  %v317 = vadd.f32 %v295, %v302
  %v318 = vadd.f32 %v296, %v302
  %v319 = vadd.f32 %v297, %v302
  %v320 = vpack.c.bf16 %v305, %v304
  %v321 = vpack.c.bf16 %v307, %v306
  %v322 = vpack.c.bf16 %v309, %v308
  %v323 = vpack.c.bf16 %v311, %v310
  %v324 = vpack.c.bf16 %v313, %v312
  %v325 = vpack.c.bf16 %v315, %v314
  %v326 = vpack.c.bf16 %v317, %v316
  %v327 = vpack.c.bf16 %v319, %v318
  %v328 = vld [vmem:[%s3] sm:$0xf]
  %v329 = vld [vmem:[%s3 + $0x4] sm:$0xf]
  %v330 = vld [vmem:[%s3 + $0x8] sm:$0xf]
  %v331 = vld [vmem:[%s3 + $0xc] sm:$0xf]
  %v336 = vunpack.c.l.b16 %v328
  %v337 = vunpack.c.l.b16 %v329
  %v338 = vunpack.c.l.b16 %v330
  %v339 = vunpack.c.l.b16 %v331
  %v340 = vpack.c.b16 %v337, %v336
  %v341 = vpack.c.b16 %v339, %v338
  %v345 = vsel %vm66, %v320, 0
  %v348 = vsel %vm66, %v321, 0
  %v351 = vsel %vm66, %v322, 0
  %v354 = vsel %vm66, %v323, 0
  %v357 = vsel %vm66, %v324, 0
  %v360 = vsel %vm66, %v325, 0
  %v363 = vsel %vm66, %v326, 0
  %v366 = vsel %vm66, %v327, 0
  %368 = vmatprep.subr.bf16.mxu0 0
  %369 = vmatpush1.bf16.msra.mxu0 %v340
  %370 = vmatprep.subr.bf16.mxu0 0
  %371 = vmatpush1.bf16.msra.mxu0 %v341
  %372 = vmatprep.subr.bf16.mxu0 0
  %373 = vmatpush1.bf16.msra.mxu0 0
  %374 = vmatprep.subr.bf16.mxu0 0
  %375 = vmatpush1.bf16.msra.mxu0 0
  %376 = vmatprep.subr.bf16.mxu0 0
  %377 = vmatpush1.bf16.msra.mxu0 0
  %378 = vmatprep.subr.bf16.mxu0 0
  %379 = vmatpush1.bf16.msra.mxu0 0
  %380 = vmatprep.subr.bf16.mxu0 0
  %381 = vmatpush1.bf16.msra.mxu0 0
  %382 = vmatprep.subr.bf16.mxu0 0
  %383 = vmatpush1.bf16.msra.mxu0 0
  %384 = vmatprep.subr.bf16.mxu0 0
  %385 = vmatpush1.bf16.msra.mxu0 0
  %386 = vmatprep.subr.bf16.mxu0 0
  %387 = vmatpush1.bf16.msra.mxu0 0
  %388 = vmatprep.subr.bf16.mxu0 0
  %389 = vmatpush1.bf16.msra.mxu0 0
  %390 = vmatprep.subr.bf16.mxu0 0
  %391 = vmatpush1.bf16.msra.mxu0 0
  %392 = vmatprep.subr.bf16.mxu0 0
  %393 = vmatpush1.bf16.msra.mxu0 0
  %394 = vmatprep.subr.bf16.mxu0 0
  %395 = vmatpush1.bf16.msra.mxu0 0
  %396 = vmatprep.subr.bf16.mxu0 0
  %397 = vmatpush1.bf16.msra.mxu0 0
  %398 = vmatprep.subr.bf16.mxu0 0
  %399 = vmatpush1.bf16.msra.mxu0 0
  %400 = vmatprep.mubr.bf16.mxu0 0
  %401 = vmatmul.mubr.bf16.gmra.mrb[0].mxu0 %v345
  %v402 = vpop.f32.mrb[0].mxu0
  %v403 = vadd.f32 0.0, %v402
  %v404 = vpop.f32.mrb[0].mxu0
  %v405 = vpop.f32.mrb[0].mxu0
  %v406 = vadd.f32 0.0, %v405
  %v407 = vpop.f32.mrb[0].mxu0
  %408 = vmatprep.mubr.bf16.mxu0 0
  %409 = vmatmul.mubr.bf16.gmra.mrb[0].mxu0 %v348
  %v410 = vpop.f32.mrb[0].mxu0
  %v411 = vadd.f32 0.0, %v410
  %v412 = vpop.f32.mrb[0].mxu0
  %v413 = vpop.f32.mrb[0].mxu0
  %v414 = vadd.f32 0.0, %v413
  %v415 = vpop.f32.mrb[0].mxu0
  %416 = vmatprep.mubr.bf16.mxu0 0
  %417 = vmatmul.mubr.bf16.gmra.mrb[0].mxu0 %v351
  %v418 = vpop.f32.mrb[0].mxu0
  %v419 = vadd.f32 0.0, %v418
  %v420 = vpop.f32.mrb[0].mxu0
  %v421 = vpop.f32.mrb[0].mxu0
  %v422 = vadd.f32 0.0, %v421
  %v423 = vpop.f32.mrb[0].mxu0
  %424 = vmatprep.mubr.bf16.mxu0 0
  %425 = vmatmul.mubr.bf16.gmra.mrb[0].mxu0 %v354
  %v426 = vpop.f32.mrb[0].mxu0
  %v427 = vadd.f32 0.0, %v426
  %v428 = vpop.f32.mrb[0].mxu0
  %v429 = vpop.f32.mrb[0].mxu0
  %v430 = vadd.f32 0.0, %v429
  %v431 = vpop.f32.mrb[0].mxu0
  %432 = vmatprep.mubr.bf16.mxu0 0
  %433 = vmatmul.mubr.bf16.gmra.mrb[0].mxu0 %v357
  %v434 = vpop.f32.mrb[0].mxu0
  %v435 = vadd.f32 0.0, %v434
  %v436 = vpop.f32.mrb[0].mxu0
  %v437 = vpop.f32.mrb[0].mxu0
  %v438 = vadd.f32 0.0, %v437
  %v439 = vpop.f32.mrb[0].mxu0
  %440 = vmatprep.mubr.bf16.mxu0 0
  %441 = vmatmul.mubr.bf16.gmra.mrb[0].mxu0 %v360
  %v442 = vpop.f32.mrb[0].mxu0
  %v443 = vadd.f32 0.0, %v442
  %v444 = vpop.f32.mrb[0].mxu0
  %v445 = vpop.f32.mrb[0].mxu0
  %v446 = vadd.f32 0.0, %v445
  %v447 = vpop.f32.mrb[0].mxu0
  %448 = vmatprep.mubr.bf16.mxu0 0
  %449 = vmatmul.mubr.bf16.gmra.mrb[0].mxu0 %v363
  %v450 = vpop.f32.mrb[0].mxu0
  %v451 = vadd.f32 0.0, %v450
  %v452 = vpop.f32.mrb[0].mxu0
  %v453 = vpop.f32.mrb[0].mxu0
  %v454 = vadd.f32 0.0, %v453
  %v455 = vpop.f32.mrb[0].mxu0
  %456 = vmatprep.mubr.bf16.mxu0 0
  %457 = vmatmul.mubr.bf16.gmra.mrb[0].mxu0 %v366
  %v458 = vpop.f32.mrb[0].mxu0
  %v459 = vadd.f32 0.0, %v458
  %v460 = vpop.f32.mrb[0].mxu0
  %v461 = vpop.f32.mrb[0].mxu0
  %v462 = vadd.f32 0.0, %v461
  %v463 = vpop.f32.mrb[0].mxu0
  %464 = vdwg.mxu0
  %v465 = vpack.c.bf16 %v406, %v403
  %v466 = vpack.c.bf16 %v414, %v411
  %v467 = vpack.c.bf16 %v422, %v419
  %v468 = vpack.c.bf16 %v430, %v427
  %v469 = vpack.c.bf16 %v438, %v435
  %v470 = vpack.c.bf16 %v446, %v443
  %v471 = vpack.c.bf16 %v454, %v451
  %v472 = vpack.c.bf16 %v462, %v459
  %v473 = vld [vmem:[%s4] sm:$0xf]
  %v474 = vld [vmem:[%s4 + $0x4] sm:$0xf]
  %v475 = vld [vmem:[%s4 + $0x8] sm:$0xf]
  %v476 = vld [vmem:[%s4 + $0xc] sm:$0xf]
  %v481 = vunpack.c.l.b16 %v473
  %v482 = vunpack.c.l.b16 %v474
  %v483 = vunpack.c.l.b16 %v475
  %v484 = vunpack.c.l.b16 %v476
  %v485 = vpack.c.b16 %v482, %v481
  %v486 = vpack.c.b16 %v484, %v483
  %489 = vmatprep.subr.bf16.mxu0 0
  %490 = vmatpush1.bf16.msra.mxu0 %v485
  %491 = vmatprep.subr.bf16.mxu0 0
  %492 = vmatpush1.bf16.msra.mxu0 %v486
  %493 = vmatprep.subr.bf16.mxu0 0
  %494 = vmatpush1.bf16.msra.mxu0 0
  %495 = vmatprep.subr.bf16.mxu0 0
  %496 = vmatpush1.bf16.msra.mxu0 0
  %497 = vmatprep.subr.bf16.mxu0 0
  %498 = vmatpush1.bf16.msra.mxu0 0
  %499 = vmatprep.subr.bf16.mxu0 0
  %500 = vmatpush1.bf16.msra.mxu0 0
  %501 = vmatprep.subr.bf16.mxu0 0
  %502 = vmatpush1.bf16.msra.mxu0 0
  %503 = vmatprep.subr.bf16.mxu0 0
  %504 = vmatpush1.bf16.msra.mxu0 0
  %505 = vmatprep.subr.bf16.mxu0 0
  %506 = vmatpush1.bf16.msra.mxu0 0
  %507 = vmatprep.subr.bf16.mxu0 0
  %508 = vmatpush1.bf16.msra.mxu0 0
  %509 = vmatprep.subr.bf16.mxu0 0
  %510 = vmatpush1.bf16.msra.mxu0 0
  %511 = vmatprep.subr.bf16.mxu0 0
  %512 = vmatpush1.bf16.msra.mxu0 0
  %513 = vmatprep.subr.bf16.mxu0 0
  %514 = vmatpush1.bf16.msra.mxu0 0
  %515 = vmatprep.subr.bf16.mxu0 0
  %516 = vmatpush1.bf16.msra.mxu0 0
  %517 = vmatprep.subr.bf16.mxu0 0
  %518 = vmatpush1.bf16.msra.mxu0 0
  %519 = vmatprep.subr.bf16.mxu0 0
  %520 = vmatpush1.bf16.msra.mxu0 0
  %521 = vmatprep.mubr.bf16.mxu0 0
  %522 = vmatmul.mubr.bf16.gmra.mrb[0].mxu0 %v345
  %v523 = vpop.f32.mrb[0].mxu0
  %v524 = vadd.f32 0.0, %v523
  %v525 = vpop.f32.mrb[0].mxu0
  %v526 = vpop.f32.mrb[0].mxu0
  %v527 = vadd.f32 0.0, %v526
  %v528 = vpop.f32.mrb[0].mxu0
  %529 = vmatprep.mubr.bf16.mxu0 0
  %530 = vmatmul.mubr.bf16.gmra.mrb[0].mxu0 %v348
  %v531 = vpop.f32.mrb[0].mxu0
  %v532 = vadd.f32 0.0, %v531
  %v533 = vpop.f32.mrb[0].mxu0
  %v534 = vpop.f32.mrb[0].mxu0
  %v535 = vadd.f32 0.0, %v534
  %v536 = vpop.f32.mrb[0].mxu0
  %537 = vmatprep.mubr.bf16.mxu0 0
  %538 = vmatmul.mubr.bf16.gmra.mrb[0].mxu0 %v351
  %v539 = vpop.f32.mrb[0].mxu0
  %v540 = vadd.f32 0.0, %v539
  %v541 = vpop.f32.mrb[0].mxu0
  %v542 = vpop.f32.mrb[0].mxu0
  %v543 = vadd.f32 0.0, %v542
  %v544 = vpop.f32.mrb[0].mxu0
  %545 = vmatprep.mubr.bf16.mxu0 0
  %546 = vmatmul.mubr.bf16.gmra.mrb[0].mxu0 %v354
  %v547 = vpop.f32.mrb[0].mxu0
  %v548 = vadd.f32 0.0, %v547
  %v549 = vpop.f32.mrb[0].mxu0
  %v550 = vpop.f32.mrb[0].mxu0
  %v551 = vadd.f32 0.0, %v550
  %v552 = vpop.f32.mrb[0].mxu0
  %553 = vmatprep.mubr.bf16.mxu0 0
  %554 = vmatmul.mubr.bf16.gmra.mrb[0].mxu0 %v357
  %v555 = vpop.f32.mrb[0].mxu0
  %v556 = vadd.f32 0.0, %v555
  %v557 = vpop.f32.mrb[0].mxu0
  %v558 = vpop.f32.mrb[0].mxu0
  %v559 = vadd.f32 0.0, %v558
  %v560 = vpop.f32.mrb[0].mxu0
  %561 = vmatprep.mubr.bf16.mxu0 0
  %562 = vmatmul.mubr.bf16.gmra.mrb[0].mxu0 %v360
  %v563 = vpop.f32.mrb[0].mxu0
  %v564 = vadd.f32 0.0, %v563
  %v565 = vpop.f32.mrb[0].mxu0
  %v566 = vpop.f32.mrb[0].mxu0
  %v567 = vadd.f32 0.0, %v566
  %v568 = vpop.f32.mrb[0].mxu0
  %569 = vmatprep.mubr.bf16.mxu0 0
  %570 = vmatmul.mubr.bf16.gmra.mrb[0].mxu0 %v363
  %v571 = vpop.f32.mrb[0].mxu0
  %v572 = vadd.f32 0.0, %v571
  %v573 = vpop.f32.mrb[0].mxu0
  %v574 = vpop.f32.mrb[0].mxu0
  %v575 = vadd.f32 0.0, %v574
  %v576 = vpop.f32.mrb[0].mxu0
  %577 = vmatprep.mubr.bf16.mxu0 0
  %578 = vmatmul.mubr.bf16.gmra.mrb[0].mxu0 %v366
  %v579 = vpop.f32.mrb[0].mxu0
  %v580 = vadd.f32 0.0, %v579
  %v581 = vpop.f32.mrb[0].mxu0
  %v582 = vpop.f32.mrb[0].mxu0
  %v583 = vadd.f32 0.0, %v582
  %v584 = vpop.f32.mrb[0].mxu0
  %585 = vdwg.mxu0
  %v586 = vpack.c.bf16 %v527, %v524
  %v587 = vpack.c.bf16 %v535, %v532
  %v588 = vpack.c.bf16 %v543, %v540
  %v589 = vpack.c.bf16 %v551, %v548
  %v590 = vpack.c.bf16 %v559, %v556
  %v591 = vpack.c.bf16 %v567, %v564
  %v592 = vpack.c.bf16 %v575, %v572
  %v593 = vpack.c.bf16 %v583, %v580
  %v595 = vsel %vm66, %v465, 0
  %v598 = vsel %vm66, %v466, 0
  %v601 = vsel %vm66, %v467, 0
  %v604 = vsel %vm66, %v468, 0
  %606 = vmatprep.subr.bf16.mxu0 0
  %607 = vmatpush1.bf16.xpose.msra.mxu0 %v345
  %608 = vmatprep.subr.bf16.mxu0 0
  %609 = vmatpush1.bf16.xpose.msra.mxu0 %v348
  %610 = vmatprep.subr.bf16.mxu0 0
  %611 = vmatpush1.bf16.xpose.msra.mxu0 %v351
  %612 = vmatprep.subr.bf16.mxu0 0
  %613 = vmatpush1.bf16.xpose.msra.mxu0 %v354
  %614 = vmatprep.subr.bf16.mxu0 0
  %615 = vmatpush1.bf16.xpose.msra.mxu0 0
  %616 = vmatprep.subr.bf16.mxu0 0
  %617 = vmatpush1.bf16.xpose.msra.mxu0 0
  %618 = vmatprep.subr.bf16.mxu0 0
  %619 = vmatpush1.bf16.xpose.msra.mxu0 0
  %620 = vmatprep.subr.bf16.mxu0 0
  %621 = vmatpush1.bf16.xpose.msra.mxu0 0
  %622 = vmatprep.subr.bf16.mxu0 0
  %623 = vmatpush1.bf16.xpose.msra.mxu0 0
  %624 = vmatprep.subr.bf16.mxu0 0
  %625 = vmatpush1.bf16.xpose.msra.mxu0 0
  %626 = vmatprep.subr.bf16.mxu0 0
  %627 = vmatpush1.bf16.xpose.msra.mxu0 0
  %628 = vmatprep.subr.bf16.mxu0 0
  %629 = vmatpush1.bf16.xpose.msra.mxu0 0
  %630 = vmatprep.subr.bf16.mxu0 0
  %631 = vmatpush1.bf16.xpose.msra.mxu0 0
  %632 = vmatprep.subr.bf16.mxu0 0
  %633 = vmatpush1.bf16.xpose.msra.mxu0 0
  %634 = vmatprep.subr.bf16.mxu0 0
  %635 = vmatpush1.bf16.xpose.msra.mxu0 0
  %636 = vmatprep.subr.bf16.mxu0 0
  %637 = vmatpush1.bf16.xpose.msra.mxu0 0
  %638 = vmatprep.mubr.bf16.mxu0 0
  %639 = vmatmul.mubr.bf16.gmra.mrb[0].mxu0 %v595
  %v640 = vpop.f32.mrb[0].mxu0
  %v641 = vadd.f32 0.0, %v640
  %v642 = vpop.f32.mrb[0].mxu0
  %v643 = vpop.f32.mrb[0].mxu0
  %v644 = vadd.f32 0.0, %v643
  %v645 = vpop.f32.mrb[0].mxu0
  %646 = vmatprep.mubr.bf16.mxu0 0
  %647 = vmatmul.mubr.bf16.gmra.mrb[0].mxu0 %v598
  %v648 = vpop.f32.mrb[0].mxu0
  %v649 = vadd.f32 0.0, %v648
  %v650 = vpop.f32.mrb[0].mxu0
  %v651 = vpop.f32.mrb[0].mxu0
  %v652 = vadd.f32 0.0, %v651
  %v653 = vpop.f32.mrb[0].mxu0
  %654 = vmatprep.mubr.bf16.mxu0 0
  %655 = vmatmul.mubr.bf16.gmra.mrb[0].mxu0 %v601
  %v656 = vpop.f32.mrb[0].mxu0
  %v657 = vadd.f32 0.0, %v656
  %v658 = vpop.f32.mrb[0].mxu0
  %v659 = vpop.f32.mrb[0].mxu0
  %v660 = vadd.f32 0.0, %v659
  %v661 = vpop.f32.mrb[0].mxu0
  %662 = vmatprep.mubr.bf16.mxu0 0
  %663 = vmatmul.mubr.bf16.gmra.mrb[0].mxu0 %v604
  %v664 = vpop.f32.mrb[0].mxu0
  %v665 = vadd.f32 0.0, %v664
  %v666 = vpop.f32.mrb[0].mxu0
  %v667 = vpop.f32.mrb[0].mxu0
  %v668 = vadd.f32 0.0, %v667
  %v669 = vpop.f32.mrb[0].mxu0
  %670 = vdwg.mxu0
  %v672 = vsel %vm66, %v469, 0
  %v675 = vsel %vm66, %v470, 0
  %v678 = vsel %vm66, %v471, 0
  %v681 = vsel %vm66, %v472, 0
  %683 = vmatprep.subr.bf16.mxu0 0
  %684 = vmatpush1.bf16.xpose.msra.mxu0 %v357
  %685 = vmatprep.subr.bf16.mxu0 0
  %686 = vmatpush1.bf16.xpose.msra.mxu0 %v360
  %687 = vmatprep.subr.bf16.mxu0 0
  %688 = vmatpush1.bf16.xpose.msra.mxu0 %v363
  %689 = vmatprep.subr.bf16.mxu0 0
  %690 = vmatpush1.bf16.xpose.msra.mxu0 %v366
  %691 = vmatprep.subr.bf16.mxu0 0
  %692 = vmatpush1.bf16.xpose.msra.mxu0 0
  %693 = vmatprep.subr.bf16.mxu0 0
  %694 = vmatpush1.bf16.xpose.msra.mxu0 0
  %695 = vmatprep.subr.bf16.mxu0 0
  %696 = vmatpush1.bf16.xpose.msra.mxu0 0
  %697 = vmatprep.subr.bf16.mxu0 0
  %698 = vmatpush1.bf16.xpose.msra.mxu0 0
  %699 = vmatprep.subr.bf16.mxu0 0
  %700 = vmatpush1.bf16.xpose.msra.mxu0 0
  %701 = vmatprep.subr.bf16.mxu0 0
  %702 = vmatpush1.bf16.xpose.msra.mxu0 0
  %703 = vmatprep.subr.bf16.mxu0 0
  %704 = vmatpush1.bf16.xpose.msra.mxu0 0
  %705 = vmatprep.subr.bf16.mxu0 0
  %706 = vmatpush1.bf16.xpose.msra.mxu0 0
  %707 = vmatprep.subr.bf16.mxu0 0
  %708 = vmatpush1.bf16.xpose.msra.mxu0 0
  %709 = vmatprep.subr.bf16.mxu0 0
  %710 = vmatpush1.bf16.xpose.msra.mxu0 0
  %711 = vmatprep.subr.bf16.mxu0 0
  %712 = vmatpush1.bf16.xpose.msra.mxu0 0
  %713 = vmatprep.subr.bf16.mxu0 0
  %714 = vmatpush1.bf16.xpose.msra.mxu0 0
  %715 = vmatprep.mubr.bf16.mxu0 0
  %716 = vmatmul.mubr.bf16.gmra.mrb[0].mxu0 %v672
  %v717 = vpop.f32.mrb[0].mxu0
  %v718 = vadd.f32 0.0, %v717
  %v719 = vpop.f32.mrb[0].mxu0
  %v720 = vpop.f32.mrb[0].mxu0
  %v721 = vadd.f32 0.0, %v720
  %v722 = vpop.f32.mrb[0].mxu0
  %723 = vmatprep.mubr.bf16.mxu0 0
  %724 = vmatmul.mubr.bf16.gmra.mrb[0].mxu0 %v675
  %v725 = vpop.f32.mrb[0].mxu0
  %v726 = vadd.f32 0.0, %v725
  %v727 = vpop.f32.mrb[0].mxu0
  %v728 = vpop.f32.mrb[0].mxu0
  %v729 = vadd.f32 0.0, %v728
  %v730 = vpop.f32.mrb[0].mxu0
  %731 = vmatprep.mubr.bf16.mxu0 0
  %732 = vmatmul.mubr.bf16.gmra.mrb[0].mxu0 %v678
  %v733 = vpop.f32.mrb[0].mxu0
  %v734 = vadd.f32 0.0, %v733
  %v735 = vpop.f32.mrb[0].mxu0
  %v736 = vpop.f32.mrb[0].mxu0
  %v737 = vadd.f32 0.0, %v736
  %v738 = vpop.f32.mrb[0].mxu0
  %739 = vmatprep.mubr.bf16.mxu0 0
  %740 = vmatmul.mubr.bf16.gmra.mrb[0].mxu0 %v681
  %v741 = vpop.f32.mrb[0].mxu0
  %v742 = vadd.f32 0.0, %v741
  %v743 = vpop.f32.mrb[0].mxu0
  %v744 = vpop.f32.mrb[0].mxu0
  %v745 = vadd.f32 0.0, %v744
  %v746 = vpop.f32.mrb[0].mxu0
  %747 = vdwg.mxu0
  %vm748 = vcmask 523264
  %v749 = vsel %vm748, %v641, -inf
  %750 = vmax.xlane.f32.xlu0 %v749
  %v751 = vpop.xlane.xlu0 %750
  %v752 = vsel %vm748, %v644, -inf
  %753 = vmax.xlane.f32.xlu0 %v752
  %v754 = vpop.xlane.xlu0 %753
  %v755 = vsel %vm748, %v649, -inf
  %756 = vmax.xlane.f32.xlu0 %v755
  %v757 = vpop.xlane.xlu0 %756
  %v758 = vsel %vm748, %v652, -inf
  %759 = vmax.xlane.f32.xlu0 %v758
  %v760 = vpop.xlane.xlu0 %759
  %v761 = vsel %vm748, %v657, -inf
  %762 = vmax.xlane.f32.xlu0 %v761
  %v763 = vpop.xlane.xlu0 %762
  %v764 = vsel %vm748, %v660, -inf
  %765 = vmax.xlane.f32.xlu0 %v764
  %v766 = vpop.xlane.xlu0 %765
  %v767 = vsel %vm748, %v665, -inf
  %768 = vmax.xlane.f32.xlu0 %v767
  %v769 = vpop.xlane.xlu0 %768
  %v770 = vsel %vm748, %v668, -inf
  %771 = vmax.xlane.f32.xlu0 %v770
  %v772 = vpop.xlane.xlu0 %771
  %v773 = vsel %vm748, %v718, -inf
  %774 = vmax.xlane.f32.xlu0 %v773
  %v775 = vpop.xlane.xlu0 %774
  %v776 = vsel %vm748, %v721, -inf
  %777 = vmax.xlane.f32.xlu0 %v776
  %v778 = vpop.xlane.xlu0 %777
  %v779 = vsel %vm748, %v726, -inf
  %780 = vmax.xlane.f32.xlu0 %v779
  %v781 = vpop.xlane.xlu0 %780
  %v782 = vsel %vm748, %v729, -inf
  %783 = vmax.xlane.f32.xlu0 %v782
  %v784 = vpop.xlane.xlu0 %783
  %v785 = vsel %vm748, %v734, -inf
  %786 = vmax.xlane.f32.xlu0 %v785
  %v787 = vpop.xlane.xlu0 %786
  %v788 = vsel %vm748, %v737, -inf
  %789 = vmax.xlane.f32.xlu0 %v788
  %v790 = vpop.xlane.xlu0 %789
  %v791 = vsel %vm748, %v742, -inf
  %792 = vmax.xlane.f32.xlu0 %v791
  %v793 = vpop.xlane.xlu0 %792
  %v794 = vsel %vm748, %v745, -inf
  %795 = vmax.xlane.f32.xlu0 %v794
  %v796 = vpop.xlane.xlu0 %795
  %v797 = vsub.f32 %v641, %v751
  %v798 = vsub.f32 %v644, %v754
  %v799 = vsub.f32 %v649, %v757
  %v800 = vsub.f32 %v652, %v760
  %v801 = vsub.f32 %v657, %v763
  %v802 = vsub.f32 %v660, %v766
  %v803 = vsub.f32 %v665, %v769
  %v804 = vsub.f32 %v668, %v772
  %v805 = vsub.f32 %v718, %v775
  %v806 = vsub.f32 %v721, %v778
  %v807 = vsub.f32 %v726, %v781
  %v808 = vsub.f32 %v729, %v784
  %v809 = vsub.f32 %v734, %v787
  %v810 = vsub.f32 %v737, %v790
  %v811 = vsub.f32 %v742, %v793
  %v812 = vsub.f32 %v745, %v796
  %v813 = vmul.f32 %v797, 1.442695
  %v814 = vpow.pop %v813
  %v815 = vmul.f32 %v798, 1.442695
  %v816 = vpow.pop %v815
  %v817 = vmul.f32 %v799, 1.442695
  %v818 = vpow.pop %v817
  %v819 = vmul.f32 %v800, 1.442695
  %v820 = vpow.pop %v819
  %v821 = vmul.f32 %v801, 1.442695
  %v822 = vpow.pop %v821
  %v823 = vmul.f32 %v802, 1.442695
  %v824 = vpow.pop %v823
  %v825 = vmul.f32 %v803, 1.442695
  %v826 = vpow.pop %v825
  %v827 = vmul.f32 %v804, 1.442695
  %v828 = vpow.pop %v827
  %v829 = vmul.f32 %v805, 1.442695
  %v830 = vpow.pop %v829
  %v831 = vmul.f32 %v806, 1.442695
  %v832 = vpow.pop %v831
  %v833 = vmul.f32 %v807, 1.442695
  %v834 = vpow.pop %v833
  %v835 = vmul.f32 %v808, 1.442695
  %v836 = vpow.pop %v835
  %v837 = vmul.f32 %v809, 1.442695
  %v838 = vpow.pop %v837
  %v839 = vmul.f32 %v810, 1.442695
  %v840 = vpow.pop %v839
  %v841 = vmul.f32 %v811, 1.442695
  %v842 = vpow.pop %v841
  %v843 = vmul.f32 %v812, 1.442695
  %v844 = vpow.pop %v843
  %v845 = vsel %vm748, %v814, 0.0
  %846 = vadd.xlane.f32.xlu0 %v845
  %v847 = vpop.xlane.xlu0 %846
  %v848 = vsel %vm748, %v816, 0.0
  %849 = vadd.xlane.f32.xlu0 %v848
  %v850 = vpop.xlane.xlu0 %849
  %v851 = vsel %vm748, %v818, 0.0
  %852 = vadd.xlane.f32.xlu0 %v851
  %v853 = vpop.xlane.xlu0 %852
  %v854 = vsel %vm748, %v820, 0.0
  %855 = vadd.xlane.f32.xlu0 %v854
  %v856 = vpop.xlane.xlu0 %855
  %v857 = vsel %vm748, %v822, 0.0
  %858 = vadd.xlane.f32.xlu0 %v857
  %v859 = vpop.xlane.xlu0 %858
  %v860 = vsel %vm748, %v824, 0.0
  %861 = vadd.xlane.f32.xlu0 %v860
  %v862 = vpop.xlane.xlu0 %861
  %v863 = vsel %vm748, %v826, 0.0
  %864 = vadd.xlane.f32.xlu0 %v863
  %v865 = vpop.xlane.xlu0 %864
  %v866 = vsel %vm748, %v828, 0.0
  %867 = vadd.xlane.f32.xlu0 %v866
  %v868 = vpop.xlane.xlu0 %867
  %v869 = vsel %vm748, %v830, 0.0
  %870 = vadd.xlane.f32.xlu0 %v869
  %v871 = vpop.xlane.xlu0 %870
  %v872 = vsel %vm748, %v832, 0.0
  %873 = vadd.xlane.f32.xlu0 %v872
  %v874 = vpop.xlane.xlu0 %873
  %v875 = vsel %vm748, %v834, 0.0
  %876 = vadd.xlane.f32.xlu0 %v875
  %v877 = vpop.xlane.xlu0 %876
  %v878 = vsel %vm748, %v836, 0.0
  %879 = vadd.xlane.f32.xlu0 %v878
  %v880 = vpop.xlane.xlu0 %879
  %v881 = vsel %vm748, %v838, 0.0
  %882 = vadd.xlane.f32.xlu0 %v881
  %v883 = vpop.xlane.xlu0 %882
  %v884 = vsel %vm748, %v840, 0.0
  %885 = vadd.xlane.f32.xlu0 %v884
  %v886 = vpop.xlane.xlu0 %885
  %v887 = vsel %vm748, %v842, 0.0
  %888 = vadd.xlane.f32.xlu0 %v887
  %v889 = vpop.xlane.xlu0 %888
  %v890 = vsel %vm748, %v844, 0.0
  %891 = vadd.xlane.f32.xlu0 %v890
  %v892 = vpop.xlane.xlu0 %891
  %v893 = vrcp.pop %v847
  %v894 = vrcp.pop %v850
  %v895 = vrcp.pop %v853
  %v896 = vrcp.pop %v856
  %v897 = vrcp.pop %v859
  %v898 = vrcp.pop %v862
  %v899 = vrcp.pop %v865
  %v900 = vrcp.pop %v868
  %v901 = vrcp.pop %v871
  %v902 = vrcp.pop %v874
  %v903 = vrcp.pop %v877
  %v904 = vrcp.pop %v880
  %v905 = vrcp.pop %v883
  %v906 = vrcp.pop %v886
  %v907 = vrcp.pop %v889
  %v908 = vrcp.pop %v892
  %v909 = vmul.f32 %v814, %v893
  %v910 = vmul.f32 %v816, %v894
  %v911 = vmul.f32 %v818, %v895
  %v912 = vmul.f32 %v820, %v896
  %v913 = vmul.f32 %v822, %v897
  %v914 = vmul.f32 %v824, %v898
  %v915 = vmul.f32 %v826, %v899
  %v916 = vmul.f32 %v828, %v900
  %v917 = vmul.f32 %v830, %v901
  %v918 = vmul.f32 %v832, %v902
  %v919 = vmul.f32 %v834, %v903
  %v920 = vmul.f32 %v836, %v904
  %v921 = vmul.f32 %v838, %v905
  %v922 = vmul.f32 %v840, %v906
  %v923 = vmul.f32 %v842, %v907
  %v924 = vmul.f32 %v844, %v908
  %v925 = vpack.c.bf16 %v910, %v909
  %v926 = vpack.c.bf16 %v912, %v911
  %v927 = vpack.c.bf16 %v914, %v913
  %v928 = vpack.c.bf16 %v916, %v915
  %v929 = vpack.c.bf16 %v918, %v917
  %v930 = vpack.c.bf16 %v920, %v919
  %v931 = vpack.c.bf16 %v922, %v921
  %v932 = vpack.c.bf16 %v924, %v923
  %937 = vrot.lane.b32.xlu0 %v465, 96
  %v938 = vpop.permute.xlu0 %937
  %939 = vrot.lane.b32.xlu0 %v466, 96
  %v940 = vpop.permute.xlu0 %939
  %941 = vrot.lane.b32.xlu0 %v467, 96
  %v942 = vpop.permute.xlu0 %941
  %943 = vrot.lane.b32.xlu0 %v468, 96
  %v944 = vpop.permute.xlu0 %943
  %v946 = vsel %vm66, %v938, 0
  %v949 = vsel %vm66, %v940, 0
  %v952 = vsel %vm66, %v942, 0
  %v955 = vsel %vm66, %v944, 0
  %957 = vmatprep.subr.bf16.mxu0 0
  %958 = vmatpush1.bf16.xpose.msra.mxu0 %v345
  %959 = vmatprep.subr.bf16.mxu0 0
  %960 = vmatpush1.bf16.xpose.msra.mxu0 %v348
  %961 = vmatprep.subr.bf16.mxu0 0
  %962 = vmatpush1.bf16.xpose.msra.mxu0 %v351
  %963 = vmatprep.subr.bf16.mxu0 0
  %964 = vmatpush1.bf16.xpose.msra.mxu0 %v354
  %965 = vmatprep.subr.bf16.mxu0 0
  %966 = vmatpush1.bf16.xpose.msra.mxu0 0
  %967 = vmatprep.subr.bf16.mxu0 0
  %968 = vmatpush1.bf16.xpose.msra.mxu0 0
  %969 = vmatprep.subr.bf16.mxu0 0
  %970 = vmatpush1.bf16.xpose.msra.mxu0 0
  %971 = vmatprep.subr.bf16.mxu0 0
  %972 = vmatpush1.bf16.xpose.msra.mxu0 0
  %973 = vmatprep.subr.bf16.mxu0 0
  %974 = vmatpush1.bf16.xpose.msra.mxu0 0
  %975 = vmatprep.subr.bf16.mxu0 0
  %976 = vmatpush1.bf16.xpose.msra.mxu0 0
  %977 = vmatprep.subr.bf16.mxu0 0
  %978 = vmatpush1.bf16.xpose.msra.mxu0 0
  %979 = vmatprep.subr.bf16.mxu0 0
  %980 = vmatpush1.bf16.xpose.msra.mxu0 0
  %981 = vmatprep.subr.bf16.mxu0 0
  %982 = vmatpush1.bf16.xpose.msra.mxu0 0
  %983 = vmatprep.subr.bf16.mxu0 0
  %984 = vmatpush1.bf16.xpose.msra.mxu0 0
  %985 = vmatprep.subr.bf16.mxu0 0
  %986 = vmatpush1.bf16.xpose.msra.mxu0 0
  %987 = vmatprep.subr.bf16.mxu0 0
  %988 = vmatpush1.bf16.xpose.msra.mxu0 0
  %989 = vmatprep.mubr.bf16.mxu0 0
  %990 = vmatmul.mubr.bf16.gmra.mrb[0].mxu0 %v946
  %v991 = vpop.f32.mrb[0].mxu0
  %v992 = vadd.f32 0.0, %v991
  %v993 = vpop.f32.mrb[0].mxu0
  %v994 = vpop.f32.mrb[0].mxu0
  %v995 = vadd.f32 0.0, %v994
  %v996 = vpop.f32.mrb[0].mxu0
  %997 = vmatprep.mubr.bf16.mxu0 0
  %998 = vmatmul.mubr.bf16.gmra.mrb[0].mxu0 %v949
  %v999 = vpop.f32.mrb[0].mxu0
  %v1000 = vadd.f32 0.0, %v999
  %v1001 = vpop.f32.mrb[0].mxu0
  %v1002 = vpop.f32.mrb[0].mxu0
  %v1003 = vadd.f32 0.0, %v1002
  %v1004 = vpop.f32.mrb[0].mxu0
  %1005 = vmatprep.mubr.bf16.mxu0 0
  %1006 = vmatmul.mubr.bf16.gmra.mrb[0].mxu0 %v952
  %v1007 = vpop.f32.mrb[0].mxu0
  %v1008 = vadd.f32 0.0, %v1007
  %v1009 = vpop.f32.mrb[0].mxu0
  %v1010 = vpop.f32.mrb[0].mxu0
  %v1011 = vadd.f32 0.0, %v1010
  %v1012 = vpop.f32.mrb[0].mxu0
  %1013 = vmatprep.mubr.bf16.mxu0 0
  %1014 = vmatmul.mubr.bf16.gmra.mrb[0].mxu0 %v955
  %v1015 = vpop.f32.mrb[0].mxu0
  %v1016 = vadd.f32 0.0, %v1015
  %v1017 = vpop.f32.mrb[0].mxu0
  %v1018 = vpop.f32.mrb[0].mxu0
  %v1019 = vadd.f32 0.0, %v1018
  %v1020 = vpop.f32.mrb[0].mxu0
  %1021 = vdwg.mxu0
  %1026 = vrot.lane.b32.xlu0 %v469, 96
  %v1027 = vpop.permute.xlu0 %1026
  %1028 = vrot.lane.b32.xlu0 %v470, 96
  %v1029 = vpop.permute.xlu0 %1028
  %1030 = vrot.lane.b32.xlu0 %v471, 96
  %v1031 = vpop.permute.xlu0 %1030
  %1032 = vrot.lane.b32.xlu0 %v472, 96
  %v1033 = vpop.permute.xlu0 %1032
  %v1035 = vsel %vm66, %v1027, 0
  %v1038 = vsel %vm66, %v1029, 0
  %v1041 = vsel %vm66, %v1031, 0
  %v1044 = vsel %vm66, %v1033, 0
  %1046 = vmatprep.subr.bf16.mxu0 0
  %1047 = vmatpush1.bf16.xpose.msra.mxu0 %v357
  %1048 = vmatprep.subr.bf16.mxu0 0
  %1049 = vmatpush1.bf16.xpose.msra.mxu0 %v360
  %1050 = vmatprep.subr.bf16.mxu0 0
  %1051 = vmatpush1.bf16.xpose.msra.mxu0 %v363
  %1052 = vmatprep.subr.bf16.mxu0 0
  %1053 = vmatpush1.bf16.xpose.msra.mxu0 %v366
  %1054 = vmatprep.subr.bf16.mxu0 0
  %1055 = vmatpush1.bf16.xpose.msra.mxu0 0
  %1056 = vmatprep.subr.bf16.mxu0 0
  %1057 = vmatpush1.bf16.xpose.msra.mxu0 0
  %1058 = vmatprep.subr.bf16.mxu0 0
  %1059 = vmatpush1.bf16.xpose.msra.mxu0 0
  %1060 = vmatprep.subr.bf16.mxu0 0
  %1061 = vmatpush1.bf16.xpose.msra.mxu0 0
  %1062 = vmatprep.subr.bf16.mxu0 0
  %1063 = vmatpush1.bf16.xpose.msra.mxu0 0
  %1064 = vmatprep.subr.bf16.mxu0 0
  %1065 = vmatpush1.bf16.xpose.msra.mxu0 0
  %1066 = vmatprep.subr.bf16.mxu0 0
  %1067 = vmatpush1.bf16.xpose.msra.mxu0 0
  %1068 = vmatprep.subr.bf16.mxu0 0
  %1069 = vmatpush1.bf16.xpose.msra.mxu0 0
  %1070 = vmatprep.subr.bf16.mxu0 0
  %1071 = vmatpush1.bf16.xpose.msra.mxu0 0
  %1072 = vmatprep.subr.bf16.mxu0 0
  %1073 = vmatpush1.bf16.xpose.msra.mxu0 0
  %1074 = vmatprep.subr.bf16.mxu0 0
  %1075 = vmatpush1.bf16.xpose.msra.mxu0 0
  %1076 = vmatprep.subr.bf16.mxu0 0
  %1077 = vmatpush1.bf16.xpose.msra.mxu0 0
  %1078 = vmatprep.mubr.bf16.mxu0 0
  %1079 = vmatmul.mubr.bf16.gmra.mrb[0].mxu0 %v1035
  %v1080 = vpop.f32.mrb[0].mxu0
  %v1081 = vadd.f32 0.0, %v1080
  %v1082 = vpop.f32.mrb[0].mxu0
  %v1083 = vpop.f32.mrb[0].mxu0
  %v1084 = vadd.f32 0.0, %v1083
  %v1085 = vpop.f32.mrb[0].mxu0
  %1086 = vmatprep.mubr.bf16.mxu0 0
  %1087 = vmatmul.mubr.bf16.gmra.mrb[0].mxu0 %v1038
  %v1088 = vpop.f32.mrb[0].mxu0
  %v1089 = vadd.f32 0.0, %v1088
  %v1090 = vpop.f32.mrb[0].mxu0
  %v1091 = vpop.f32.mrb[0].mxu0
  %v1092 = vadd.f32 0.0, %v1091
  %v1093 = vpop.f32.mrb[0].mxu0
  %1094 = vmatprep.mubr.bf16.mxu0 0
  %1095 = vmatmul.mubr.bf16.gmra.mrb[0].mxu0 %v1041
  %v1096 = vpop.f32.mrb[0].mxu0
  %v1097 = vadd.f32 0.0, %v1096
  %v1098 = vpop.f32.mrb[0].mxu0
  %v1099 = vpop.f32.mrb[0].mxu0
  %v1100 = vadd.f32 0.0, %v1099
  %v1101 = vpop.f32.mrb[0].mxu0
  %1102 = vmatprep.mubr.bf16.mxu0 0
  %1103 = vmatmul.mubr.bf16.gmra.mrb[0].mxu0 %v1044
  %v1104 = vpop.f32.mrb[0].mxu0
  %v1105 = vadd.f32 0.0, %v1104
  %v1106 = vpop.f32.mrb[0].mxu0
  %v1107 = vpop.f32.mrb[0].mxu0
  %v1108 = vadd.f32 0.0, %v1107
  %v1109 = vpop.f32.mrb[0].mxu0
  %1110 = vdwg.mxu0
  %v1111 = vsel %vm748, %v992, -inf
  %1112 = vmax.xlane.f32.xlu0 %v1111
  %v1113 = vpop.xlane.xlu0 %1112
  %v1114 = vsel %vm748, %v995, -inf
  %1115 = vmax.xlane.f32.xlu0 %v1114
  %v1116 = vpop.xlane.xlu0 %1115
  %v1117 = vsel %vm748, %v1000, -inf
  %1118 = vmax.xlane.f32.xlu0 %v1117
  %v1119 = vpop.xlane.xlu0 %1118
  %v1120 = vsel %vm748, %v1003, -inf
  %1121 = vmax.xlane.f32.xlu0 %v1120
  %v1122 = vpop.xlane.xlu0 %1121
  %v1123 = vsel %vm748, %v1008, -inf
  %1124 = vmax.xlane.f32.xlu0 %v1123
  %v1125 = vpop.xlane.xlu0 %1124
  %v1126 = vsel %vm748, %v1011, -inf
  %1127 = vmax.xlane.f32.xlu0 %v1126
  %v1128 = vpop.xlane.xlu0 %1127
  %v1129 = vsel %vm748, %v1016, -inf
  %1130 = vmax.xlane.f32.xlu0 %v1129
  %v1131 = vpop.xlane.xlu0 %1130
  %v1132 = vsel %vm748, %v1019, -inf
  %1133 = vmax.xlane.f32.xlu0 %v1132
  %v1134 = vpop.xlane.xlu0 %1133
  %v1135 = vsel %vm748, %v1081, -inf
  %1136 = vmax.xlane.f32.xlu0 %v1135
  %v1137 = vpop.xlane.xlu0 %1136
  %v1138 = vsel %vm748, %v1084, -inf
  %1139 = vmax.xlane.f32.xlu0 %v1138
  %v1140 = vpop.xlane.xlu0 %1139
  %v1141 = vsel %vm748, %v1089, -inf
  %1142 = vmax.xlane.f32.xlu0 %v1141
  %v1143 = vpop.xlane.xlu0 %1142
  %v1144 = vsel %vm748, %v1092, -inf
  %1145 = vmax.xlane.f32.xlu0 %v1144
  %v1146 = vpop.xlane.xlu0 %1145
  %v1147 = vsel %vm748, %v1097, -inf
  %1148 = vmax.xlane.f32.xlu0 %v1147
  %v1149 = vpop.xlane.xlu0 %1148
  %v1150 = vsel %vm748, %v1100, -inf
  %1151 = vmax.xlane.f32.xlu0 %v1150
  %v1152 = vpop.xlane.xlu0 %1151
  %v1153 = vsel %vm748, %v1105, -inf
  %1154 = vmax.xlane.f32.xlu0 %v1153
  %v1155 = vpop.xlane.xlu0 %1154
  %v1156 = vsel %vm748, %v1108, -inf
  %1157 = vmax.xlane.f32.xlu0 %v1156
  %v1158 = vpop.xlane.xlu0 %1157
  %v1159 = vsub.f32 %v992, %v1113
  %v1160 = vsub.f32 %v995, %v1116
  %v1161 = vsub.f32 %v1000, %v1119
  %v1162 = vsub.f32 %v1003, %v1122
  %v1163 = vsub.f32 %v1008, %v1125
  %v1164 = vsub.f32 %v1011, %v1128
  %v1165 = vsub.f32 %v1016, %v1131
  %v1166 = vsub.f32 %v1019, %v1134
  %v1167 = vsub.f32 %v1081, %v1137
  %v1168 = vsub.f32 %v1084, %v1140
  %v1169 = vsub.f32 %v1089, %v1143
  %v1170 = vsub.f32 %v1092, %v1146
  %v1171 = vsub.f32 %v1097, %v1149
  %v1172 = vsub.f32 %v1100, %v1152
  %v1173 = vsub.f32 %v1105, %v1155
  %v1174 = vsub.f32 %v1108, %v1158
  %v1175 = vmul.f32 %v1159, 1.442695
  %v1176 = vpow.pop %v1175
  %v1177 = vmul.f32 %v1160, 1.442695
  %v1178 = vpow.pop %v1177
  %v1179 = vmul.f32 %v1161, 1.442695
  %v1180 = vpow.pop %v1179
  %v1181 = vmul.f32 %v1162, 1.442695
  %v1182 = vpow.pop %v1181
  %v1183 = vmul.f32 %v1163, 1.442695
  %v1184 = vpow.pop %v1183
  %v1185 = vmul.f32 %v1164, 1.442695
  %v1186 = vpow.pop %v1185
  %v1187 = vmul.f32 %v1165, 1.442695
  %v1188 = vpow.pop %v1187
  %v1189 = vmul.f32 %v1166, 1.442695
  %v1190 = vpow.pop %v1189
  %v1191 = vmul.f32 %v1167, 1.442695
  %v1192 = vpow.pop %v1191
  %v1193 = vmul.f32 %v1168, 1.442695
  %v1194 = vpow.pop %v1193
  %v1195 = vmul.f32 %v1169, 1.442695
  %v1196 = vpow.pop %v1195
  %v1197 = vmul.f32 %v1170, 1.442695
  %v1198 = vpow.pop %v1197
  %v1199 = vmul.f32 %v1171, 1.442695
  %v1200 = vpow.pop %v1199
  %v1201 = vmul.f32 %v1172, 1.442695
  %v1202 = vpow.pop %v1201
  %v1203 = vmul.f32 %v1173, 1.442695
  %v1204 = vpow.pop %v1203
  %v1205 = vmul.f32 %v1174, 1.442695
  %v1206 = vpow.pop %v1205
  %v1207 = vsel %vm748, %v1176, 0.0
  %1208 = vadd.xlane.f32.xlu0 %v1207
  %v1209 = vpop.xlane.xlu0 %1208
  %v1210 = vsel %vm748, %v1178, 0.0
  %1211 = vadd.xlane.f32.xlu0 %v1210
  %v1212 = vpop.xlane.xlu0 %1211
  %v1213 = vsel %vm748, %v1180, 0.0
  %1214 = vadd.xlane.f32.xlu0 %v1213
  %v1215 = vpop.xlane.xlu0 %1214
  %v1216 = vsel %vm748, %v1182, 0.0
  %1217 = vadd.xlane.f32.xlu0 %v1216
  %v1218 = vpop.xlane.xlu0 %1217
  %v1219 = vsel %vm748, %v1184, 0.0
  %1220 = vadd.xlane.f32.xlu0 %v1219
  %v1221 = vpop.xlane.xlu0 %1220
  %v1222 = vsel %vm748, %v1186, 0.0
  %1223 = vadd.xlane.f32.xlu0 %v1222
  %v1224 = vpop.xlane.xlu0 %1223
  %v1225 = vsel %vm748, %v1188, 0.0
  %1226 = vadd.xlane.f32.xlu0 %v1225
  %v1227 = vpop.xlane.xlu0 %1226
  %v1228 = vsel %vm748, %v1190, 0.0
  %1229 = vadd.xlane.f32.xlu0 %v1228
  %v1230 = vpop.xlane.xlu0 %1229
  %v1231 = vsel %vm748, %v1192, 0.0
  %1232 = vadd.xlane.f32.xlu0 %v1231
  %v1233 = vpop.xlane.xlu0 %1232
  %v1234 = vsel %vm748, %v1194, 0.0
  %1235 = vadd.xlane.f32.xlu0 %v1234
  %v1236 = vpop.xlane.xlu0 %1235
  %v1237 = vsel %vm748, %v1196, 0.0
  %1238 = vadd.xlane.f32.xlu0 %v1237
  %v1239 = vpop.xlane.xlu0 %1238
  %v1240 = vsel %vm748, %v1198, 0.0
  %1241 = vadd.xlane.f32.xlu0 %v1240
  %v1242 = vpop.xlane.xlu0 %1241
  %v1243 = vsel %vm748, %v1200, 0.0
  %1244 = vadd.xlane.f32.xlu0 %v1243
  %v1245 = vpop.xlane.xlu0 %1244
  %v1246 = vsel %vm748, %v1202, 0.0
  %1247 = vadd.xlane.f32.xlu0 %v1246
  %v1248 = vpop.xlane.xlu0 %1247
  %v1249 = vsel %vm748, %v1204, 0.0
  %1250 = vadd.xlane.f32.xlu0 %v1249
  %v1251 = vpop.xlane.xlu0 %1250
  %v1252 = vsel %vm748, %v1206, 0.0
  %1253 = vadd.xlane.f32.xlu0 %v1252
  %v1254 = vpop.xlane.xlu0 %1253
  %v1255 = vrcp.pop %v1209
  %v1256 = vrcp.pop %v1212
  %v1257 = vrcp.pop %v1215
  %v1258 = vrcp.pop %v1218
  %v1259 = vrcp.pop %v1221
  %v1260 = vrcp.pop %v1224
  %v1261 = vrcp.pop %v1227
  %v1262 = vrcp.pop %v1230
  %v1263 = vrcp.pop %v1233
  %v1264 = vrcp.pop %v1236
  %v1265 = vrcp.pop %v1239
  %v1266 = vrcp.pop %v1242
  %v1267 = vrcp.pop %v1245
  %v1268 = vrcp.pop %v1248
  %v1269 = vrcp.pop %v1251
  %v1270 = vrcp.pop %v1254
  %v1271 = vmul.f32 %v1176, %v1255
  %v1272 = vmul.f32 %v1178, %v1256
  %v1273 = vmul.f32 %v1180, %v1257
  %v1274 = vmul.f32 %v1182, %v1258
  %v1275 = vmul.f32 %v1184, %v1259
  %v1276 = vmul.f32 %v1186, %v1260
  %v1277 = vmul.f32 %v1188, %v1261
  %v1278 = vmul.f32 %v1190, %v1262
  %v1279 = vmul.f32 %v1192, %v1263
  %v1280 = vmul.f32 %v1194, %v1264
  %v1281 = vmul.f32 %v1196, %v1265
  %v1282 = vmul.f32 %v1198, %v1266
  %v1283 = vmul.f32 %v1200, %v1267
  %v1284 = vmul.f32 %v1202, %v1268
  %v1285 = vmul.f32 %v1204, %v1269
  %v1286 = vmul.f32 %v1206, %v1270
  %v1287 = vpack.c.bf16 %v1272, %v1271
  %v1288 = vpack.c.bf16 %v1274, %v1273
  %v1289 = vpack.c.bf16 %v1276, %v1275
  %v1290 = vpack.c.bf16 %v1278, %v1277
  %v1291 = vpack.c.bf16 %v1280, %v1279
  %v1292 = vpack.c.bf16 %v1282, %v1281
  %v1293 = vpack.c.bf16 %v1284, %v1283
  %v1294 = vpack.c.bf16 %v1286, %v1285
  %1299 = vrot.lane.b32.xlu0 %v586, 96
  %v1300 = vpop.permute.xlu0 %1299
  %1301 = vrot.lane.b32.xlu0 %v587, 96
  %v1302 = vpop.permute.xlu0 %1301
  %1303 = vrot.lane.b32.xlu0 %v588, 96
  %v1304 = vpop.permute.xlu0 %1303
  %1305 = vrot.lane.b32.xlu0 %v589, 96
  %v1306 = vpop.permute.xlu0 %1305
  %v1312 = vsel %vm748, %v1287, 0
  %v1315 = vsel %vm748, %v1288, 0
  %v1318 = vsel %vm748, %v1289, 0
  %v1321 = vsel %vm748, %v1290, 0
  %1323 = vmatprep.subr.bf16.mxu0 0
  %1324 = vmatpush1.bf16.msra.mxu0 %v1300
  %1325 = vmatprep.subr.bf16.mxu0 0
  %1326 = vmatpush1.bf16.msra.mxu0 %v1302
  %1327 = vmatprep.subr.bf16.mxu0 0
  %1328 = vmatpush1.bf16.msra.mxu0 %v1304
  %1329 = vmatprep.subr.bf16.mxu0 0
  %1330 = vmatpush1.bf16.msra.mxu0 %v1306
  %1331 = vmatprep.subr.bf16.mxu0 0
  %1332 = vmatpush1.bf16.msra.mxu0 0
  %1333 = vmatprep.subr.bf16.mxu0 0
  %1334 = vmatpush1.bf16.msra.mxu0 0
  %1335 = vmatprep.subr.bf16.mxu0 0
  %1336 = vmatpush1.bf16.msra.mxu0 0
  %1337 = vmatprep.subr.bf16.mxu0 0
  %1338 = vmatpush1.bf16.msra.mxu0 0
  %1339 = vmatprep.subr.bf16.mxu0 0
  %1340 = vmatpush1.bf16.msra.mxu0 0
  %1341 = vmatprep.subr.bf16.mxu0 0
  %1342 = vmatpush1.bf16.msra.mxu0 0
  %1343 = vmatprep.subr.bf16.mxu0 0
  %1344 = vmatpush1.bf16.msra.mxu0 0
  %1345 = vmatprep.subr.bf16.mxu0 0
  %1346 = vmatpush1.bf16.msra.mxu0 0
  %1347 = vmatprep.subr.bf16.mxu0 0
  %1348 = vmatpush1.bf16.msra.mxu0 0
  %1349 = vmatprep.subr.bf16.mxu0 0
  %1350 = vmatpush1.bf16.msra.mxu0 0
  %1351 = vmatprep.subr.bf16.mxu0 0
  %1352 = vmatpush1.bf16.msra.mxu0 0
  %1353 = vmatprep.subr.bf16.mxu0 0
  %1354 = vmatpush1.bf16.msra.mxu0 0
  %1355 = vmatprep.mubr.bf16.mxu0 0
  %1356 = vmatmul.mubr.bf16.gmra.mrb[0].mxu0 %v1312
  %v1357 = vpop.f32.mrb[0].mxu0
  %v1358 = vadd.f32 0.0, %v1357
  %v1359 = vpop.f32.mrb[0].mxu0
  %v1360 = vpop.f32.mrb[0].mxu0
  %v1361 = vadd.f32 0.0, %v1360
  %v1362 = vpop.f32.mrb[0].mxu0
  %1363 = vmatprep.mubr.bf16.mxu0 0
  %1364 = vmatmul.mubr.bf16.gmra.mrb[0].mxu0 %v1315
  %v1365 = vpop.f32.mrb[0].mxu0
  %v1366 = vadd.f32 0.0, %v1365
  %v1367 = vpop.f32.mrb[0].mxu0
  %v1368 = vpop.f32.mrb[0].mxu0
  %v1369 = vadd.f32 0.0, %v1368
  %v1370 = vpop.f32.mrb[0].mxu0
  %1371 = vmatprep.mubr.bf16.mxu0 0
  %1372 = vmatmul.mubr.bf16.gmra.mrb[0].mxu0 %v1318
  %v1373 = vpop.f32.mrb[0].mxu0
  %v1374 = vadd.f32 0.0, %v1373
  %v1375 = vpop.f32.mrb[0].mxu0
  %v1376 = vpop.f32.mrb[0].mxu0
  %v1377 = vadd.f32 0.0, %v1376
  %v1378 = vpop.f32.mrb[0].mxu0
  %1379 = vmatprep.mubr.bf16.mxu0 0
  %1380 = vmatmul.mubr.bf16.gmra.mrb[0].mxu0 %v1321
  %v1381 = vpop.f32.mrb[0].mxu0
  %v1382 = vadd.f32 0.0, %v1381
  %v1383 = vpop.f32.mrb[0].mxu0
  %v1384 = vpop.f32.mrb[0].mxu0
  %v1385 = vadd.f32 0.0, %v1384
  %v1386 = vpop.f32.mrb[0].mxu0
  %1387 = vdwg.mxu0
  %1392 = vrot.lane.b32.xlu0 %v590, 96
  %v1393 = vpop.permute.xlu0 %1392
  %1394 = vrot.lane.b32.xlu0 %v591, 96
  %v1395 = vpop.permute.xlu0 %1394
  %1396 = vrot.lane.b32.xlu0 %v592, 96
  %v1397 = vpop.permute.xlu0 %1396
  %1398 = vrot.lane.b32.xlu0 %v593, 96
  %v1399 = vpop.permute.xlu0 %1398
  %v1405 = vsel %vm748, %v1291, 0
  %v1408 = vsel %vm748, %v1292, 0
  %v1411 = vsel %vm748, %v1293, 0
  %v1414 = vsel %vm748, %v1294, 0
  %1416 = vmatprep.subr.bf16.mxu0 0
  %1417 = vmatpush1.bf16.msra.mxu0 %v1393
  %1418 = vmatprep.subr.bf16.mxu0 0
  %1419 = vmatpush1.bf16.msra.mxu0 %v1395
  %1420 = vmatprep.subr.bf16.mxu0 0
  %1421 = vmatpush1.bf16.msra.mxu0 %v1397
  %1422 = vmatprep.subr.bf16.mxu0 0
  %1423 = vmatpush1.bf16.msra.mxu0 %v1399
  %1424 = vmatprep.subr.bf16.mxu0 0
  %1425 = vmatpush1.bf16.msra.mxu0 0
  %1426 = vmatprep.subr.bf16.mxu0 0
  %1427 = vmatpush1.bf16.msra.mxu0 0
  %1428 = vmatprep.subr.bf16.mxu0 0
  %1429 = vmatpush1.bf16.msra.mxu0 0
  %1430 = vmatprep.subr.bf16.mxu0 0
  %1431 = vmatpush1.bf16.msra.mxu0 0
  %1432 = vmatprep.subr.bf16.mxu0 0
  %1433 = vmatpush1.bf16.msra.mxu0 0
  %1434 = vmatprep.subr.bf16.mxu0 0
  %1435 = vmatpush1.bf16.msra.mxu0 0
  %1436 = vmatprep.subr.bf16.mxu0 0
  %1437 = vmatpush1.bf16.msra.mxu0 0
  %1438 = vmatprep.subr.bf16.mxu0 0
  %1439 = vmatpush1.bf16.msra.mxu0 0
  %1440 = vmatprep.subr.bf16.mxu0 0
  %1441 = vmatpush1.bf16.msra.mxu0 0
  %1442 = vmatprep.subr.bf16.mxu0 0
  %1443 = vmatpush1.bf16.msra.mxu0 0
  %1444 = vmatprep.subr.bf16.mxu0 0
  %1445 = vmatpush1.bf16.msra.mxu0 0
  %1446 = vmatprep.subr.bf16.mxu0 0
  %1447 = vmatpush1.bf16.msra.mxu0 0
  %1448 = vmatprep.mubr.bf16.mxu0 0
  %1449 = vmatmul.mubr.bf16.gmra.mrb[0].mxu0 %v1405
  %v1450 = vpop.f32.mrb[0].mxu0
  %v1451 = vadd.f32 0.0, %v1450
  %v1452 = vpop.f32.mrb[0].mxu0
  %v1453 = vpop.f32.mrb[0].mxu0
  %v1454 = vadd.f32 0.0, %v1453
  %v1455 = vpop.f32.mrb[0].mxu0
  %1456 = vmatprep.mubr.bf16.mxu0 0
  %1457 = vmatmul.mubr.bf16.gmra.mrb[0].mxu0 %v1408
  %v1458 = vpop.f32.mrb[0].mxu0
  %v1459 = vadd.f32 0.0, %v1458
  %v1460 = vpop.f32.mrb[0].mxu0
  %v1461 = vpop.f32.mrb[0].mxu0
  %v1462 = vadd.f32 0.0, %v1461
  %v1463 = vpop.f32.mrb[0].mxu0
  %1464 = vmatprep.mubr.bf16.mxu0 0
  %1465 = vmatmul.mubr.bf16.gmra.mrb[0].mxu0 %v1411
  %v1466 = vpop.f32.mrb[0].mxu0
  %v1467 = vadd.f32 0.0, %v1466
  %v1468 = vpop.f32.mrb[0].mxu0
  %v1469 = vpop.f32.mrb[0].mxu0
  %v1470 = vadd.f32 0.0, %v1469
  %v1471 = vpop.f32.mrb[0].mxu0
  %1472 = vmatprep.mubr.bf16.mxu0 0
  %1473 = vmatmul.mubr.bf16.gmra.mrb[0].mxu0 %v1414
  %v1474 = vpop.f32.mrb[0].mxu0
  %v1475 = vadd.f32 0.0, %v1474
  %v1476 = vpop.f32.mrb[0].mxu0
  %v1477 = vpop.f32.mrb[0].mxu0
  %v1478 = vadd.f32 0.0, %v1477
  %v1479 = vpop.f32.mrb[0].mxu0
  %1480 = vdwg.mxu0
  %v1482 = vsel %vm748, %v925, 0
  %v1485 = vsel %vm748, %v926, 0
  %v1488 = vsel %vm748, %v927, 0
  %v1491 = vsel %vm748, %v928, 0
  %1493 = vmatprep.subr.bf16.mxu0 0
  %1494 = vmatpush1.bf16.msra.mxu0 %v586
  %1495 = vmatprep.subr.bf16.mxu0 0
  %1496 = vmatpush1.bf16.msra.mxu0 %v587
  %1497 = vmatprep.subr.bf16.mxu0 0
  %1498 = vmatpush1.bf16.msra.mxu0 %v588
  %1499 = vmatprep.subr.bf16.mxu0 0
  %1500 = vmatpush1.bf16.msra.mxu0 %v589
  %1501 = vmatprep.subr.bf16.mxu0 0
  %1502 = vmatpush1.bf16.msra.mxu0 0
  %1503 = vmatprep.subr.bf16.mxu0 0
  %1504 = vmatpush1.bf16.msra.mxu0 0
  %1505 = vmatprep.subr.bf16.mxu0 0
  %1506 = vmatpush1.bf16.msra.mxu0 0
  %1507 = vmatprep.subr.bf16.mxu0 0
  %1508 = vmatpush1.bf16.msra.mxu0 0
  %1509 = vmatprep.subr.bf16.mxu0 0
  %1510 = vmatpush1.bf16.msra.mxu0 0
  %1511 = vmatprep.subr.bf16.mxu0 0
  %1512 = vmatpush1.bf16.msra.mxu0 0
  %1513 = vmatprep.subr.bf16.mxu0 0
  %1514 = vmatpush1.bf16.msra.mxu0 0
  %1515 = vmatprep.subr.bf16.mxu0 0
  %1516 = vmatpush1.bf16.msra.mxu0 0
  %1517 = vmatprep.subr.bf16.mxu0 0
  %1518 = vmatpush1.bf16.msra.mxu0 0
  %1519 = vmatprep.subr.bf16.mxu0 0
  %1520 = vmatpush1.bf16.msra.mxu0 0
  %1521 = vmatprep.subr.bf16.mxu0 0
  %1522 = vmatpush1.bf16.msra.mxu0 0
  %1523 = vmatprep.subr.bf16.mxu0 0
  %1524 = vmatpush1.bf16.msra.mxu0 0
  %1525 = vmatprep.mubr.bf16.mxu0 0
  %1526 = vmatmul.mubr.bf16.gmra.mrb[0].mxu0 %v1482
  %v1527 = vpop.f32.mrb[0].mxu0
  %v1528 = vadd.f32 %v1358, %v1527
  %v1529 = vpop.f32.mrb[0].mxu0
  %v1530 = vpop.f32.mrb[0].mxu0
  %v1531 = vadd.f32 %v1361, %v1530
  %v1532 = vpop.f32.mrb[0].mxu0
  %1533 = vmatprep.mubr.bf16.mxu0 0
  %1534 = vmatmul.mubr.bf16.gmra.mrb[0].mxu0 %v1485
  %v1535 = vpop.f32.mrb[0].mxu0
  %v1536 = vadd.f32 %v1366, %v1535
  %v1537 = vpop.f32.mrb[0].mxu0
  %v1538 = vpop.f32.mrb[0].mxu0
  %v1539 = vadd.f32 %v1369, %v1538
  %v1540 = vpop.f32.mrb[0].mxu0
  %1541 = vmatprep.mubr.bf16.mxu0 0
  %1542 = vmatmul.mubr.bf16.gmra.mrb[0].mxu0 %v1488
  %v1543 = vpop.f32.mrb[0].mxu0
  %v1544 = vadd.f32 %v1374, %v1543
  %v1545 = vpop.f32.mrb[0].mxu0
  %v1546 = vpop.f32.mrb[0].mxu0
  %v1547 = vadd.f32 %v1377, %v1546
  %v1548 = vpop.f32.mrb[0].mxu0
  %1549 = vmatprep.mubr.bf16.mxu0 0
  %1550 = vmatmul.mubr.bf16.gmra.mrb[0].mxu0 %v1491
  %v1551 = vpop.f32.mrb[0].mxu0
  %v1552 = vadd.f32 %v1382, %v1551
  %v1553 = vpop.f32.mrb[0].mxu0
  %v1554 = vpop.f32.mrb[0].mxu0
  %v1555 = vadd.f32 %v1385, %v1554
  %v1556 = vpop.f32.mrb[0].mxu0
  %1557 = vdwg.mxu0
  %v1559 = vsel %vm748, %v929, 0
  %v1562 = vsel %vm748, %v930, 0
  %v1565 = vsel %vm748, %v931, 0
  %v1568 = vsel %vm748, %v932, 0
  %1570 = vmatprep.subr.bf16.mxu0 0
  %1571 = vmatpush1.bf16.msra.mxu0 %v590
  %1572 = vmatprep.subr.bf16.mxu0 0
  %1573 = vmatpush1.bf16.msra.mxu0 %v591
  %1574 = vmatprep.subr.bf16.mxu0 0
  %1575 = vmatpush1.bf16.msra.mxu0 %v592
  %1576 = vmatprep.subr.bf16.mxu0 0
  %1577 = vmatpush1.bf16.msra.mxu0 %v593
  %1578 = vmatprep.subr.bf16.mxu0 0
  %1579 = vmatpush1.bf16.msra.mxu0 0
  %1580 = vmatprep.subr.bf16.mxu0 0
  %1581 = vmatpush1.bf16.msra.mxu0 0
  %1582 = vmatprep.subr.bf16.mxu0 0
  %1583 = vmatpush1.bf16.msra.mxu0 0
  %1584 = vmatprep.subr.bf16.mxu0 0
  %1585 = vmatpush1.bf16.msra.mxu0 0
  %1586 = vmatprep.subr.bf16.mxu0 0
  %1587 = vmatpush1.bf16.msra.mxu0 0
  %1588 = vmatprep.subr.bf16.mxu0 0
  %1589 = vmatpush1.bf16.msra.mxu0 0
  %1590 = vmatprep.subr.bf16.mxu0 0
  %1591 = vmatpush1.bf16.msra.mxu0 0
  %1592 = vmatprep.subr.bf16.mxu0 0
  %1593 = vmatpush1.bf16.msra.mxu0 0
  %1594 = vmatprep.subr.bf16.mxu0 0
  %1595 = vmatpush1.bf16.msra.mxu0 0
  %1596 = vmatprep.subr.bf16.mxu0 0
  %1597 = vmatpush1.bf16.msra.mxu0 0
  %1598 = vmatprep.subr.bf16.mxu0 0
  %1599 = vmatpush1.bf16.msra.mxu0 0
  %1600 = vmatprep.subr.bf16.mxu0 0
  %1601 = vmatpush1.bf16.msra.mxu0 0
  %1602 = vmatprep.mubr.bf16.mxu0 0
  %1603 = vmatmul.mubr.bf16.gmra.mrb[0].mxu0 %v1559
  %v1604 = vpop.f32.mrb[0].mxu0
  %v1605 = vadd.f32 %v1451, %v1604
  %v1606 = vpop.f32.mrb[0].mxu0
  %v1607 = vpop.f32.mrb[0].mxu0
  %v1608 = vadd.f32 %v1454, %v1607
  %v1609 = vpop.f32.mrb[0].mxu0
  %1610 = vmatprep.mubr.bf16.mxu0 0
  %1611 = vmatmul.mubr.bf16.gmra.mrb[0].mxu0 %v1562
  %v1612 = vpop.f32.mrb[0].mxu0
  %v1613 = vadd.f32 %v1459, %v1612
  %v1614 = vpop.f32.mrb[0].mxu0
  %v1615 = vpop.f32.mrb[0].mxu0
  %v1616 = vadd.f32 %v1462, %v1615
  %v1617 = vpop.f32.mrb[0].mxu0
  %1618 = vmatprep.mubr.bf16.mxu0 0
  %1619 = vmatmul.mubr.bf16.gmra.mrb[0].mxu0 %v1565
  %v1620 = vpop.f32.mrb[0].mxu0
  %v1621 = vadd.f32 %v1467, %v1620
  %v1622 = vpop.f32.mrb[0].mxu0
  %v1623 = vpop.f32.mrb[0].mxu0
  %v1624 = vadd.f32 %v1470, %v1623
  %v1625 = vpop.f32.mrb[0].mxu0
  %1626 = vmatprep.mubr.bf16.mxu0 0
  %1627 = vmatmul.mubr.bf16.gmra.mrb[0].mxu0 %v1568
  %v1628 = vpop.f32.mrb[0].mxu0
  %v1629 = vadd.f32 %v1475, %v1628
  %v1630 = vpop.f32.mrb[0].mxu0
  %v1631 = vpop.f32.mrb[0].mxu0
  %v1632 = vadd.f32 %v1478, %v1631
  %v1633 = vpop.f32.mrb[0].mxu0
  %1634 = vdwg.mxu0
  %1635 = vrot.lane.b32.xlu0 %v465, 64
  %v1636 = vpop.permute.xlu0 %1635
  %1637 = vrot.lane.b32.xlu0 %v466, 64
  %v1638 = vpop.permute.xlu0 %1637
  %1639 = vrot.lane.b32.xlu0 %v467, 64
  %v1640 = vpop.permute.xlu0 %1639
  %1641 = vrot.lane.b32.xlu0 %v468, 64
  %v1642 = vpop.permute.xlu0 %1641
  %v1644 = vsel %vm66, %v1636, 0
  %v1647 = vsel %vm66, %v1638, 0
  %v1650 = vsel %vm66, %v1640, 0
  %v1653 = vsel %vm66, %v1642, 0
  %1655 = vmatprep.subr.bf16.mxu0 0
  %1656 = vmatpush1.bf16.xpose.msra.mxu0 %v345
  %1657 = vmatprep.subr.bf16.mxu0 0
  %1658 = vmatpush1.bf16.xpose.msra.mxu0 %v348
  %1659 = vmatprep.subr.bf16.mxu0 0
  %1660 = vmatpush1.bf16.xpose.msra.mxu0 %v351
  %1661 = vmatprep.subr.bf16.mxu0 0
  %1662 = vmatpush1.bf16.xpose.msra.mxu0 %v354
  %1663 = vmatprep.subr.bf16.mxu0 0
  %1664 = vmatpush1.bf16.xpose.msra.mxu0 0
  %1665 = vmatprep.subr.bf16.mxu0 0
  %1666 = vmatpush1.bf16.xpose.msra.mxu0 0
  %1667 = vmatprep.subr.bf16.mxu0 0
  %1668 = vmatpush1.bf16.xpose.msra.mxu0 0
  %1669 = vmatprep.subr.bf16.mxu0 0
  %1670 = vmatpush1.bf16.xpose.msra.mxu0 0
  %1671 = vmatprep.subr.bf16.mxu0 0
  %1672 = vmatpush1.bf16.xpose.msra.mxu0 0
  %1673 = vmatprep.subr.bf16.mxu0 0
  %1674 = vmatpush1.bf16.xpose.msra.mxu0 0
  %1675 = vmatprep.subr.bf16.mxu0 0
  %1676 = vmatpush1.bf16.xpose.msra.mxu0 0
  %1677 = vmatprep.subr.bf16.mxu0 0
  %1678 = vmatpush1.bf16.xpose.msra.mxu0 0
  %1679 = vmatprep.subr.bf16.mxu0 0
  %1680 = vmatpush1.bf16.xpose.msra.mxu0 0
  %1681 = vmatprep.subr.bf16.mxu0 0
  %1682 = vmatpush1.bf16.xpose.msra.mxu0 0
  %1683 = vmatprep.subr.bf16.mxu0 0
  %1684 = vmatpush1.bf16.xpose.msra.mxu0 0
  %1685 = vmatprep.subr.bf16.mxu0 0
  %1686 = vmatpush1.bf16.xpose.msra.mxu0 0
  %1687 = vmatprep.mubr.bf16.mxu0 0
  %1688 = vmatmul.mubr.bf16.gmra.mrb[0].mxu0 %v1644
  %v1689 = vpop.f32.mrb[0].mxu0
  %v1690 = vadd.f32 0.0, %v1689
  %v1691 = vpop.f32.mrb[0].mxu0
  %v1692 = vpop.f32.mrb[0].mxu0
  %v1693 = vadd.f32 0.0, %v1692
  %v1694 = vpop.f32.mrb[0].mxu0
  %1695 = vmatprep.mubr.bf16.mxu0 0
  %1696 = vmatmul.mubr.bf16.gmra.mrb[0].mxu0 %v1647
  %v1697 = vpop.f32.mrb[0].mxu0
  %v1698 = vadd.f32 0.0, %v1697
  %v1699 = vpop.f32.mrb[0].mxu0
  %v1700 = vpop.f32.mrb[0].mxu0
  %v1701 = vadd.f32 0.0, %v1700
  %v1702 = vpop.f32.mrb[0].mxu0
  %1703 = vmatprep.mubr.bf16.mxu0 0
  %1704 = vmatmul.mubr.bf16.gmra.mrb[0].mxu0 %v1650
  %v1705 = vpop.f32.mrb[0].mxu0
  %v1706 = vadd.f32 0.0, %v1705
  %v1707 = vpop.f32.mrb[0].mxu0
  %v1708 = vpop.f32.mrb[0].mxu0
  %v1709 = vadd.f32 0.0, %v1708
  %v1710 = vpop.f32.mrb[0].mxu0
  %1711 = vmatprep.mubr.bf16.mxu0 0
  %1712 = vmatmul.mubr.bf16.gmra.mrb[0].mxu0 %v1653
  %v1713 = vpop.f32.mrb[0].mxu0
  %v1714 = vadd.f32 0.0, %v1713
  %v1715 = vpop.f32.mrb[0].mxu0
  %v1716 = vpop.f32.mrb[0].mxu0
  %v1717 = vadd.f32 0.0, %v1716
  %v1718 = vpop.f32.mrb[0].mxu0
  %1719 = vdwg.mxu0
  %1720 = vrot.lane.b32.xlu0 %v469, 64
  %v1721 = vpop.permute.xlu0 %1720
  %1722 = vrot.lane.b32.xlu0 %v470, 64
  %v1723 = vpop.permute.xlu0 %1722
  %1724 = vrot.lane.b32.xlu0 %v471, 64
  %v1725 = vpop.permute.xlu0 %1724
  %1726 = vrot.lane.b32.xlu0 %v472, 64
  %v1727 = vpop.permute.xlu0 %1726
  %v1729 = vsel %vm66, %v1721, 0
  %v1732 = vsel %vm66, %v1723, 0
  %v1735 = vsel %vm66, %v1725, 0
  %v1738 = vsel %vm66, %v1727, 0
  %1740 = vmatprep.subr.bf16.mxu0 0
  %1741 = vmatpush1.bf16.xpose.msra.mxu0 %v357
  %1742 = vmatprep.subr.bf16.mxu0 0
  %1743 = vmatpush1.bf16.xpose.msra.mxu0 %v360
  %1744 = vmatprep.subr.bf16.mxu0 0
  %1745 = vmatpush1.bf16.xpose.msra.mxu0 %v363
  %1746 = vmatprep.subr.bf16.mxu0 0
  %1747 = vmatpush1.bf16.xpose.msra.mxu0 %v366
  %1748 = vmatprep.subr.bf16.mxu0 0
  %1749 = vmatpush1.bf16.xpose.msra.mxu0 0
  %1750 = vmatprep.subr.bf16.mxu0 0
  %1751 = vmatpush1.bf16.xpose.msra.mxu0 0
  %1752 = vmatprep.subr.bf16.mxu0 0
  %1753 = vmatpush1.bf16.xpose.msra.mxu0 0
  %1754 = vmatprep.subr.bf16.mxu0 0
  %1755 = vmatpush1.bf16.xpose.msra.mxu0 0
  %1756 = vmatprep.subr.bf16.mxu0 0
  %1757 = vmatpush1.bf16.xpose.msra.mxu0 0
  %1758 = vmatprep.subr.bf16.mxu0 0
  %1759 = vmatpush1.bf16.xpose.msra.mxu0 0
  %1760 = vmatprep.subr.bf16.mxu0 0
  %1761 = vmatpush1.bf16.xpose.msra.mxu0 0
  %1762 = vmatprep.subr.bf16.mxu0 0
  %1763 = vmatpush1.bf16.xpose.msra.mxu0 0
  %1764 = vmatprep.subr.bf16.mxu0 0
  %1765 = vmatpush1.bf16.xpose.msra.mxu0 0
  %1766 = vmatprep.subr.bf16.mxu0 0
  %1767 = vmatpush1.bf16.xpose.msra.mxu0 0
  %1768 = vmatprep.subr.bf16.mxu0 0
  %1769 = vmatpush1.bf16.xpose.msra.mxu0 0
  %1770 = vmatprep.subr.bf16.mxu0 0
  %1771 = vmatpush1.bf16.xpose.msra.mxu0 0
  %1772 = vmatprep.mubr.bf16.mxu0 0
  %1773 = vmatmul.mubr.bf16.gmra.mrb[0].mxu0 %v1729
  %v1774 = vpop.f32.mrb[0].mxu0
  %v1775 = vadd.f32 0.0, %v1774
  %v1776 = vpop.f32.mrb[0].mxu0
  %v1777 = vpop.f32.mrb[0].mxu0
  %v1778 = vadd.f32 0.0, %v1777
  %v1779 = vpop.f32.mrb[0].mxu0
  %1780 = vmatprep.mubr.bf16.mxu0 0
  %1781 = vmatmul.mubr.bf16.gmra.mrb[0].mxu0 %v1732
  %v1782 = vpop.f32.mrb[0].mxu0
  %v1783 = vadd.f32 0.0, %v1782
  %v1784 = vpop.f32.mrb[0].mxu0
  %v1785 = vpop.f32.mrb[0].mxu0
  %v1786 = vadd.f32 0.0, %v1785
  %v1787 = vpop.f32.mrb[0].mxu0
  %1788 = vmatprep.mubr.bf16.mxu0 0
  %1789 = vmatmul.mubr.bf16.gmra.mrb[0].mxu0 %v1735
  %v1790 = vpop.f32.mrb[0].mxu0
  %v1791 = vadd.f32 0.0, %v1790
  %v1792 = vpop.f32.mrb[0].mxu0
  %v1793 = vpop.f32.mrb[0].mxu0
  %v1794 = vadd.f32 0.0, %v1793
  %v1795 = vpop.f32.mrb[0].mxu0
  %1796 = vmatprep.mubr.bf16.mxu0 0
  %1797 = vmatmul.mubr.bf16.gmra.mrb[0].mxu0 %v1738
  %v1798 = vpop.f32.mrb[0].mxu0
  %v1799 = vadd.f32 0.0, %v1798
  %v1800 = vpop.f32.mrb[0].mxu0
  %v1801 = vpop.f32.mrb[0].mxu0
  %v1802 = vadd.f32 0.0, %v1801
  %v1803 = vpop.f32.mrb[0].mxu0
  %1804 = vdwg.mxu0
  %v1805 = vsel %vm748, %v1690, -inf
  %1806 = vmax.xlane.f32.xlu0 %v1805
  %v1807 = vpop.xlane.xlu0 %1806
  %v1808 = vsel %vm748, %v1693, -inf
  %1809 = vmax.xlane.f32.xlu0 %v1808
  %v1810 = vpop.xlane.xlu0 %1809
  %v1811 = vsel %vm748, %v1698, -inf
  %1812 = vmax.xlane.f32.xlu0 %v1811
  %v1813 = vpop.xlane.xlu0 %1812
  %v1814 = vsel %vm748, %v1701, -inf
  %1815 = vmax.xlane.f32.xlu0 %v1814
  %v1816 = vpop.xlane.xlu0 %1815
  %v1817 = vsel %vm748, %v1706, -inf
  %1818 = vmax.xlane.f32.xlu0 %v1817
  %v1819 = vpop.xlane.xlu0 %1818
  %v1820 = vsel %vm748, %v1709, -inf
  %1821 = vmax.xlane.f32.xlu0 %v1820
  %v1822 = vpop.xlane.xlu0 %1821
  %v1823 = vsel %vm748, %v1714, -inf
  %1824 = vmax.xlane.f32.xlu0 %v1823
  %v1825 = vpop.xlane.xlu0 %1824
  %v1826 = vsel %vm748, %v1717, -inf
  %1827 = vmax.xlane.f32.xlu0 %v1826
  %v1828 = vpop.xlane.xlu0 %1827
  %v1829 = vsel %vm748, %v1775, -inf
  %1830 = vmax.xlane.f32.xlu0 %v1829
  %v1831 = vpop.xlane.xlu0 %1830
  %v1832 = vsel %vm748, %v1778, -inf
  %1833 = vmax.xlane.f32.xlu0 %v1832
  %v1834 = vpop.xlane.xlu0 %1833
  %v1835 = vsel %vm748, %v1783, -inf
  %1836 = vmax.xlane.f32.xlu0 %v1835
  %v1837 = vpop.xlane.xlu0 %1836
  %v1838 = vsel %vm748, %v1786, -inf
  %1839 = vmax.xlane.f32.xlu0 %v1838
  %v1840 = vpop.xlane.xlu0 %1839
  %v1841 = vsel %vm748, %v1791, -inf
  %1842 = vmax.xlane.f32.xlu0 %v1841
  %v1843 = vpop.xlane.xlu0 %1842
  %v1844 = vsel %vm748, %v1794, -inf
  %1845 = vmax.xlane.f32.xlu0 %v1844
  %v1846 = vpop.xlane.xlu0 %1845
  %v1847 = vsel %vm748, %v1799, -inf
  %1848 = vmax.xlane.f32.xlu0 %v1847
  %v1849 = vpop.xlane.xlu0 %1848
  %v1850 = vsel %vm748, %v1802, -inf
  %1851 = vmax.xlane.f32.xlu0 %v1850
  %v1852 = vpop.xlane.xlu0 %1851
  %v1853 = vsub.f32 %v1690, %v1807
  %v1854 = vsub.f32 %v1693, %v1810
  %v1855 = vsub.f32 %v1698, %v1813
  %v1856 = vsub.f32 %v1701, %v1816
  %v1857 = vsub.f32 %v1706, %v1819
  %v1858 = vsub.f32 %v1709, %v1822
  %v1859 = vsub.f32 %v1714, %v1825
  %v1860 = vsub.f32 %v1717, %v1828
  %v1861 = vsub.f32 %v1775, %v1831
  %v1862 = vsub.f32 %v1778, %v1834
  %v1863 = vsub.f32 %v1783, %v1837
  %v1864 = vsub.f32 %v1786, %v1840
  %v1865 = vsub.f32 %v1791, %v1843
  %v1866 = vsub.f32 %v1794, %v1846
  %v1867 = vsub.f32 %v1799, %v1849
  %v1868 = vsub.f32 %v1802, %v1852
  %v1869 = vmul.f32 %v1853, 1.442695
  %v1870 = vpow.pop %v1869
  %v1871 = vmul.f32 %v1854, 1.442695
  %v1872 = vpow.pop %v1871
  %v1873 = vmul.f32 %v1855, 1.442695
  %v1874 = vpow.pop %v1873
  %v1875 = vmul.f32 %v1856, 1.442695
  %v1876 = vpow.pop %v1875
  %v1877 = vmul.f32 %v1857, 1.442695
  %v1878 = vpow.pop %v1877
  %v1879 = vmul.f32 %v1858, 1.442695
  %v1880 = vpow.pop %v1879
  %v1881 = vmul.f32 %v1859, 1.442695
  %v1882 = vpow.pop %v1881
  %v1883 = vmul.f32 %v1860, 1.442695
  %v1884 = vpow.pop %v1883
  %v1885 = vmul.f32 %v1861, 1.442695
  %v1886 = vpow.pop %v1885
  %v1887 = vmul.f32 %v1862, 1.442695
  %v1888 = vpow.pop %v1887
  %v1889 = vmul.f32 %v1863, 1.442695
  %v1890 = vpow.pop %v1889
  %v1891 = vmul.f32 %v1864, 1.442695
  %v1892 = vpow.pop %v1891
  %v1893 = vmul.f32 %v1865, 1.442695
  %v1894 = vpow.pop %v1893
  %v1895 = vmul.f32 %v1866, 1.442695
  %v1896 = vpow.pop %v1895
  %v1897 = vmul.f32 %v1867, 1.442695
  %v1898 = vpow.pop %v1897
  %v1899 = vmul.f32 %v1868, 1.442695
  %v1900 = vpow.pop %v1899
  %v1901 = vsel %vm748, %v1870, 0.0
  %1902 = vadd.xlane.f32.xlu0 %v1901
  %v1903 = vpop.xlane.xlu0 %1902
  %v1904 = vsel %vm748, %v1872, 0.0
  %1905 = vadd.xlane.f32.xlu0 %v1904
  %v1906 = vpop.xlane.xlu0 %1905
  %v1907 = vsel %vm748, %v1874, 0.0
  %1908 = vadd.xlane.f32.xlu0 %v1907
  %v1909 = vpop.xlane.xlu0 %1908
  %v1910 = vsel %vm748, %v1876, 0.0
  %1911 = vadd.xlane.f32.xlu0 %v1910
  %v1912 = vpop.xlane.xlu0 %1911
  %v1913 = vsel %vm748, %v1878, 0.0
  %1914 = vadd.xlane.f32.xlu0 %v1913
  %v1915 = vpop.xlane.xlu0 %1914
  %v1916 = vsel %vm748, %v1880, 0.0
  %1917 = vadd.xlane.f32.xlu0 %v1916
  %v1918 = vpop.xlane.xlu0 %1917
  %v1919 = vsel %vm748, %v1882, 0.0
  %1920 = vadd.xlane.f32.xlu0 %v1919
  %v1921 = vpop.xlane.xlu0 %1920
  %v1922 = vsel %vm748, %v1884, 0.0
  %1923 = vadd.xlane.f32.xlu0 %v1922
  %v1924 = vpop.xlane.xlu0 %1923
  %v1925 = vsel %vm748, %v1886, 0.0
  %1926 = vadd.xlane.f32.xlu0 %v1925
  %v1927 = vpop.xlane.xlu0 %1926
  %v1928 = vsel %vm748, %v1888, 0.0
  %1929 = vadd.xlane.f32.xlu0 %v1928
  %v1930 = vpop.xlane.xlu0 %1929
  %v1931 = vsel %vm748, %v1890, 0.0
  %1932 = vadd.xlane.f32.xlu0 %v1931
  %v1933 = vpop.xlane.xlu0 %1932
  %v1934 = vsel %vm748, %v1892, 0.0
  %1935 = vadd.xlane.f32.xlu0 %v1934
  %v1936 = vpop.xlane.xlu0 %1935
  %v1937 = vsel %vm748, %v1894, 0.0
  %1938 = vadd.xlane.f32.xlu0 %v1937
  %v1939 = vpop.xlane.xlu0 %1938
  %v1940 = vsel %vm748, %v1896, 0.0
  %1941 = vadd.xlane.f32.xlu0 %v1940
  %v1942 = vpop.xlane.xlu0 %1941
  %v1943 = vsel %vm748, %v1898, 0.0
  %1944 = vadd.xlane.f32.xlu0 %v1943
  %v1945 = vpop.xlane.xlu0 %1944
  %v1946 = vsel %vm748, %v1900, 0.0
  %1947 = vadd.xlane.f32.xlu0 %v1946
  %v1948 = vpop.xlane.xlu0 %1947
  %v1949 = vrcp.pop %v1903
  %v1950 = vrcp.pop %v1906
  %v1951 = vrcp.pop %v1909
  %v1952 = vrcp.pop %v1912
  %v1953 = vrcp.pop %v1915
  %v1954 = vrcp.pop %v1918
  %v1955 = vrcp.pop %v1921
  %v1956 = vrcp.pop %v1924
  %v1957 = vrcp.pop %v1927
  %v1958 = vrcp.pop %v1930
  %v1959 = vrcp.pop %v1933
  %v1960 = vrcp.pop %v1936
  %v1961 = vrcp.pop %v1939
  %v1962 = vrcp.pop %v1942
  %v1963 = vrcp.pop %v1945
  %v1964 = vrcp.pop %v1948
  %v1965 = vmul.f32 %v1870, %v1949
  %v1966 = vmul.f32 %v1872, %v1950
  %v1967 = vmul.f32 %v1874, %v1951
  %v1968 = vmul.f32 %v1876, %v1952
  %v1969 = vmul.f32 %v1878, %v1953
  %v1970 = vmul.f32 %v1880, %v1954
  %v1971 = vmul.f32 %v1882, %v1955
  %v1972 = vmul.f32 %v1884, %v1956
  %v1973 = vmul.f32 %v1886, %v1957
  %v1974 = vmul.f32 %v1888, %v1958
  %v1975 = vmul.f32 %v1890, %v1959
  %v1976 = vmul.f32 %v1892, %v1960
  %v1977 = vmul.f32 %v1894, %v1961
  %v1978 = vmul.f32 %v1896, %v1962
  %v1979 = vmul.f32 %v1898, %v1963
  %v1980 = vmul.f32 %v1900, %v1964
  %v1981 = vpack.c.bf16 %v1966, %v1965
  %v1982 = vpack.c.bf16 %v1968, %v1967
  %v1983 = vpack.c.bf16 %v1970, %v1969
  %v1984 = vpack.c.bf16 %v1972, %v1971
  %v1985 = vpack.c.bf16 %v1974, %v1973
  %v1986 = vpack.c.bf16 %v1976, %v1975
  %v1987 = vpack.c.bf16 %v1978, %v1977
  %v1988 = vpack.c.bf16 %v1980, %v1979
  %1989 = vrot.lane.b32.xlu0 %v586, 64
  %v1990 = vpop.permute.xlu0 %1989
  %1991 = vrot.lane.b32.xlu0 %v587, 64
  %v1992 = vpop.permute.xlu0 %1991
  %1993 = vrot.lane.b32.xlu0 %v588, 64
  %v1994 = vpop.permute.xlu0 %1993
  %1995 = vrot.lane.b32.xlu0 %v589, 64
  %v1996 = vpop.permute.xlu0 %1995
  %v2002 = vsel %vm748, %v1981, 0
  %v2005 = vsel %vm748, %v1982, 0
  %v2008 = vsel %vm748, %v1983, 0
  %v2011 = vsel %vm748, %v1984, 0
  %2013 = vmatprep.subr.bf16.mxu0 0
  %2014 = vmatpush1.bf16.msra.mxu0 %v1990
  %2015 = vmatprep.subr.bf16.mxu0 0
  %2016 = vmatpush1.bf16.msra.mxu0 %v1992
  %2017 = vmatprep.subr.bf16.mxu0 0
  %2018 = vmatpush1.bf16.msra.mxu0 %v1994
  %2019 = vmatprep.subr.bf16.mxu0 0
  %2020 = vmatpush1.bf16.msra.mxu0 %v1996
  %2021 = vmatprep.subr.bf16.mxu0 0
  %2022 = vmatpush1.bf16.msra.mxu0 0
  %2023 = vmatprep.subr.bf16.mxu0 0
  %2024 = vmatpush1.bf16.msra.mxu0 0
  %2025 = vmatprep.subr.bf16.mxu0 0
  %2026 = vmatpush1.bf16.msra.mxu0 0
  %2027 = vmatprep.subr.bf16.mxu0 0
  %2028 = vmatpush1.bf16.msra.mxu0 0
  %2029 = vmatprep.subr.bf16.mxu0 0
  %2030 = vmatpush1.bf16.msra.mxu0 0
  %2031 = vmatprep.subr.bf16.mxu0 0
  %2032 = vmatpush1.bf16.msra.mxu0 0
  %2033 = vmatprep.subr.bf16.mxu0 0
  %2034 = vmatpush1.bf16.msra.mxu0 0
  %2035 = vmatprep.subr.bf16.mxu0 0
  %2036 = vmatpush1.bf16.msra.mxu0 0
  %2037 = vmatprep.subr.bf16.mxu0 0
  %2038 = vmatpush1.bf16.msra.mxu0 0
  %2039 = vmatprep.subr.bf16.mxu0 0
  %2040 = vmatpush1.bf16.msra.mxu0 0
  %2041 = vmatprep.subr.bf16.mxu0 0
  %2042 = vmatpush1.bf16.msra.mxu0 0
  %2043 = vmatprep.subr.bf16.mxu0 0
  %2044 = vmatpush1.bf16.msra.mxu0 0
  %2045 = vmatprep.mubr.bf16.mxu0 0
  %2046 = vmatmul.mubr.bf16.gmra.mrb[0].mxu0 %v2002
  %v2047 = vpop.f32.mrb[0].mxu0
  %v2048 = vadd.f32 0.0, %v2047
  %v2049 = vpop.f32.mrb[0].mxu0
  %v2050 = vpop.f32.mrb[0].mxu0
  %v2051 = vadd.f32 0.0, %v2050
  %v2052 = vpop.f32.mrb[0].mxu0
  %2053 = vmatprep.mubr.bf16.mxu0 0
  %2054 = vmatmul.mubr.bf16.gmra.mrb[0].mxu0 %v2005
  %v2055 = vpop.f32.mrb[0].mxu0
  %v2056 = vadd.f32 0.0, %v2055
  %v2057 = vpop.f32.mrb[0].mxu0
  %v2058 = vpop.f32.mrb[0].mxu0
  %v2059 = vadd.f32 0.0, %v2058
  %v2060 = vpop.f32.mrb[0].mxu0
  %2061 = vmatprep.mubr.bf16.mxu0 0
  %2062 = vmatmul.mubr.bf16.gmra.mrb[0].mxu0 %v2008
  %v2063 = vpop.f32.mrb[0].mxu0
  %v2064 = vadd.f32 0.0, %v2063
  %v2065 = vpop.f32.mrb[0].mxu0
  %v2066 = vpop.f32.mrb[0].mxu0
  %v2067 = vadd.f32 0.0, %v2066
  %v2068 = vpop.f32.mrb[0].mxu0
  %2069 = vmatprep.mubr.bf16.mxu0 0
  %2070 = vmatmul.mubr.bf16.gmra.mrb[0].mxu0 %v2011
  %v2071 = vpop.f32.mrb[0].mxu0
  %v2072 = vadd.f32 0.0, %v2071
  %v2073 = vpop.f32.mrb[0].mxu0
  %v2074 = vpop.f32.mrb[0].mxu0
  %v2075 = vadd.f32 0.0, %v2074
  %v2076 = vpop.f32.mrb[0].mxu0
  %2077 = vdwg.mxu0
  %2078 = vrot.lane.b32.xlu0 %v590, 64
  %v2079 = vpop.permute.xlu0 %2078
  %2080 = vrot.lane.b32.xlu0 %v591, 64
  %v2081 = vpop.permute.xlu0 %2080
  %2082 = vrot.lane.b32.xlu0 %v592, 64
  %v2083 = vpop.permute.xlu0 %2082
  %2084 = vrot.lane.b32.xlu0 %v593, 64
  %v2085 = vpop.permute.xlu0 %2084
  %v2091 = vsel %vm748, %v1985, 0
  %v2094 = vsel %vm748, %v1986, 0
  %v2097 = vsel %vm748, %v1987, 0
  %v2100 = vsel %vm748, %v1988, 0
  %2102 = vmatprep.subr.bf16.mxu0 0
  %2103 = vmatpush1.bf16.msra.mxu0 %v2079
  %2104 = vmatprep.subr.bf16.mxu0 0
  %2105 = vmatpush1.bf16.msra.mxu0 %v2081
  %2106 = vmatprep.subr.bf16.mxu0 0
  %2107 = vmatpush1.bf16.msra.mxu0 %v2083
  %2108 = vmatprep.subr.bf16.mxu0 0
  %2109 = vmatpush1.bf16.msra.mxu0 %v2085
  %2110 = vmatprep.subr.bf16.mxu0 0
  %2111 = vmatpush1.bf16.msra.mxu0 0
  %2112 = vmatprep.subr.bf16.mxu0 0
  %2113 = vmatpush1.bf16.msra.mxu0 0
  %2114 = vmatprep.subr.bf16.mxu0 0
  %2115 = vmatpush1.bf16.msra.mxu0 0
  %2116 = vmatprep.subr.bf16.mxu0 0
  %2117 = vmatpush1.bf16.msra.mxu0 0
  %2118 = vmatprep.subr.bf16.mxu0 0
  %2119 = vmatpush1.bf16.msra.mxu0 0
  %2120 = vmatprep.subr.bf16.mxu0 0
  %2121 = vmatpush1.bf16.msra.mxu0 0
  %2122 = vmatprep.subr.bf16.mxu0 0
  %2123 = vmatpush1.bf16.msra.mxu0 0
  %2124 = vmatprep.subr.bf16.mxu0 0
  %2125 = vmatpush1.bf16.msra.mxu0 0
  %2126 = vmatprep.subr.bf16.mxu0 0
  %2127 = vmatpush1.bf16.msra.mxu0 0
  %2128 = vmatprep.subr.bf16.mxu0 0
  %2129 = vmatpush1.bf16.msra.mxu0 0
  %2130 = vmatprep.subr.bf16.mxu0 0
  %2131 = vmatpush1.bf16.msra.mxu0 0
  %2132 = vmatprep.subr.bf16.mxu0 0
  %2133 = vmatpush1.bf16.msra.mxu0 0
  %2134 = vmatprep.mubr.bf16.mxu0 0
  %2135 = vmatmul.mubr.bf16.gmra.mrb[0].mxu0 %v2091
  %v2136 = vpop.f32.mrb[0].mxu0
  %v2137 = vadd.f32 0.0, %v2136
  %v2138 = vpop.f32.mrb[0].mxu0
  %v2139 = vpop.f32.mrb[0].mxu0
  %v2140 = vadd.f32 0.0, %v2139
  %v2141 = vpop.f32.mrb[0].mxu0
  %2142 = vmatprep.mubr.bf16.mxu0 0
  %2143 = vmatmul.mubr.bf16.gmra.mrb[0].mxu0 %v2094
  %v2144 = vpop.f32.mrb[0].mxu0
  %v2145 = vadd.f32 0.0, %v2144
  %v2146 = vpop.f32.mrb[0].mxu0
  %v2147 = vpop.f32.mrb[0].mxu0
  %v2148 = vadd.f32 0.0, %v2147
  %v2149 = vpop.f32.mrb[0].mxu0
  %2150 = vmatprep.mubr.bf16.mxu0 0
  %2151 = vmatmul.mubr.bf16.gmra.mrb[0].mxu0 %v2097
  %v2152 = vpop.f32.mrb[0].mxu0
  %v2153 = vadd.f32 0.0, %v2152
  %v2154 = vpop.f32.mrb[0].mxu0
  %v2155 = vpop.f32.mrb[0].mxu0
  %v2156 = vadd.f32 0.0, %v2155
  %v2157 = vpop.f32.mrb[0].mxu0
  %2158 = vmatprep.mubr.bf16.mxu0 0
  %2159 = vmatmul.mubr.bf16.gmra.mrb[0].mxu0 %v2100
  %v2160 = vpop.f32.mrb[0].mxu0
  %v2161 = vadd.f32 0.0, %v2160
  %v2162 = vpop.f32.mrb[0].mxu0
  %v2163 = vpop.f32.mrb[0].mxu0
  %v2164 = vadd.f32 0.0, %v2163
  %v2165 = vpop.f32.mrb[0].mxu0
  %2166 = vdwg.mxu0
  %v2167 = vadd.f32 %v1528, %v2048
  %v2168 = vadd.f32 %v1531, %v2051
  %v2169 = vadd.f32 %v1536, %v2056
  %v2170 = vadd.f32 %v1539, %v2059
  %v2171 = vadd.f32 %v1544, %v2064
  %v2172 = vadd.f32 %v1547, %v2067
  %v2173 = vadd.f32 %v1552, %v2072
  %v2174 = vadd.f32 %v1555, %v2075
  %v2175 = vadd.f32 %v1605, %v2137
  %v2176 = vadd.f32 %v1608, %v2140
  %v2177 = vadd.f32 %v1613, %v2145
  %v2178 = vadd.f32 %v1616, %v2148
  %v2179 = vadd.f32 %v1621, %v2153
  %v2180 = vadd.f32 %v1624, %v2156
  %v2181 = vadd.f32 %v1629, %v2161
  %v2182 = vadd.f32 %v1632, %v2164
  %2183 = vrot.lane.b32.xlu0 %v465, 32
  %v2184 = vpop.permute.xlu0 %2183
  %2185 = vrot.lane.b32.xlu0 %v466, 32
  %v2186 = vpop.permute.xlu0 %2185
  %2187 = vrot.lane.b32.xlu0 %v467, 32
  %v2188 = vpop.permute.xlu0 %2187
  %2189 = vrot.lane.b32.xlu0 %v468, 32
  %v2190 = vpop.permute.xlu0 %2189
  %v2192 = vsel %vm66, %v2184, 0
  %v2195 = vsel %vm66, %v2186, 0
  %v2198 = vsel %vm66, %v2188, 0
  %v2201 = vsel %vm66, %v2190, 0
  %2203 = vmatprep.subr.bf16.mxu0 0
  %2204 = vmatpush1.bf16.xpose.msra.mxu0 %v345
  %2205 = vmatprep.subr.bf16.mxu0 0
  %2206 = vmatpush1.bf16.xpose.msra.mxu0 %v348
  %2207 = vmatprep.subr.bf16.mxu0 0
  %2208 = vmatpush1.bf16.xpose.msra.mxu0 %v351
  %2209 = vmatprep.subr.bf16.mxu0 0
  %2210 = vmatpush1.bf16.xpose.msra.mxu0 %v354
  %2211 = vmatprep.subr.bf16.mxu0 0
  %2212 = vmatpush1.bf16.xpose.msra.mxu0 0
  %2213 = vmatprep.subr.bf16.mxu0 0
  %2214 = vmatpush1.bf16.xpose.msra.mxu0 0
  %2215 = vmatprep.subr.bf16.mxu0 0
  %2216 = vmatpush1.bf16.xpose.msra.mxu0 0
  %2217 = vmatprep.subr.bf16.mxu0 0
  %2218 = vmatpush1.bf16.xpose.msra.mxu0 0
  %2219 = vmatprep.subr.bf16.mxu0 0
  %2220 = vmatpush1.bf16.xpose.msra.mxu0 0
  %2221 = vmatprep.subr.bf16.mxu0 0
  %2222 = vmatpush1.bf16.xpose.msra.mxu0 0
  %2223 = vmatprep.subr.bf16.mxu0 0
  %2224 = vmatpush1.bf16.xpose.msra.mxu0 0
  %2225 = vmatprep.subr.bf16.mxu0 0
  %2226 = vmatpush1.bf16.xpose.msra.mxu0 0
  %2227 = vmatprep.subr.bf16.mxu0 0
  %2228 = vmatpush1.bf16.xpose.msra.mxu0 0
  %2229 = vmatprep.subr.bf16.mxu0 0
  %2230 = vmatpush1.bf16.xpose.msra.mxu0 0
  %2231 = vmatprep.subr.bf16.mxu0 0
  %2232 = vmatpush1.bf16.xpose.msra.mxu0 0
  %2233 = vmatprep.subr.bf16.mxu0 0
  %2234 = vmatpush1.bf16.xpose.msra.mxu0 0
  %2235 = vmatprep.mubr.bf16.mxu0 0
  %2236 = vmatmul.mubr.bf16.gmra.mrb[0].mxu0 %v2192
  %v2237 = vpop.f32.mrb[0].mxu0
  %v2238 = vadd.f32 0.0, %v2237
  %v2239 = vpop.f32.mrb[0].mxu0
  %v2240 = vpop.f32.mrb[0].mxu0
  %v2241 = vadd.f32 0.0, %v2240
  %v2242 = vpop.f32.mrb[0].mxu0
  %2243 = vmatprep.mubr.bf16.mxu0 0
  %2244 = vmatmul.mubr.bf16.gmra.mrb[0].mxu0 %v2195
  %v2245 = vpop.f32.mrb[0].mxu0
  %v2246 = vadd.f32 0.0, %v2245
  %v2247 = vpop.f32.mrb[0].mxu0
  %v2248 = vpop.f32.mrb[0].mxu0
  %v2249 = vadd.f32 0.0, %v2248
  %v2250 = vpop.f32.mrb[0].mxu0
  %2251 = vmatprep.mubr.bf16.mxu0 0
  %2252 = vmatmul.mubr.bf16.gmra.mrb[0].mxu0 %v2198
  %v2253 = vpop.f32.mrb[0].mxu0
  %v2254 = vadd.f32 0.0, %v2253
  %v2255 = vpop.f32.mrb[0].mxu0
  %v2256 = vpop.f32.mrb[0].mxu0
  %v2257 = vadd.f32 0.0, %v2256
  %v2258 = vpop.f32.mrb[0].mxu0
  %2259 = vmatprep.mubr.bf16.mxu0 0
  %2260 = vmatmul.mubr.bf16.gmra.mrb[0].mxu0 %v2201
  %v2261 = vpop.f32.mrb[0].mxu0
  %v2262 = vadd.f32 0.0, %v2261
  %v2263 = vpop.f32.mrb[0].mxu0
  %v2264 = vpop.f32.mrb[0].mxu0
  %v2265 = vadd.f32 0.0, %v2264
  %v2266 = vpop.f32.mrb[0].mxu0
  %2267 = vdwg.mxu0
  %2268 = vrot.lane.b32.xlu0 %v469, 32
  %v2269 = vpop.permute.xlu0 %2268
  %2270 = vrot.lane.b32.xlu0 %v470, 32
  %v2271 = vpop.permute.xlu0 %2270
  %2272 = vrot.lane.b32.xlu0 %v471, 32
  %v2273 = vpop.permute.xlu0 %2272
  %2274 = vrot.lane.b32.xlu0 %v472, 32
  %v2275 = vpop.permute.xlu0 %2274
  %v2277 = vsel %vm66, %v2269, 0
  %v2280 = vsel %vm66, %v2271, 0
  %v2283 = vsel %vm66, %v2273, 0
  %v2286 = vsel %vm66, %v2275, 0
  %2288 = vmatprep.subr.bf16.mxu0 0
  %2289 = vmatpush1.bf16.xpose.msra.mxu0 %v357
  %2290 = vmatprep.subr.bf16.mxu0 0
  %2291 = vmatpush1.bf16.xpose.msra.mxu0 %v360
  %2292 = vmatprep.subr.bf16.mxu0 0
  %2293 = vmatpush1.bf16.xpose.msra.mxu0 %v363
  %2294 = vmatprep.subr.bf16.mxu0 0
  %2295 = vmatpush1.bf16.xpose.msra.mxu0 %v366
  %2296 = vmatprep.subr.bf16.mxu0 0
  %2297 = vmatpush1.bf16.xpose.msra.mxu0 0
  %2298 = vmatprep.subr.bf16.mxu0 0
  %2299 = vmatpush1.bf16.xpose.msra.mxu0 0
  %2300 = vmatprep.subr.bf16.mxu0 0
  %2301 = vmatpush1.bf16.xpose.msra.mxu0 0
  %2302 = vmatprep.subr.bf16.mxu0 0
  %2303 = vmatpush1.bf16.xpose.msra.mxu0 0
  %2304 = vmatprep.subr.bf16.mxu0 0
  %2305 = vmatpush1.bf16.xpose.msra.mxu0 0
  %2306 = vmatprep.subr.bf16.mxu0 0
  %2307 = vmatpush1.bf16.xpose.msra.mxu0 0
  %2308 = vmatprep.subr.bf16.mxu0 0
  %2309 = vmatpush1.bf16.xpose.msra.mxu0 0
  %2310 = vmatprep.subr.bf16.mxu0 0
  %2311 = vmatpush1.bf16.xpose.msra.mxu0 0
  %2312 = vmatprep.subr.bf16.mxu0 0
  %2313 = vmatpush1.bf16.xpose.msra.mxu0 0
  %2314 = vmatprep.subr.bf16.mxu0 0
  %2315 = vmatpush1.bf16.xpose.msra.mxu0 0
  %2316 = vmatprep.subr.bf16.mxu0 0
  %2317 = vmatpush1.bf16.xpose.msra.mxu0 0
  %2318 = vmatprep.subr.bf16.mxu0 0
  %2319 = vmatpush1.bf16.xpose.msra.mxu0 0
  %2320 = vmatprep.mubr.bf16.mxu0 0
  %2321 = vmatmul.mubr.bf16.gmra.mrb[0].mxu0 %v2277
  %v2322 = vpop.f32.mrb[0].mxu0
  %v2323 = vadd.f32 0.0, %v2322
  %v2324 = vpop.f32.mrb[0].mxu0
  %v2325 = vpop.f32.mrb[0].mxu0
  %v2326 = vadd.f32 0.0, %v2325
  %v2327 = vpop.f32.mrb[0].mxu0
  %2328 = vmatprep.mubr.bf16.mxu0 0
  %2329 = vmatmul.mubr.bf16.gmra.mrb[0].mxu0 %v2280
  %v2330 = vpop.f32.mrb[0].mxu0
  %v2331 = vadd.f32 0.0, %v2330
  %v2332 = vpop.f32.mrb[0].mxu0
  %v2333 = vpop.f32.mrb[0].mxu0
  %v2334 = vadd.f32 0.0, %v2333
  %v2335 = vpop.f32.mrb[0].mxu0
  %2336 = vmatprep.mubr.bf16.mxu0 0
  %2337 = vmatmul.mubr.bf16.gmra.mrb[0].mxu0 %v2283
  %v2338 = vpop.f32.mrb[0].mxu0
  %v2339 = vadd.f32 0.0, %v2338
  %v2340 = vpop.f32.mrb[0].mxu0
  %v2341 = vpop.f32.mrb[0].mxu0
  %v2342 = vadd.f32 0.0, %v2341
  %v2343 = vpop.f32.mrb[0].mxu0
  %2344 = vmatprep.mubr.bf16.mxu0 0
  %2345 = vmatmul.mubr.bf16.gmra.mrb[0].mxu0 %v2286
  %v2346 = vpop.f32.mrb[0].mxu0
  %v2347 = vadd.f32 0.0, %v2346
  %v2348 = vpop.f32.mrb[0].mxu0
  %v2349 = vpop.f32.mrb[0].mxu0
  %v2350 = vadd.f32 0.0, %v2349
  %v2351 = vpop.f32.mrb[0].mxu0
  %2352 = vdwg.mxu0
  %v2353 = vsel %vm748, %v2238, -inf
  %2354 = vmax.xlane.f32.xlu0 %v2353
  %v2355 = vpop.xlane.xlu0 %2354
  %v2356 = vsel %vm748, %v2241, -inf
  %2357 = vmax.xlane.f32.xlu0 %v2356
  %v2358 = vpop.xlane.xlu0 %2357
  %v2359 = vsel %vm748, %v2246, -inf
  %2360 = vmax.xlane.f32.xlu0 %v2359
  %v2361 = vpop.xlane.xlu0 %2360
  %v2362 = vsel %vm748, %v2249, -inf
  %2363 = vmax.xlane.f32.xlu0 %v2362
  %v2364 = vpop.xlane.xlu0 %2363
  %v2365 = vsel %vm748, %v2254, -inf
  %2366 = vmax.xlane.f32.xlu0 %v2365
  %v2367 = vpop.xlane.xlu0 %2366
  %v2368 = vsel %vm748, %v2257, -inf
  %2369 = vmax.xlane.f32.xlu0 %v2368
  %v2370 = vpop.xlane.xlu0 %2369
  %v2371 = vsel %vm748, %v2262, -inf
  %2372 = vmax.xlane.f32.xlu0 %v2371
  %v2373 = vpop.xlane.xlu0 %2372
  %v2374 = vsel %vm748, %v2265, -inf
  %2375 = vmax.xlane.f32.xlu0 %v2374
  %v2376 = vpop.xlane.xlu0 %2375
  %v2377 = vsel %vm748, %v2323, -inf
  %2378 = vmax.xlane.f32.xlu0 %v2377
  %v2379 = vpop.xlane.xlu0 %2378
  %v2380 = vsel %vm748, %v2326, -inf
  %2381 = vmax.xlane.f32.xlu0 %v2380
  %v2382 = vpop.xlane.xlu0 %2381
  %v2383 = vsel %vm748, %v2331, -inf
  %2384 = vmax.xlane.f32.xlu0 %v2383
  %v2385 = vpop.xlane.xlu0 %2384
  %v2386 = vsel %vm748, %v2334, -inf
  %2387 = vmax.xlane.f32.xlu0 %v2386
  %v2388 = vpop.xlane.xlu0 %2387
  %v2389 = vsel %vm748, %v2339, -inf
  %2390 = vmax.xlane.f32.xlu0 %v2389
  %v2391 = vpop.xlane.xlu0 %2390
  %v2392 = vsel %vm748, %v2342, -inf
  %2393 = vmax.xlane.f32.xlu0 %v2392
  %v2394 = vpop.xlane.xlu0 %2393
  %v2395 = vsel %vm748, %v2347, -inf
  %2396 = vmax.xlane.f32.xlu0 %v2395
  %v2397 = vpop.xlane.xlu0 %2396
  %v2398 = vsel %vm748, %v2350, -inf
  %2399 = vmax.xlane.f32.xlu0 %v2398
  %v2400 = vpop.xlane.xlu0 %2399
  %v2401 = vsub.f32 %v2238, %v2355
  %v2402 = vsub.f32 %v2241, %v2358
  %v2403 = vsub.f32 %v2246, %v2361
  %v2404 = vsub.f32 %v2249, %v2364
  %v2405 = vsub.f32 %v2254, %v2367
  %v2406 = vsub.f32 %v2257, %v2370
  %v2407 = vsub.f32 %v2262, %v2373
  %v2408 = vsub.f32 %v2265, %v2376
  %v2409 = vsub.f32 %v2323, %v2379
  %v2410 = vsub.f32 %v2326, %v2382
  %v2411 = vsub.f32 %v2331, %v2385
  %v2412 = vsub.f32 %v2334, %v2388
  %v2413 = vsub.f32 %v2339, %v2391
  %v2414 = vsub.f32 %v2342, %v2394
  %v2415 = vsub.f32 %v2347, %v2397
  %v2416 = vsub.f32 %v2350, %v2400
  %v2417 = vmul.f32 %v2401, 1.442695
  %v2418 = vpow.pop %v2417
  %v2419 = vmul.f32 %v2402, 1.442695
  %v2420 = vpow.pop %v2419
  %v2421 = vmul.f32 %v2403, 1.442695
  %v2422 = vpow.pop %v2421
  %v2423 = vmul.f32 %v2404, 1.442695
  %v2424 = vpow.pop %v2423
  %v2425 = vmul.f32 %v2405, 1.442695
  %v2426 = vpow.pop %v2425
  %v2427 = vmul.f32 %v2406, 1.442695
  %v2428 = vpow.pop %v2427
  %v2429 = vmul.f32 %v2407, 1.442695
  %v2430 = vpow.pop %v2429
  %v2431 = vmul.f32 %v2408, 1.442695
  %v2432 = vpow.pop %v2431
  %v2433 = vmul.f32 %v2409, 1.442695
  %v2434 = vpow.pop %v2433
  %v2435 = vmul.f32 %v2410, 1.442695
  %v2436 = vpow.pop %v2435
  %v2437 = vmul.f32 %v2411, 1.442695
  %v2438 = vpow.pop %v2437
  %v2439 = vmul.f32 %v2412, 1.442695
  %v2440 = vpow.pop %v2439
  %v2441 = vmul.f32 %v2413, 1.442695
  %v2442 = vpow.pop %v2441
  %v2443 = vmul.f32 %v2414, 1.442695
  %v2444 = vpow.pop %v2443
  %v2445 = vmul.f32 %v2415, 1.442695
  %v2446 = vpow.pop %v2445
  %v2447 = vmul.f32 %v2416, 1.442695
  %v2448 = vpow.pop %v2447
  %v2449 = vsel %vm748, %v2418, 0.0
  %2450 = vadd.xlane.f32.xlu0 %v2449
  %v2451 = vpop.xlane.xlu0 %2450
  %v2452 = vsel %vm748, %v2420, 0.0
  %2453 = vadd.xlane.f32.xlu0 %v2452
  %v2454 = vpop.xlane.xlu0 %2453
  %v2455 = vsel %vm748, %v2422, 0.0
  %2456 = vadd.xlane.f32.xlu0 %v2455
  %v2457 = vpop.xlane.xlu0 %2456
  %v2458 = vsel %vm748, %v2424, 0.0
  %2459 = vadd.xlane.f32.xlu0 %v2458
  %v2460 = vpop.xlane.xlu0 %2459
  %v2461 = vsel %vm748, %v2426, 0.0
  %2462 = vadd.xlane.f32.xlu0 %v2461
  %v2463 = vpop.xlane.xlu0 %2462
  %v2464 = vsel %vm748, %v2428, 0.0
  %2465 = vadd.xlane.f32.xlu0 %v2464
  %v2466 = vpop.xlane.xlu0 %2465
  %v2467 = vsel %vm748, %v2430, 0.0
  %2468 = vadd.xlane.f32.xlu0 %v2467
  %v2469 = vpop.xlane.xlu0 %2468
  %v2470 = vsel %vm748, %v2432, 0.0
  %2471 = vadd.xlane.f32.xlu0 %v2470
  %v2472 = vpop.xlane.xlu0 %2471
  %v2473 = vsel %vm748, %v2434, 0.0
  %2474 = vadd.xlane.f32.xlu0 %v2473
  %v2475 = vpop.xlane.xlu0 %2474
  %v2476 = vsel %vm748, %v2436, 0.0
  %2477 = vadd.xlane.f32.xlu0 %v2476
  %v2478 = vpop.xlane.xlu0 %2477
  %v2479 = vsel %vm748, %v2438, 0.0
  %2480 = vadd.xlane.f32.xlu0 %v2479
  %v2481 = vpop.xlane.xlu0 %2480
  %v2482 = vsel %vm748, %v2440, 0.0
  %2483 = vadd.xlane.f32.xlu0 %v2482
  %v2484 = vpop.xlane.xlu0 %2483
  %v2485 = vsel %vm748, %v2442, 0.0
  %2486 = vadd.xlane.f32.xlu0 %v2485
  %v2487 = vpop.xlane.xlu0 %2486
  %v2488 = vsel %vm748, %v2444, 0.0
  %2489 = vadd.xlane.f32.xlu0 %v2488
  %v2490 = vpop.xlane.xlu0 %2489
  %v2491 = vsel %vm748, %v2446, 0.0
  %2492 = vadd.xlane.f32.xlu0 %v2491
  %v2493 = vpop.xlane.xlu0 %2492
  %v2494 = vsel %vm748, %v2448, 0.0
  %2495 = vadd.xlane.f32.xlu0 %v2494
  %v2496 = vpop.xlane.xlu0 %2495
  %v2497 = vrcp.pop %v2451
  %v2498 = vrcp.pop %v2454
  %v2499 = vrcp.pop %v2457
  %v2500 = vrcp.pop %v2460
  %v2501 = vrcp.pop %v2463
  %v2502 = vrcp.pop %v2466
  %v2503 = vrcp.pop %v2469
  %v2504 = vrcp.pop %v2472
  %v2505 = vrcp.pop %v2475
  %v2506 = vrcp.pop %v2478
  %v2507 = vrcp.pop %v2481
  %v2508 = vrcp.pop %v2484
  %v2509 = vrcp.pop %v2487
  %v2510 = vrcp.pop %v2490
  %v2511 = vrcp.pop %v2493
  %v2512 = vrcp.pop %v2496
  %v2513 = vmul.f32 %v2418, %v2497
  %v2514 = vmul.f32 %v2420, %v2498
  %v2515 = vmul.f32 %v2422, %v2499
  %v2516 = vmul.f32 %v2424, %v2500
  %v2517 = vmul.f32 %v2426, %v2501
  %v2518 = vmul.f32 %v2428, %v2502
  %v2519 = vmul.f32 %v2430, %v2503
  %v2520 = vmul.f32 %v2432, %v2504
  %v2521 = vmul.f32 %v2434, %v2505
  %v2522 = vmul.f32 %v2436, %v2506
  %v2523 = vmul.f32 %v2438, %v2507
  %v2524 = vmul.f32 %v2440, %v2508
  %v2525 = vmul.f32 %v2442, %v2509
  %v2526 = vmul.f32 %v2444, %v2510
  %v2527 = vmul.f32 %v2446, %v2511
  %v2528 = vmul.f32 %v2448, %v2512
  %v2529 = vpack.c.bf16 %v2514, %v2513
  %v2530 = vpack.c.bf16 %v2516, %v2515
  %v2531 = vpack.c.bf16 %v2518, %v2517
  %v2532 = vpack.c.bf16 %v2520, %v2519
  %v2533 = vpack.c.bf16 %v2522, %v2521
  %v2534 = vpack.c.bf16 %v2524, %v2523
  %v2535 = vpack.c.bf16 %v2526, %v2525
  %v2536 = vpack.c.bf16 %v2528, %v2527
  %2537 = vrot.lane.b32.xlu0 %v586, 32
  %v2538 = vpop.permute.xlu0 %2537
  %2539 = vrot.lane.b32.xlu0 %v587, 32
  %v2540 = vpop.permute.xlu0 %2539
  %2541 = vrot.lane.b32.xlu0 %v588, 32
  %v2542 = vpop.permute.xlu0 %2541
  %2543 = vrot.lane.b32.xlu0 %v589, 32
  %v2544 = vpop.permute.xlu0 %2543
  %v2550 = vsel %vm748, %v2529, 0
  %v2553 = vsel %vm748, %v2530, 0
  %v2556 = vsel %vm748, %v2531, 0
  %v2559 = vsel %vm748, %v2532, 0
  %2561 = vmatprep.subr.bf16.mxu0 0
  %2562 = vmatpush1.bf16.msra.mxu0 %v2538
  %2563 = vmatprep.subr.bf16.mxu0 0
  %2564 = vmatpush1.bf16.msra.mxu0 %v2540
  %2565 = vmatprep.subr.bf16.mxu0 0
  %2566 = vmatpush1.bf16.msra.mxu0 %v2542
  %2567 = vmatprep.subr.bf16.mxu0 0
  %2568 = vmatpush1.bf16.msra.mxu0 %v2544
  %2569 = vmatprep.subr.bf16.mxu0 0
  %2570 = vmatpush1.bf16.msra.mxu0 0
  %2571 = vmatprep.subr.bf16.mxu0 0
  %2572 = vmatpush1.bf16.msra.mxu0 0
  %2573 = vmatprep.subr.bf16.mxu0 0
  %2574 = vmatpush1.bf16.msra.mxu0 0
  %2575 = vmatprep.subr.bf16.mxu0 0
  %2576 = vmatpush1.bf16.msra.mxu0 0
  %2577 = vmatprep.subr.bf16.mxu0 0
  %2578 = vmatpush1.bf16.msra.mxu0 0
  %2579 = vmatprep.subr.bf16.mxu0 0
  %2580 = vmatpush1.bf16.msra.mxu0 0
  %2581 = vmatprep.subr.bf16.mxu0 0
  %2582 = vmatpush1.bf16.msra.mxu0 0
  %2583 = vmatprep.subr.bf16.mxu0 0
  %2584 = vmatpush1.bf16.msra.mxu0 0
  %2585 = vmatprep.subr.bf16.mxu0 0
  %2586 = vmatpush1.bf16.msra.mxu0 0
  %2587 = vmatprep.subr.bf16.mxu0 0
  %2588 = vmatpush1.bf16.msra.mxu0 0
  %2589 = vmatprep.subr.bf16.mxu0 0
  %2590 = vmatpush1.bf16.msra.mxu0 0
  %2591 = vmatprep.subr.bf16.mxu0 0
  %2592 = vmatpush1.bf16.msra.mxu0 0
  %2593 = vmatprep.mubr.bf16.mxu0 0
  %2594 = vmatmul.mubr.bf16.gmra.mrb[0].mxu0 %v2550
  %v2595 = vpop.f32.mrb[0].mxu0
  %v2596 = vadd.f32 0.0, %v2595
  %v2597 = vpop.f32.mrb[0].mxu0
  %v2598 = vpop.f32.mrb[0].mxu0
  %v2599 = vadd.f32 0.0, %v2598
  %v2600 = vpop.f32.mrb[0].mxu0
  %2601 = vmatprep.mubr.bf16.mxu0 0
  %2602 = vmatmul.mubr.bf16.gmra.mrb[0].mxu0 %v2553
  %v2603 = vpop.f32.mrb[0].mxu0
  %v2604 = vadd.f32 0.0, %v2603
  %v2605 = vpop.f32.mrb[0].mxu0
  %v2606 = vpop.f32.mrb[0].mxu0
  %v2607 = vadd.f32 0.0, %v2606
  %v2608 = vpop.f32.mrb[0].mxu0
  %2609 = vmatprep.mubr.bf16.mxu0 0
  %2610 = vmatmul.mubr.bf16.gmra.mrb[0].mxu0 %v2556
  %v2611 = vpop.f32.mrb[0].mxu0
  %v2612 = vadd.f32 0.0, %v2611
  %v2613 = vpop.f32.mrb[0].mxu0
  %v2614 = vpop.f32.mrb[0].mxu0
  %v2615 = vadd.f32 0.0, %v2614
  %v2616 = vpop.f32.mrb[0].mxu0
  %2617 = vmatprep.mubr.bf16.mxu0 0
  %2618 = vmatmul.mubr.bf16.gmra.mrb[0].mxu0 %v2559
  %v2619 = vpop.f32.mrb[0].mxu0
  %v2620 = vadd.f32 0.0, %v2619
  %v2621 = vpop.f32.mrb[0].mxu0
  %v2622 = vpop.f32.mrb[0].mxu0
  %v2623 = vadd.f32 0.0, %v2622
  %v2624 = vpop.f32.mrb[0].mxu0
  %2625 = vdwg.mxu0
  %2626 = vrot.lane.b32.xlu0 %v590, 32
  %v2627 = vpop.permute.xlu0 %2626
  %2628 = vrot.lane.b32.xlu0 %v591, 32
  %v2629 = vpop.permute.xlu0 %2628
  %2630 = vrot.lane.b32.xlu0 %v592, 32
  %v2631 = vpop.permute.xlu0 %2630
  %2632 = vrot.lane.b32.xlu0 %v593, 32
  %v2633 = vpop.permute.xlu0 %2632
  %v2639 = vsel %vm748, %v2533, 0
  %v2642 = vsel %vm748, %v2534, 0
  %v2645 = vsel %vm748, %v2535, 0
  %v2648 = vsel %vm748, %v2536, 0
  %2650 = vmatprep.subr.bf16.mxu0 0
  %2651 = vmatpush1.bf16.msra.mxu0 %v2627
  %2652 = vmatprep.subr.bf16.mxu0 0
  %2653 = vmatpush1.bf16.msra.mxu0 %v2629
  %2654 = vmatprep.subr.bf16.mxu0 0
  %2655 = vmatpush1.bf16.msra.mxu0 %v2631
  %2656 = vmatprep.subr.bf16.mxu0 0
  %2657 = vmatpush1.bf16.msra.mxu0 %v2633
  %2658 = vmatprep.subr.bf16.mxu0 0
  %2659 = vmatpush1.bf16.msra.mxu0 0
  %2660 = vmatprep.subr.bf16.mxu0 0
  %2661 = vmatpush1.bf16.msra.mxu0 0
  %2662 = vmatprep.subr.bf16.mxu0 0
  %2663 = vmatpush1.bf16.msra.mxu0 0
  %2664 = vmatprep.subr.bf16.mxu0 0
  %2665 = vmatpush1.bf16.msra.mxu0 0
  %2666 = vmatprep.subr.bf16.mxu0 0
  %2667 = vmatpush1.bf16.msra.mxu0 0
  %2668 = vmatprep.subr.bf16.mxu0 0
  %2669 = vmatpush1.bf16.msra.mxu0 0
  %2670 = vmatprep.subr.bf16.mxu0 0
  %2671 = vmatpush1.bf16.msra.mxu0 0
  %2672 = vmatprep.subr.bf16.mxu0 0
  %2673 = vmatpush1.bf16.msra.mxu0 0
  %2674 = vmatprep.subr.bf16.mxu0 0
  %2675 = vmatpush1.bf16.msra.mxu0 0
  %2676 = vmatprep.subr.bf16.mxu0 0
  %2677 = vmatpush1.bf16.msra.mxu0 0
  %2678 = vmatprep.subr.bf16.mxu0 0
  %2679 = vmatpush1.bf16.msra.mxu0 0
  %2680 = vmatprep.subr.bf16.mxu0 0
  %2681 = vmatpush1.bf16.msra.mxu0 0
  %2682 = vmatprep.mubr.bf16.mxu0 0
  %2683 = vmatmul.mubr.bf16.gmra.mrb[0].mxu0 %v2639
  %v2684 = vpop.f32.mrb[0].mxu0
  %v2685 = vadd.f32 0.0, %v2684
  %v2686 = vpop.f32.mrb[0].mxu0
  %v2687 = vpop.f32.mrb[0].mxu0
  %v2688 = vadd.f32 0.0, %v2687
  %v2689 = vpop.f32.mrb[0].mxu0
  %2690 = vmatprep.mubr.bf16.mxu0 0
  %2691 = vmatmul.mubr.bf16.gmra.mrb[0].mxu0 %v2642
  %v2692 = vpop.f32.mrb[0].mxu0
  %v2693 = vadd.f32 0.0, %v2692
  %v2694 = vpop.f32.mrb[0].mxu0
  %v2695 = vpop.f32.mrb[0].mxu0
  %v2696 = vadd.f32 0.0, %v2695
  %v2697 = vpop.f32.mrb[0].mxu0
  %2698 = vmatprep.mubr.bf16.mxu0 0
  %2699 = vmatmul.mubr.bf16.gmra.mrb[0].mxu0 %v2645
  %v2700 = vpop.f32.mrb[0].mxu0
  %v2701 = vadd.f32 0.0, %v2700
  %v2702 = vpop.f32.mrb[0].mxu0
  %v2703 = vpop.f32.mrb[0].mxu0
  %v2704 = vadd.f32 0.0, %v2703
  %v2705 = vpop.f32.mrb[0].mxu0
  %2706 = vmatprep.mubr.bf16.mxu0 0
  %2707 = vmatmul.mubr.bf16.gmra.mrb[0].mxu0 %v2648
  %v2708 = vpop.f32.mrb[0].mxu0
  %v2709 = vadd.f32 0.0, %v2708
  %v2710 = vpop.f32.mrb[0].mxu0
  %v2711 = vpop.f32.mrb[0].mxu0
  %v2712 = vadd.f32 0.0, %v2711
  %v2713 = vpop.f32.mrb[0].mxu0
  %2714 = vdwg.mxu0
  %v2715 = vadd.f32 %v2167, %v2596
  %v2716 = vadd.f32 %v2168, %v2599
  %v2717 = vadd.f32 %v2169, %v2604
  %v2718 = vadd.f32 %v2170, %v2607
  %v2719 = vadd.f32 %v2171, %v2612
  %v2720 = vadd.f32 %v2172, %v2615
  %v2721 = vadd.f32 %v2173, %v2620
  %v2722 = vadd.f32 %v2174, %v2623
  %v2723 = vadd.f32 %v2175, %v2685
  %v2724 = vadd.f32 %v2176, %v2688
  %v2725 = vadd.f32 %v2177, %v2693
  %v2726 = vadd.f32 %v2178, %v2696
  %v2727 = vadd.f32 %v2179, %v2701
  %v2728 = vadd.f32 %v2180, %v2704
  %v2729 = vadd.f32 %v2181, %v2709
  %v2730 = vadd.f32 %v2182, %v2712
  %v2731 = vadd.f32 %v48, %v2715
  %v2732 = vadd.f32 %v49, %v2716
  %v2733 = vadd.f32 %v50, %v2717
  %v2734 = vadd.f32 %v51, %v2718
  %v2735 = vadd.f32 %v52, %v2719
  %v2736 = vadd.f32 %v53, %v2720
  %v2737 = vadd.f32 %v54, %v2721
  %v2738 = vadd.f32 %v55, %v2722
  %v2739 = vadd.f32 %v56, %v2723
  %v2740 = vadd.f32 %v57, %v2724
  %v2741 = vadd.f32 %v58, %v2725
  %v2742 = vadd.f32 %v59, %v2726
  %v2743 = vadd.f32 %v60, %v2727
  %v2744 = vadd.f32 %v61, %v2728
  %v2745 = vadd.f32 %v62, %v2729
  %v2746 = vadd.f32 %v63, %v2730
  %v2747 = vld [vmem:[%s5] sm:$0x1]
  %v2749 = vlaneseq
  %v2750 = vshrl.u32 %v2749, 7
  %v2751 = vsub.s32 0, %v2750
  %v2752 = vrot.slane %v2747, %v2751
  %v2754 = vadd.f32 %v2731, %v2752
  %v2755 = vadd.f32 %v2732, %v2752
  %v2756 = vadd.f32 %v2733, %v2752
  %v2757 = vadd.f32 %v2734, %v2752
  %v2758 = vadd.f32 %v2735, %v2752
  %v2759 = vadd.f32 %v2736, %v2752
  %v2760 = vadd.f32 %v2737, %v2752
  %v2761 = vadd.f32 %v2738, %v2752
  %v2762 = vadd.f32 %v2739, %v2752
  %v2763 = vadd.f32 %v2740, %v2752
  %v2764 = vadd.f32 %v2741, %v2752
  %v2765 = vadd.f32 %v2742, %v2752
  %v2766 = vadd.f32 %v2743, %v2752
  %v2767 = vadd.f32 %v2744, %v2752
  %v2768 = vadd.f32 %v2745, %v2752
  %v2769 = vadd.f32 %v2746, %v2752
  %v2770 = vld [vmem:[%s6] sm:$0x1]
  %v2771 = vld [vmem:[%s7] sm:$0x1]
  %v2772 = vsel %vm66, %v2754, 0.0
  %2773 = vadd.xlane.f32.xlu0 %v2772
  %v2774 = vpop.xlane.xlu0 %2773
  %v2775 = vsel %vm66, %v2755, 0.0
  %2776 = vadd.xlane.f32.xlu0 %v2775
  %v2777 = vpop.xlane.xlu0 %2776
  %v2778 = vsel %vm66, %v2756, 0.0
  %2779 = vadd.xlane.f32.xlu0 %v2778
  %v2780 = vpop.xlane.xlu0 %2779
  %v2781 = vsel %vm66, %v2757, 0.0
  %2782 = vadd.xlane.f32.xlu0 %v2781
  %v2783 = vpop.xlane.xlu0 %2782
  %v2784 = vsel %vm66, %v2758, 0.0
  %2785 = vadd.xlane.f32.xlu0 %v2784
  %v2786 = vpop.xlane.xlu0 %2785
  %v2787 = vsel %vm66, %v2759, 0.0
  %2788 = vadd.xlane.f32.xlu0 %v2787
  %v2789 = vpop.xlane.xlu0 %2788
  %v2790 = vsel %vm66, %v2760, 0.0
  %2791 = vadd.xlane.f32.xlu0 %v2790
  %v2792 = vpop.xlane.xlu0 %2791
  %v2793 = vsel %vm66, %v2761, 0.0
  %2794 = vadd.xlane.f32.xlu0 %v2793
  %v2795 = vpop.xlane.xlu0 %2794
  %v2796 = vsel %vm66, %v2762, 0.0
  %2797 = vadd.xlane.f32.xlu0 %v2796
  %v2798 = vpop.xlane.xlu0 %2797
  %v2799 = vsel %vm66, %v2763, 0.0
  %2800 = vadd.xlane.f32.xlu0 %v2799
  %v2801 = vpop.xlane.xlu0 %2800
  %v2802 = vsel %vm66, %v2764, 0.0
  %2803 = vadd.xlane.f32.xlu0 %v2802
  %v2804 = vpop.xlane.xlu0 %2803
  %v2805 = vsel %vm66, %v2765, 0.0
  %2806 = vadd.xlane.f32.xlu0 %v2805
  %v2807 = vpop.xlane.xlu0 %2806
  %v2808 = vsel %vm66, %v2766, 0.0
  %2809 = vadd.xlane.f32.xlu0 %v2808
  %v2810 = vpop.xlane.xlu0 %2809
  %v2811 = vsel %vm66, %v2767, 0.0
  %2812 = vadd.xlane.f32.xlu0 %v2811
  %v2813 = vpop.xlane.xlu0 %2812
  %v2814 = vsel %vm66, %v2768, 0.0
  %2815 = vadd.xlane.f32.xlu0 %v2814
  %v2816 = vpop.xlane.xlu0 %2815
  %v2817 = vsel %vm66, %v2769, 0.0
  %2818 = vadd.xlane.f32.xlu0 %v2817
  %v2819 = vpop.xlane.xlu0 %2818
  %v2820 = vmul.f32 %v2774, %v115
  %v2821 = vmul.f32 %v2777, %v115
  %v2822 = vmul.f32 %v2780, %v115
  %v2823 = vmul.f32 %v2783, %v115
  %v2824 = vmul.f32 %v2786, %v115
  %v2825 = vmul.f32 %v2789, %v115
  %v2826 = vmul.f32 %v2792, %v115
  %v2827 = vmul.f32 %v2795, %v115
  %v2828 = vmul.f32 %v2798, %v115
  %v2829 = vmul.f32 %v2801, %v115
  %v2830 = vmul.f32 %v2804, %v115
  %v2831 = vmul.f32 %v2807, %v115
  %v2832 = vmul.f32 %v2810, %v115
  %v2833 = vmul.f32 %v2813, %v115
  %v2834 = vmul.f32 %v2816, %v115
  %v2835 = vmul.f32 %v2819, %v115
  %v2836 = vsub.f32 %v2754, %v2820
  %v2837 = vsub.f32 %v2755, %v2821
  %v2838 = vsub.f32 %v2756, %v2822
  %v2839 = vsub.f32 %v2757, %v2823
  %v2840 = vsub.f32 %v2758, %v2824
  %v2841 = vsub.f32 %v2759, %v2825
  %v2842 = vsub.f32 %v2760, %v2826
  %v2843 = vsub.f32 %v2761, %v2827
  %v2844 = vsub.f32 %v2762, %v2828
  %v2845 = vsub.f32 %v2763, %v2829
  %v2846 = vsub.f32 %v2764, %v2830
  %v2847 = vsub.f32 %v2765, %v2831
  %v2848 = vsub.f32 %v2766, %v2832
  %v2849 = vsub.f32 %v2767, %v2833
  %v2850 = vsub.f32 %v2768, %v2834
  %v2851 = vsub.f32 %v2769, %v2835
  %v2852 = vmul.f32 %v2836, %v2836
  %v2853 = vmul.f32 %v2837, %v2837
  %v2854 = vmul.f32 %v2838, %v2838
  %v2855 = vmul.f32 %v2839, %v2839
  %v2856 = vmul.f32 %v2840, %v2840
  %v2857 = vmul.f32 %v2841, %v2841
  %v2858 = vmul.f32 %v2842, %v2842
  %v2859 = vmul.f32 %v2843, %v2843
  %v2860 = vmul.f32 %v2844, %v2844
  %v2861 = vmul.f32 %v2845, %v2845
  %v2862 = vmul.f32 %v2846, %v2846
  %v2863 = vmul.f32 %v2847, %v2847
  %v2864 = vmul.f32 %v2848, %v2848
  %v2865 = vmul.f32 %v2849, %v2849
  %v2866 = vmul.f32 %v2850, %v2850
  %v2867 = vmul.f32 %v2851, %v2851
  %v2868 = vsel %vm66, %v2852, 0.0
  %2869 = vadd.xlane.f32.xlu0 %v2868
  %v2870 = vpop.xlane.xlu0 %2869
  %v2871 = vsel %vm66, %v2853, 0.0
  %2872 = vadd.xlane.f32.xlu0 %v2871
  %v2873 = vpop.xlane.xlu0 %2872
  %v2874 = vsel %vm66, %v2854, 0.0
  %2875 = vadd.xlane.f32.xlu0 %v2874
  %v2876 = vpop.xlane.xlu0 %2875
  %v2877 = vsel %vm66, %v2855, 0.0
  %2878 = vadd.xlane.f32.xlu0 %v2877
  %v2879 = vpop.xlane.xlu0 %2878
  %v2880 = vsel %vm66, %v2856, 0.0
  %2881 = vadd.xlane.f32.xlu0 %v2880
  %v2882 = vpop.xlane.xlu0 %2881
  %v2883 = vsel %vm66, %v2857, 0.0
  %2884 = vadd.xlane.f32.xlu0 %v2883
  %v2885 = vpop.xlane.xlu0 %2884
  %v2886 = vsel %vm66, %v2858, 0.0
  %2887 = vadd.xlane.f32.xlu0 %v2886
  %v2888 = vpop.xlane.xlu0 %2887
  %v2889 = vsel %vm66, %v2859, 0.0
  %2890 = vadd.xlane.f32.xlu0 %v2889
  %v2891 = vpop.xlane.xlu0 %2890
  %v2892 = vsel %vm66, %v2860, 0.0
  %2893 = vadd.xlane.f32.xlu0 %v2892
  %v2894 = vpop.xlane.xlu0 %2893
  %v2895 = vsel %vm66, %v2861, 0.0
  %2896 = vadd.xlane.f32.xlu0 %v2895
  %v2897 = vpop.xlane.xlu0 %2896
  %v2898 = vsel %vm66, %v2862, 0.0
  %2899 = vadd.xlane.f32.xlu0 %v2898
  %v2900 = vpop.xlane.xlu0 %2899
  %v2901 = vsel %vm66, %v2863, 0.0
  %2902 = vadd.xlane.f32.xlu0 %v2901
  %v2903 = vpop.xlane.xlu0 %2902
  %v2904 = vsel %vm66, %v2864, 0.0
  %2905 = vadd.xlane.f32.xlu0 %v2904
  %v2906 = vpop.xlane.xlu0 %2905
  %v2907 = vsel %vm66, %v2865, 0.0
  %2908 = vadd.xlane.f32.xlu0 %v2907
  %v2909 = vpop.xlane.xlu0 %2908
  %v2910 = vsel %vm66, %v2866, 0.0
  %2911 = vadd.xlane.f32.xlu0 %v2910
  %v2912 = vpop.xlane.xlu0 %2911
  %v2913 = vsel %vm66, %v2867, 0.0
  %2914 = vadd.xlane.f32.xlu0 %v2913
  %v2915 = vpop.xlane.xlu0 %2914
  %v2916 = vmul.f32 %v2870, %v115
  %v2917 = vmul.f32 %v2873, %v115
  %v2918 = vmul.f32 %v2876, %v115
  %v2919 = vmul.f32 %v2879, %v115
  %v2920 = vmul.f32 %v2882, %v115
  %v2921 = vmul.f32 %v2885, %v115
  %v2922 = vmul.f32 %v2888, %v115
  %v2923 = vmul.f32 %v2891, %v115
  %v2924 = vmul.f32 %v2894, %v115
  %v2925 = vmul.f32 %v2897, %v115
  %v2926 = vmul.f32 %v2900, %v115
  %v2927 = vmul.f32 %v2903, %v115
  %v2928 = vmul.f32 %v2906, %v115
  %v2929 = vmul.f32 %v2909, %v115
  %v2930 = vmul.f32 %v2912, %v115
  %v2931 = vmul.f32 %v2915, %v115
  %v2932 = vadd.f32 %v2916, 1e-05
  %v2933 = vadd.f32 %v2917, 1e-05
  %v2934 = vadd.f32 %v2918, 1e-05
  %v2935 = vadd.f32 %v2919, 1e-05
  %v2936 = vadd.f32 %v2920, 1e-05
  %v2937 = vadd.f32 %v2921, 1e-05
  %v2938 = vadd.f32 %v2922, 1e-05
  %v2939 = vadd.f32 %v2923, 1e-05
  %v2940 = vadd.f32 %v2924, 1e-05
  %v2941 = vadd.f32 %v2925, 1e-05
  %v2942 = vadd.f32 %v2926, 1e-05
  %v2943 = vadd.f32 %v2927, 1e-05
  %v2944 = vadd.f32 %v2928, 1e-05
  %v2945 = vadd.f32 %v2929, 1e-05
  %v2946 = vadd.f32 %v2930, 1e-05
  %v2947 = vadd.f32 %v2931, 1e-05
  %v2948 = vrsqrt.pop %v2932
  %v2949 = vrsqrt.pop %v2933
  %v2950 = vrsqrt.pop %v2934
  %v2951 = vrsqrt.pop %v2935
  %v2952 = vrsqrt.pop %v2936
  %v2953 = vrsqrt.pop %v2937
  %v2954 = vrsqrt.pop %v2938
  %v2955 = vrsqrt.pop %v2939
  %v2956 = vrsqrt.pop %v2940
  %v2957 = vrsqrt.pop %v2941
  %v2958 = vrsqrt.pop %v2942
  %v2959 = vrsqrt.pop %v2943
  %v2960 = vrsqrt.pop %v2944
  %v2961 = vrsqrt.pop %v2945
  %v2962 = vrsqrt.pop %v2946
  %v2963 = vrsqrt.pop %v2947
  %v2964 = vmul.f32 %v2836, %v2948
  %v2965 = vmul.f32 %v2837, %v2949
  %v2966 = vmul.f32 %v2838, %v2950
  %v2967 = vmul.f32 %v2839, %v2951
  %v2968 = vmul.f32 %v2840, %v2952
  %v2969 = vmul.f32 %v2841, %v2953
  %v2970 = vmul.f32 %v2842, %v2954
  %v2971 = vmul.f32 %v2843, %v2955
  %v2972 = vmul.f32 %v2844, %v2956
  %v2973 = vmul.f32 %v2845, %v2957
  %v2974 = vmul.f32 %v2846, %v2958
  %v2975 = vmul.f32 %v2847, %v2959
  %v2976 = vmul.f32 %v2848, %v2960
  %v2977 = vmul.f32 %v2849, %v2961
  %v2978 = vmul.f32 %v2850, %v2962
  %v2979 = vmul.f32 %v2851, %v2963
  %v2981 = vlaneseq
  %v2982 = vshrl.u32 %v2981, 7
  %v2983 = vsub.s32 0, %v2982
  %v2984 = vrot.slane %v2770, %v2983
  %v2986 = vmul.f32 %v2964, %v2984
  %v2987 = vmul.f32 %v2965, %v2984
  %v2988 = vmul.f32 %v2966, %v2984
  %v2989 = vmul.f32 %v2967, %v2984
  %v2990 = vmul.f32 %v2968, %v2984
  %v2991 = vmul.f32 %v2969, %v2984
  %v2992 = vmul.f32 %v2970, %v2984
  %v2993 = vmul.f32 %v2971, %v2984
  %v2994 = vmul.f32 %v2972, %v2984
  %v2995 = vmul.f32 %v2973, %v2984
  %v2996 = vmul.f32 %v2974, %v2984
  %v2997 = vmul.f32 %v2975, %v2984
  %v2998 = vmul.f32 %v2976, %v2984
  %v2999 = vmul.f32 %v2977, %v2984
  %v3000 = vmul.f32 %v2978, %v2984
  %v3001 = vmul.f32 %v2979, %v2984
  %v3003 = vlaneseq
  %v3004 = vshrl.u32 %v3003, 7
  %v3005 = vsub.s32 0, %v3004
  %v3006 = vrot.slane %v2771, %v3005
  %v3008 = vadd.f32 %v2986, %v3006
  %v3009 = vadd.f32 %v2987, %v3006
  %v3010 = vadd.f32 %v2988, %v3006
  %v3011 = vadd.f32 %v2989, %v3006
  %v3012 = vadd.f32 %v2990, %v3006
  %v3013 = vadd.f32 %v2991, %v3006
  %v3014 = vadd.f32 %v2992, %v3006
  %v3015 = vadd.f32 %v2993, %v3006
  %v3016 = vadd.f32 %v2994, %v3006
  %v3017 = vadd.f32 %v2995, %v3006
  %v3018 = vadd.f32 %v2996, %v3006
  %v3019 = vadd.f32 %v2997, %v3006
  %v3020 = vadd.f32 %v2998, %v3006
  %v3021 = vadd.f32 %v2999, %v3006
  %v3022 = vadd.f32 %v3000, %v3006
  %v3023 = vadd.f32 %v3001, %v3006
  %v3024 = vmul.f32 %v3008, %v3008
  %v3025 = vmul.f32 %v3009, %v3009
  %v3026 = vmul.f32 %v3010, %v3010
  %v3027 = vmul.f32 %v3011, %v3011
  %v3028 = vmul.f32 %v3012, %v3012
  %v3029 = vmul.f32 %v3013, %v3013
  %v3030 = vmul.f32 %v3014, %v3014
  %v3031 = vmul.f32 %v3015, %v3015
  %v3032 = vmul.f32 %v3016, %v3016
  %v3033 = vmul.f32 %v3017, %v3017
  %v3034 = vmul.f32 %v3018, %v3018
  %v3035 = vmul.f32 %v3019, %v3019
  %v3036 = vmul.f32 %v3020, %v3020
  %v3037 = vmul.f32 %v3021, %v3021
  %v3038 = vmul.f32 %v3022, %v3022
  %v3039 = vmul.f32 %v3023, %v3023
  %v3040 = vsel %vm66, %v3024, 0.0
  %3041 = vadd.xlane.f32.xlu0 %v3040
  %v3042 = vpop.xlane.xlu0 %3041
  %v3043 = vsel %vm66, %v3025, 0.0
  %3044 = vadd.xlane.f32.xlu0 %v3043
  %v3045 = vpop.xlane.xlu0 %3044
  %v3046 = vsel %vm66, %v3026, 0.0
  %3047 = vadd.xlane.f32.xlu0 %v3046
  %v3048 = vpop.xlane.xlu0 %3047
  %v3049 = vsel %vm66, %v3027, 0.0
  %3050 = vadd.xlane.f32.xlu0 %v3049
  %v3051 = vpop.xlane.xlu0 %3050
  %v3052 = vsel %vm66, %v3028, 0.0
  %3053 = vadd.xlane.f32.xlu0 %v3052
  %v3054 = vpop.xlane.xlu0 %3053
  %v3055 = vsel %vm66, %v3029, 0.0
  %3056 = vadd.xlane.f32.xlu0 %v3055
  %v3057 = vpop.xlane.xlu0 %3056
  %v3058 = vsel %vm66, %v3030, 0.0
  %3059 = vadd.xlane.f32.xlu0 %v3058
  %v3060 = vpop.xlane.xlu0 %3059
  %v3061 = vsel %vm66, %v3031, 0.0
  %3062 = vadd.xlane.f32.xlu0 %v3061
  %v3063 = vpop.xlane.xlu0 %3062
  %v3064 = vsel %vm66, %v3032, 0.0
  %3065 = vadd.xlane.f32.xlu0 %v3064
  %v3066 = vpop.xlane.xlu0 %3065
  %v3067 = vsel %vm66, %v3033, 0.0
  %3068 = vadd.xlane.f32.xlu0 %v3067
  %v3069 = vpop.xlane.xlu0 %3068
  %v3070 = vsel %vm66, %v3034, 0.0
  %3071 = vadd.xlane.f32.xlu0 %v3070
  %v3072 = vpop.xlane.xlu0 %3071
  %v3073 = vsel %vm66, %v3035, 0.0
  %3074 = vadd.xlane.f32.xlu0 %v3073
  %v3075 = vpop.xlane.xlu0 %3074
  %v3076 = vsel %vm66, %v3036, 0.0
  %3077 = vadd.xlane.f32.xlu0 %v3076
  %v3078 = vpop.xlane.xlu0 %3077
  %v3079 = vsel %vm66, %v3037, 0.0
  %3080 = vadd.xlane.f32.xlu0 %v3079
  %v3081 = vpop.xlane.xlu0 %3080
  %v3082 = vsel %vm66, %v3038, 0.0
  %3083 = vadd.xlane.f32.xlu0 %v3082
  %v3084 = vpop.xlane.xlu0 %3083
  %v3085 = vsel %vm66, %v3039, 0.0
  %3086 = vadd.xlane.f32.xlu0 %v3085
  %v3087 = vpop.xlane.xlu0 %3086
  %v3088 = vmax.f32 %v3042, 1e-24
  %v3089 = vmax.f32 %v3045, 1e-24
  %v3090 = vmax.f32 %v3048, 1e-24
  %v3091 = vmax.f32 %v3051, 1e-24
  %v3092 = vmax.f32 %v3054, 1e-24
  %v3093 = vmax.f32 %v3057, 1e-24
  %v3094 = vmax.f32 %v3060, 1e-24
  %v3095 = vmax.f32 %v3063, 1e-24
  %v3096 = vmax.f32 %v3066, 1e-24
  %v3097 = vmax.f32 %v3069, 1e-24
  %v3098 = vmax.f32 %v3072, 1e-24
  %v3099 = vmax.f32 %v3075, 1e-24
  %v3100 = vmax.f32 %v3078, 1e-24
  %v3101 = vmax.f32 %v3081, 1e-24
  %v3102 = vmax.f32 %v3084, 1e-24
  %v3103 = vmax.f32 %v3087, 1e-24
  %v3104 = vrsqrt.pop %v3088
  %v3105 = vrsqrt.pop %v3089
  %v3106 = vrsqrt.pop %v3090
  %v3107 = vrsqrt.pop %v3091
  %v3108 = vrsqrt.pop %v3092
  %v3109 = vrsqrt.pop %v3093
  %v3110 = vrsqrt.pop %v3094
  %v3111 = vrsqrt.pop %v3095
  %v3112 = vrsqrt.pop %v3096
  %v3113 = vrsqrt.pop %v3097
  %v3114 = vrsqrt.pop %v3098
  %v3115 = vrsqrt.pop %v3099
  %v3116 = vrsqrt.pop %v3100
  %v3117 = vrsqrt.pop %v3101
  %v3118 = vrsqrt.pop %v3102
  %v3119 = vrsqrt.pop %v3103
  %v3120 = vmul.f32 %v3008, %v3104
  %v3121 = vmul.f32 %v3009, %v3105
  %v3122 = vmul.f32 %v3010, %v3106
  %v3123 = vmul.f32 %v3011, %v3107
  %v3124 = vmul.f32 %v3012, %v3108
  %v3125 = vmul.f32 %v3013, %v3109
  %v3126 = vmul.f32 %v3014, %v3110
  %v3127 = vmul.f32 %v3015, %v3111
  %v3128 = vmul.f32 %v3016, %v3112
  %v3129 = vmul.f32 %v3017, %v3113
  %v3130 = vmul.f32 %v3018, %v3114
  %v3131 = vmul.f32 %v3019, %v3115
  %v3132 = vmul.f32 %v3020, %v3116
  %v3133 = vmul.f32 %v3021, %v3117
  %v3134 = vmul.f32 %v3022, %v3118
  %v3135 = vmul.f32 %v3023, %v3119
  %v3136 = vpack.c.bf16 %v3009, %v3008
  %v3137 = vpack.c.bf16 %v3011, %v3010
  %v3138 = vpack.c.bf16 %v3013, %v3012
  %v3139 = vpack.c.bf16 %v3015, %v3014
  %v3140 = vpack.c.bf16 %v3017, %v3016
  %v3141 = vpack.c.bf16 %v3019, %v3018
  %v3142 = vpack.c.bf16 %v3021, %v3020
  %v3143 = vpack.c.bf16 %v3023, %v3022
  %v3144 = vpack.c.bf16 %v3121, %v3120
  %v3145 = vpack.c.bf16 %v3123, %v3122
  %v3146 = vpack.c.bf16 %v3125, %v3124
  %v3147 = vpack.c.bf16 %v3127, %v3126
  %v3148 = vpack.c.bf16 %v3129, %v3128
  %v3149 = vpack.c.bf16 %v3131, %v3130
  %v3150 = vpack.c.bf16 %v3133, %v3132
  %v3151 = vpack.c.bf16 %v3135, %v3134
  %v3152 = vld [vmem:[%s8] sm:$0xf]
  %v3153 = vld [vmem:[%s8 + $0x4] sm:$0xf]
  %v3156 = vunpack.c.l.b16 %v3152
  %v3157 = vunpack.c.l.b16 %v3153
  %v3158 = vpack.c.b16 %v3157, %v3156
  %v3160 = vsel %vm66, %v3158, 0
  %v3163 = vsel %vm66, %v3144, 0
  %v3166 = vsel %vm66, %v3145, 0
  %v3169 = vsel %vm66, %v3146, 0
  %v3172 = vsel %vm66, %v3147, 0
  %3174 = vmatprep.subr.bf16.mxu0 0
  %3175 = vmatpush1.bf16.xpose.msra.mxu0 %v3163
  %3176 = vmatprep.subr.bf16.mxu0 0
  %3177 = vmatpush1.bf16.xpose.msra.mxu0 %v3166
  %3178 = vmatprep.subr.bf16.mxu0 0
  %3179 = vmatpush1.bf16.xpose.msra.mxu0 %v3169
  %3180 = vmatprep.subr.bf16.mxu0 0
  %3181 = vmatpush1.bf16.xpose.msra.mxu0 %v3172
  %3182 = vmatprep.subr.bf16.mxu0 0
  %3183 = vmatpush1.bf16.xpose.msra.mxu0 0
  %3184 = vmatprep.subr.bf16.mxu0 0
  %3185 = vmatpush1.bf16.xpose.msra.mxu0 0
  %3186 = vmatprep.subr.bf16.mxu0 0
  %3187 = vmatpush1.bf16.xpose.msra.mxu0 0
  %3188 = vmatprep.subr.bf16.mxu0 0
  %3189 = vmatpush1.bf16.xpose.msra.mxu0 0
  %3190 = vmatprep.subr.bf16.mxu0 0
  %3191 = vmatpush1.bf16.xpose.msra.mxu0 0
  %3192 = vmatprep.subr.bf16.mxu0 0
  %3193 = vmatpush1.bf16.xpose.msra.mxu0 0
  %3194 = vmatprep.subr.bf16.mxu0 0
  %3195 = vmatpush1.bf16.xpose.msra.mxu0 0
  %3196 = vmatprep.subr.bf16.mxu0 0
  %3197 = vmatpush1.bf16.xpose.msra.mxu0 0
  %3198 = vmatprep.subr.bf16.mxu0 0
  %3199 = vmatpush1.bf16.xpose.msra.mxu0 0
  %3200 = vmatprep.subr.bf16.mxu0 0
  %3201 = vmatpush1.bf16.xpose.msra.mxu0 0
  %3202 = vmatprep.subr.bf16.mxu0 0
  %3203 = vmatpush1.bf16.xpose.msra.mxu0 0
  %3204 = vmatprep.subr.bf16.mxu0 0
  %3205 = vmatpush1.bf16.xpose.msra.mxu0 0
  %3206 = vmatprep.mubr.bf16.mxu0 0
  %3207 = vmatmul.mubr.bf16.gmra.mrb[0].mxu0 %v3160
  %v3208 = vpop.f32.mrb[0].mxu0
  %v3209 = vadd.f32 0.0, %v3208
  %v3210 = vpop.f32.mrb[0].mxu0
  %v3211 = vpop.f32.mrb[0].mxu0
  %v3212 = vadd.f32 0.0, %v3211
  %v3213 = vpop.f32.mrb[0].mxu0
  %3214 = vdwg.mxu0
  %v3216 = vsel %vm66, %v3148, 0
  %v3219 = vsel %vm66, %v3149, 0
  %v3222 = vsel %vm66, %v3150, 0
  %v3225 = vsel %vm66, %v3151, 0
  %3227 = vmatprep.subr.bf16.mxu0 0
  %3228 = vmatpush1.bf16.xpose.msra.mxu0 %v3216
  %3229 = vmatprep.subr.bf16.mxu0 0
  %3230 = vmatpush1.bf16.xpose.msra.mxu0 %v3219
  %3231 = vmatprep.subr.bf16.mxu0 0
  %3232 = vmatpush1.bf16.xpose.msra.mxu0 %v3222
  %3233 = vmatprep.subr.bf16.mxu0 0
  %3234 = vmatpush1.bf16.xpose.msra.mxu0 %v3225
  %3235 = vmatprep.subr.bf16.mxu0 0
  %3236 = vmatpush1.bf16.xpose.msra.mxu0 0
  %3237 = vmatprep.subr.bf16.mxu0 0
  %3238 = vmatpush1.bf16.xpose.msra.mxu0 0
  %3239 = vmatprep.subr.bf16.mxu0 0
  %3240 = vmatpush1.bf16.xpose.msra.mxu0 0
  %3241 = vmatprep.subr.bf16.mxu0 0
  %3242 = vmatpush1.bf16.xpose.msra.mxu0 0
  %3243 = vmatprep.subr.bf16.mxu0 0
  %3244 = vmatpush1.bf16.xpose.msra.mxu0 0
  %3245 = vmatprep.subr.bf16.mxu0 0
  %3246 = vmatpush1.bf16.xpose.msra.mxu0 0
  %3247 = vmatprep.subr.bf16.mxu0 0
  %3248 = vmatpush1.bf16.xpose.msra.mxu0 0
  %3249 = vmatprep.subr.bf16.mxu0 0
  %3250 = vmatpush1.bf16.xpose.msra.mxu0 0
  %3251 = vmatprep.subr.bf16.mxu0 0
  %3252 = vmatpush1.bf16.xpose.msra.mxu0 0
  %3253 = vmatprep.subr.bf16.mxu0 0
  %3254 = vmatpush1.bf16.xpose.msra.mxu0 0
  %3255 = vmatprep.subr.bf16.mxu0 0
  %3256 = vmatpush1.bf16.xpose.msra.mxu0 0
  %3257 = vmatprep.subr.bf16.mxu0 0
  %3258 = vmatpush1.bf16.xpose.msra.mxu0 0
  %3259 = vmatprep.mubr.bf16.mxu0 0
  %3260 = vmatmul.mubr.bf16.gmra.mrb[0].mxu0 %v3160
  %v3261 = vpop.f32.mrb[0].mxu0
  %v3262 = vadd.f32 0.0, %v3261
  %v3263 = vpop.f32.mrb[0].mxu0
  %v3264 = vpop.f32.mrb[0].mxu0
  %v3265 = vadd.f32 0.0, %v3264
  %v3266 = vpop.f32.mrb[0].mxu0
  %3267 = vdwg.mxu0
  %3268 = vmatprep.subr.bf16.mxu0 0
  %3269 = vmatpush1.bf16.xpose.msra.mxu0 %v3160
  %3270 = vmatprep.subr.bf16.mxu0 0
  %3271 = vmatpush1.bf16.xpose.msra.mxu0 0
  %3272 = vmatprep.subr.bf16.mxu0 0
  %3273 = vmatpush1.bf16.xpose.msra.mxu0 0
  %3274 = vmatprep.subr.bf16.mxu0 0
  %3275 = vmatpush1.bf16.xpose.msra.mxu0 0
  %3276 = vmatprep.subr.bf16.mxu0 0
  %3277 = vmatpush1.bf16.xpose.msra.mxu0 0
  %3278 = vmatprep.subr.bf16.mxu0 0
  %3279 = vmatpush1.bf16.xpose.msra.mxu0 0
  %3280 = vmatprep.subr.bf16.mxu0 0
  %3281 = vmatpush1.bf16.xpose.msra.mxu0 0
  %3282 = vmatprep.subr.bf16.mxu0 0
  %3283 = vmatpush1.bf16.xpose.msra.mxu0 0
  %3284 = vmatprep.subr.bf16.mxu0 0
  %3285 = vmatpush1.bf16.xpose.msra.mxu0 0
  %3286 = vmatprep.subr.bf16.mxu0 0
  %3287 = vmatpush1.bf16.xpose.msra.mxu0 0
  %3288 = vmatprep.subr.bf16.mxu0 0
  %3289 = vmatpush1.bf16.xpose.msra.mxu0 0
  %3290 = vmatprep.subr.bf16.mxu0 0
  %3291 = vmatpush1.bf16.xpose.msra.mxu0 0
  %3292 = vmatprep.subr.bf16.mxu0 0
  %3293 = vmatpush1.bf16.xpose.msra.mxu0 0
  %3294 = vmatprep.subr.bf16.mxu0 0
  %3295 = vmatpush1.bf16.xpose.msra.mxu0 0
  %3296 = vmatprep.subr.bf16.mxu0 0
  %3297 = vmatpush1.bf16.xpose.msra.mxu0 0
  %3298 = vmatprep.subr.bf16.mxu0 0
  %3299 = vmatpush1.bf16.xpose.msra.mxu0 0
  %3300 = vmatprep.mubr.bf16.mxu0 0
  %3301 = vmatmul.mubr.bf16.gmra.mrb[0].mxu0 %v3163
  %v3302 = vpop.f32.mrb[0].mxu0
  %v3303 = vadd.f32 0.0, %v3302
  %v3304 = vpop.f32.mrb[0].mxu0
  %v3305 = vpop.f32.mrb[0].mxu0
  %v3306 = vadd.f32 0.0, %v3305
  %v3307 = vpop.f32.mrb[0].mxu0
  %3308 = vmatprep.mubr.bf16.mxu0 0
  %3309 = vmatmul.mubr.bf16.gmra.mrb[0].mxu0 %v3166
  %v3310 = vpop.f32.mrb[0].mxu0
  %v3311 = vadd.f32 0.0, %v3310
  %v3312 = vpop.f32.mrb[0].mxu0
  %v3313 = vpop.f32.mrb[0].mxu0
  %v3314 = vadd.f32 0.0, %v3313
  %v3315 = vpop.f32.mrb[0].mxu0
  %3316 = vmatprep.mubr.bf16.mxu0 0
  %3317 = vmatmul.mubr.bf16.gmra.mrb[0].mxu0 %v3169
  %v3318 = vpop.f32.mrb[0].mxu0
  %v3319 = vadd.f32 0.0, %v3318
  %v3320 = vpop.f32.mrb[0].mxu0
  %v3321 = vpop.f32.mrb[0].mxu0
  %v3322 = vadd.f32 0.0, %v3321
  %v3323 = vpop.f32.mrb[0].mxu0
  %3324 = vmatprep.mubr.bf16.mxu0 0
  %3325 = vmatmul.mubr.bf16.gmra.mrb[0].mxu0 %v3172
  %v3326 = vpop.f32.mrb[0].mxu0
  %v3327 = vadd.f32 0.0, %v3326
  %v3328 = vpop.f32.mrb[0].mxu0
  %v3329 = vpop.f32.mrb[0].mxu0
  %v3330 = vadd.f32 0.0, %v3329
  %v3331 = vpop.f32.mrb[0].mxu0
  %3332 = vdwg.mxu0
  %3333 = vmatprep.subr.bf16.mxu0 0
  %3334 = vmatpush1.bf16.xpose.msra.mxu0 %v3160
  %3335 = vmatprep.subr.bf16.mxu0 0
  %3336 = vmatpush1.bf16.xpose.msra.mxu0 0
  %3337 = vmatprep.subr.bf16.mxu0 0
  %3338 = vmatpush1.bf16.xpose.msra.mxu0 0
  %3339 = vmatprep.subr.bf16.mxu0 0
  %3340 = vmatpush1.bf16.xpose.msra.mxu0 0
  %3341 = vmatprep.subr.bf16.mxu0 0
  %3342 = vmatpush1.bf16.xpose.msra.mxu0 0
  %3343 = vmatprep.subr.bf16.mxu0 0
  %3344 = vmatpush1.bf16.xpose.msra.mxu0 0
  %3345 = vmatprep.subr.bf16.mxu0 0
  %3346 = vmatpush1.bf16.xpose.msra.mxu0 0
  %3347 = vmatprep.subr.bf16.mxu0 0
  %3348 = vmatpush1.bf16.xpose.msra.mxu0 0
  %3349 = vmatprep.subr.bf16.mxu0 0
  %3350 = vmatpush1.bf16.xpose.msra.mxu0 0
  %3351 = vmatprep.subr.bf16.mxu0 0
  %3352 = vmatpush1.bf16.xpose.msra.mxu0 0
  %3353 = vmatprep.subr.bf16.mxu0 0
  %3354 = vmatpush1.bf16.xpose.msra.mxu0 0
  %3355 = vmatprep.subr.bf16.mxu0 0
  %3356 = vmatpush1.bf16.xpose.msra.mxu0 0
  %3357 = vmatprep.subr.bf16.mxu0 0
  %3358 = vmatpush1.bf16.xpose.msra.mxu0 0
  %3359 = vmatprep.subr.bf16.mxu0 0
  %3360 = vmatpush1.bf16.xpose.msra.mxu0 0
  %3361 = vmatprep.subr.bf16.mxu0 0
  %3362 = vmatpush1.bf16.xpose.msra.mxu0 0
  %3363 = vmatprep.subr.bf16.mxu0 0
  %3364 = vmatpush1.bf16.xpose.msra.mxu0 0
  %3365 = vmatprep.mubr.bf16.mxu0 0
  %3366 = vmatmul.mubr.bf16.gmra.mrb[0].mxu0 %v3216
  %v3367 = vpop.f32.mrb[0].mxu0
  %v3368 = vadd.f32 0.0, %v3367
  %v3369 = vpop.f32.mrb[0].mxu0
  %v3370 = vpop.f32.mrb[0].mxu0
  %v3371 = vadd.f32 0.0, %v3370
  %v3372 = vpop.f32.mrb[0].mxu0
  %3373 = vmatprep.mubr.bf16.mxu0 0
  %3374 = vmatmul.mubr.bf16.gmra.mrb[0].mxu0 %v3219
  %v3375 = vpop.f32.mrb[0].mxu0
  %v3376 = vadd.f32 0.0, %v3375
  %v3377 = vpop.f32.mrb[0].mxu0
  %v3378 = vpop.f32.mrb[0].mxu0
  %v3379 = vadd.f32 0.0, %v3378
  %v3380 = vpop.f32.mrb[0].mxu0
  %3381 = vmatprep.mubr.bf16.mxu0 0
  %3382 = vmatmul.mubr.bf16.gmra.mrb[0].mxu0 %v3222
  %v3383 = vpop.f32.mrb[0].mxu0
  %v3384 = vadd.f32 0.0, %v3383
  %v3385 = vpop.f32.mrb[0].mxu0
  %v3386 = vpop.f32.mrb[0].mxu0
  %v3387 = vadd.f32 0.0, %v3386
  %v3388 = vpop.f32.mrb[0].mxu0
  %3389 = vmatprep.mubr.bf16.mxu0 0
  %3390 = vmatmul.mubr.bf16.gmra.mrb[0].mxu0 %v3225
  %v3391 = vpop.f32.mrb[0].mxu0
  %v3392 = vadd.f32 0.0, %v3391
  %v3393 = vpop.f32.mrb[0].mxu0
  %v3394 = vpop.f32.mrb[0].mxu0
  %v3395 = vadd.f32 0.0, %v3394
  %v3396 = vpop.f32.mrb[0].mxu0
  %3397 = vdwg.mxu0
  %v3398 = vsel %vm748, %v3209, -inf
  %3399 = vmax.xlane.f32.xlu0 %v3398
  %v3400 = vpop.xlane.xlu0 %3399
  %v3401 = vsel %vm748, %v3212, -inf
  %3402 = vmax.xlane.f32.xlu0 %v3401
  %v3403 = vpop.xlane.xlu0 %3402
  %v3404 = vsel %vm748, %v3262, -inf
  %3405 = vmax.xlane.f32.xlu0 %v3404
  %v3406 = vpop.xlane.xlu0 %3405
  %v3407 = vsel %vm748, %v3265, -inf
  %3408 = vmax.xlane.f32.xlu0 %v3407
  %v3409 = vpop.xlane.xlu0 %3408
  %v3410 = vsub.f32 %v3209, %v3400
  %v3411 = vsub.f32 %v3212, %v3403
  %v3412 = vsub.f32 %v3262, %v3406
  %v3413 = vsub.f32 %v3265, %v3409
  %v3414 = vmul.f32 %v3410, 1.442695
  %v3415 = vpow.pop %v3414
  %v3416 = vmul.f32 %v3411, 1.442695
  %v3417 = vpow.pop %v3416
  %v3418 = vmul.f32 %v3412, 1.442695
  %v3419 = vpow.pop %v3418
  %v3420 = vmul.f32 %v3413, 1.442695
  %v3421 = vpow.pop %v3420
  %v3422 = vsel %vm748, %v3415, 0.0
  %3423 = vadd.xlane.f32.xlu0 %v3422
  %v3424 = vpop.xlane.xlu0 %3423
  %v3425 = vsel %vm748, %v3417, 0.0
  %3426 = vadd.xlane.f32.xlu0 %v3425
  %v3427 = vpop.xlane.xlu0 %3426
  %v3428 = vsel %vm748, %v3419, 0.0
  %3429 = vadd.xlane.f32.xlu0 %v3428
  %v3430 = vpop.xlane.xlu0 %3429
  %v3431 = vsel %vm748, %v3421, 0.0
  %3432 = vadd.xlane.f32.xlu0 %v3431
  %v3433 = vpop.xlane.xlu0 %3432
  %v3434 = vrcp.pop %v3424
  %v3435 = vrcp.pop %v3427
  %v3436 = vrcp.pop %v3430
  %v3437 = vrcp.pop %v3433
  %v3438 = vmul.f32 %v3415, %v3434
  %v3439 = vmul.f32 %v3417, %v3435
  %v3440 = vmul.f32 %v3419, %v3436
  %v3441 = vmul.f32 %v3421, %v3437
  %vm3442 = vcmask 130048
  %v3443 = vsel %vm3442, %v3303, -inf
  %3444 = vmax.xlane.f32.xlu0 %v3443
  %v3445 = vpop.xlane.xlu0 %3444
  %v3446 = vsel %vm3442, %v3306, -inf
  %3447 = vmax.xlane.f32.xlu0 %v3446
  %v3448 = vpop.xlane.xlu0 %3447
  %v3449 = vsel %vm3442, %v3311, -inf
  %3450 = vmax.xlane.f32.xlu0 %v3449
  %v3451 = vpop.xlane.xlu0 %3450
  %v3452 = vsel %vm3442, %v3314, -inf
  %3453 = vmax.xlane.f32.xlu0 %v3452
  %v3454 = vpop.xlane.xlu0 %3453
  %v3455 = vsel %vm3442, %v3319, -inf
  %3456 = vmax.xlane.f32.xlu0 %v3455
  %v3457 = vpop.xlane.xlu0 %3456
  %v3458 = vsel %vm3442, %v3322, -inf
  %3459 = vmax.xlane.f32.xlu0 %v3458
  %v3460 = vpop.xlane.xlu0 %3459
  %v3461 = vsel %vm3442, %v3327, -inf
  %3462 = vmax.xlane.f32.xlu0 %v3461
  %v3463 = vpop.xlane.xlu0 %3462
  %v3464 = vsel %vm3442, %v3330, -inf
  %3465 = vmax.xlane.f32.xlu0 %v3464
  %v3466 = vpop.xlane.xlu0 %3465
  %v3467 = vsel %vm3442, %v3368, -inf
  %3468 = vmax.xlane.f32.xlu0 %v3467
  %v3469 = vpop.xlane.xlu0 %3468
  %v3470 = vsel %vm3442, %v3371, -inf
  %3471 = vmax.xlane.f32.xlu0 %v3470
  %v3472 = vpop.xlane.xlu0 %3471
  %v3473 = vsel %vm3442, %v3376, -inf
  %3474 = vmax.xlane.f32.xlu0 %v3473
  %v3475 = vpop.xlane.xlu0 %3474
  %v3476 = vsel %vm3442, %v3379, -inf
  %3477 = vmax.xlane.f32.xlu0 %v3476
  %v3478 = vpop.xlane.xlu0 %3477
  %v3479 = vsel %vm3442, %v3384, -inf
  %3480 = vmax.xlane.f32.xlu0 %v3479
  %v3481 = vpop.xlane.xlu0 %3480
  %v3482 = vsel %vm3442, %v3387, -inf
  %3483 = vmax.xlane.f32.xlu0 %v3482
  %v3484 = vpop.xlane.xlu0 %3483
  %v3485 = vsel %vm3442, %v3392, -inf
  %3486 = vmax.xlane.f32.xlu0 %v3485
  %v3487 = vpop.xlane.xlu0 %3486
  %v3488 = vsel %vm3442, %v3395, -inf
  %3489 = vmax.xlane.f32.xlu0 %v3488
  %v3490 = vpop.xlane.xlu0 %3489
  %v3491 = vsub.f32 %v3303, %v3445
  %v3492 = vsub.f32 %v3306, %v3448
  %v3493 = vsub.f32 %v3311, %v3451
  %v3494 = vsub.f32 %v3314, %v3454
  %v3495 = vsub.f32 %v3319, %v3457
  %v3496 = vsub.f32 %v3322, %v3460
  %v3497 = vsub.f32 %v3327, %v3463
  %v3498 = vsub.f32 %v3330, %v3466
  %v3499 = vsub.f32 %v3368, %v3469
  %v3500 = vsub.f32 %v3371, %v3472
  %v3501 = vsub.f32 %v3376, %v3475
  %v3502 = vsub.f32 %v3379, %v3478
  %v3503 = vsub.f32 %v3384, %v3481
  %v3504 = vsub.f32 %v3387, %v3484
  %v3505 = vsub.f32 %v3392, %v3487
  %v3506 = vsub.f32 %v3395, %v3490
  %v3507 = vmul.f32 %v3491, 1.442695
  %v3508 = vpow.pop %v3507
  %v3509 = vmul.f32 %v3492, 1.442695
  %v3510 = vpow.pop %v3509
  %v3511 = vmul.f32 %v3493, 1.442695
  %v3512 = vpow.pop %v3511
  %v3513 = vmul.f32 %v3494, 1.442695
  %v3514 = vpow.pop %v3513
  %v3515 = vmul.f32 %v3495, 1.442695
  %v3516 = vpow.pop %v3515
  %v3517 = vmul.f32 %v3496, 1.442695
  %v3518 = vpow.pop %v3517
  %v3519 = vmul.f32 %v3497, 1.442695
  %v3520 = vpow.pop %v3519
  %v3521 = vmul.f32 %v3498, 1.442695
  %v3522 = vpow.pop %v3521
  %v3523 = vmul.f32 %v3499, 1.442695
  %v3524 = vpow.pop %v3523
  %v3525 = vmul.f32 %v3500, 1.442695
  %v3526 = vpow.pop %v3525
  %v3527 = vmul.f32 %v3501, 1.442695
  %v3528 = vpow.pop %v3527
  %v3529 = vmul.f32 %v3502, 1.442695
  %v3530 = vpow.pop %v3529
  %v3531 = vmul.f32 %v3503, 1.442695
  %v3532 = vpow.pop %v3531
  %v3533 = vmul.f32 %v3504, 1.442695
  %v3534 = vpow.pop %v3533
  %v3535 = vmul.f32 %v3505, 1.442695
  %v3536 = vpow.pop %v3535
  %v3537 = vmul.f32 %v3506, 1.442695
  %v3538 = vpow.pop %v3537
  %v3539 = vsel %vm3442, %v3508, 0.0
  %3540 = vadd.xlane.f32.xlu0 %v3539
  %v3541 = vpop.xlane.xlu0 %3540
  %v3542 = vsel %vm3442, %v3510, 0.0
  %3543 = vadd.xlane.f32.xlu0 %v3542
  %v3544 = vpop.xlane.xlu0 %3543
  %v3545 = vsel %vm3442, %v3512, 0.0
  %3546 = vadd.xlane.f32.xlu0 %v3545
  %v3547 = vpop.xlane.xlu0 %3546
  %v3548 = vsel %vm3442, %v3514, 0.0
  %3549 = vadd.xlane.f32.xlu0 %v3548
  %v3550 = vpop.xlane.xlu0 %3549
  %v3551 = vsel %vm3442, %v3516, 0.0
  %3552 = vadd.xlane.f32.xlu0 %v3551
  %v3553 = vpop.xlane.xlu0 %3552
  %v3554 = vsel %vm3442, %v3518, 0.0
  %3555 = vadd.xlane.f32.xlu0 %v3554
  %v3556 = vpop.xlane.xlu0 %3555
  %v3557 = vsel %vm3442, %v3520, 0.0
  %3558 = vadd.xlane.f32.xlu0 %v3557
  %v3559 = vpop.xlane.xlu0 %3558
  %v3560 = vsel %vm3442, %v3522, 0.0
  %3561 = vadd.xlane.f32.xlu0 %v3560
  %v3562 = vpop.xlane.xlu0 %3561
  %v3563 = vsel %vm3442, %v3524, 0.0
  %3564 = vadd.xlane.f32.xlu0 %v3563
  %v3565 = vpop.xlane.xlu0 %3564
  %v3566 = vsel %vm3442, %v3526, 0.0
  %3567 = vadd.xlane.f32.xlu0 %v3566
  %v3568 = vpop.xlane.xlu0 %3567
  %v3569 = vsel %vm3442, %v3528, 0.0
  %3570 = vadd.xlane.f32.xlu0 %v3569
  %v3571 = vpop.xlane.xlu0 %3570
  %v3572 = vsel %vm3442, %v3530, 0.0
  %3573 = vadd.xlane.f32.xlu0 %v3572
  %v3574 = vpop.xlane.xlu0 %3573
  %v3575 = vsel %vm3442, %v3532, 0.0
  %3576 = vadd.xlane.f32.xlu0 %v3575
  %v3577 = vpop.xlane.xlu0 %3576
  %v3578 = vsel %vm3442, %v3534, 0.0
  %3579 = vadd.xlane.f32.xlu0 %v3578
  %v3580 = vpop.xlane.xlu0 %3579
  %v3581 = vsel %vm3442, %v3536, 0.0
  %3582 = vadd.xlane.f32.xlu0 %v3581
  %v3583 = vpop.xlane.xlu0 %3582
  %v3584 = vsel %vm3442, %v3538, 0.0
  %3585 = vadd.xlane.f32.xlu0 %v3584
  %v3586 = vpop.xlane.xlu0 %3585
  %v3587 = vrcp.pop %v3541
  %v3588 = vrcp.pop %v3544
  %v3589 = vrcp.pop %v3547
  %v3590 = vrcp.pop %v3550
  %v3591 = vrcp.pop %v3553
  %v3592 = vrcp.pop %v3556
  %v3593 = vrcp.pop %v3559
  %v3594 = vrcp.pop %v3562
  %v3595 = vrcp.pop %v3565
  %v3596 = vrcp.pop %v3568
  %v3597 = vrcp.pop %v3571
  %v3598 = vrcp.pop %v3574
  %v3599 = vrcp.pop %v3577
  %v3600 = vrcp.pop %v3580
  %v3601 = vrcp.pop %v3583
  %v3602 = vrcp.pop %v3586
  %v3603 = vmul.f32 %v3508, %v3587
  %v3604 = vmul.f32 %v3510, %v3588
  %v3605 = vmul.f32 %v3512, %v3589
  %v3606 = vmul.f32 %v3514, %v3590
  %v3607 = vmul.f32 %v3516, %v3591
  %v3608 = vmul.f32 %v3518, %v3592
  %v3609 = vmul.f32 %v3520, %v3593
  %v3610 = vmul.f32 %v3522, %v3594
  %v3611 = vmul.f32 %v3524, %v3595
  %v3612 = vmul.f32 %v3526, %v3596
  %v3613 = vmul.f32 %v3528, %v3597
  %v3614 = vmul.f32 %v3530, %v3598
  %v3615 = vmul.f32 %v3532, %v3599
  %v3616 = vmul.f32 %v3534, %v3600
  %v3617 = vmul.f32 %v3536, %v3601
  %v3618 = vmul.f32 %v3538, %v3602
  %v3619 = vpack.c.bf16 %v3439, %v3438
  %v3620 = vpack.c.bf16 %v3441, %v3440
  %v3622 = vsel %vm748, %v3619, 0
  %3624 = vmatprep.subr.bf16.mxu0 0
  %3625 = vmatpush1.bf16.msra.mxu0 %v3136
  %3626 = vmatprep.subr.bf16.mxu0 0
  %3627 = vmatpush1.bf16.msra.mxu0 %v3137
  %3628 = vmatprep.subr.bf16.mxu0 0
  %3629 = vmatpush1.bf16.msra.mxu0 %v3138
  %3630 = vmatprep.subr.bf16.mxu0 0
  %3631 = vmatpush1.bf16.msra.mxu0 %v3139
  %3632 = vmatprep.subr.bf16.mxu0 0
  %3633 = vmatpush1.bf16.msra.mxu0 0
  %3634 = vmatprep.subr.bf16.mxu0 0
  %3635 = vmatpush1.bf16.msra.mxu0 0
  %3636 = vmatprep.subr.bf16.mxu0 0
  %3637 = vmatpush1.bf16.msra.mxu0 0
  %3638 = vmatprep.subr.bf16.mxu0 0
  %3639 = vmatpush1.bf16.msra.mxu0 0
  %3640 = vmatprep.subr.bf16.mxu0 0
  %3641 = vmatpush1.bf16.msra.mxu0 0
  %3642 = vmatprep.subr.bf16.mxu0 0
  %3643 = vmatpush1.bf16.msra.mxu0 0
  %3644 = vmatprep.subr.bf16.mxu0 0
  %3645 = vmatpush1.bf16.msra.mxu0 0
  %3646 = vmatprep.subr.bf16.mxu0 0
  %3647 = vmatpush1.bf16.msra.mxu0 0
  %3648 = vmatprep.subr.bf16.mxu0 0
  %3649 = vmatpush1.bf16.msra.mxu0 0
  %3650 = vmatprep.subr.bf16.mxu0 0
  %3651 = vmatpush1.bf16.msra.mxu0 0
  %3652 = vmatprep.subr.bf16.mxu0 0
  %3653 = vmatpush1.bf16.msra.mxu0 0
  %3654 = vmatprep.subr.bf16.mxu0 0
  %3655 = vmatpush1.bf16.msra.mxu0 0
  %3656 = vmatprep.mubr.bf16.mxu0 0
  %3657 = vmatmul.mubr.bf16.gmra.mrb[0].mxu0 %v3622
  %v3658 = vpop.f32.mrb[0].mxu0
  %v3659 = vadd.f32 0.0, %v3658
  %v3660 = vpop.f32.mrb[0].mxu0
  %v3661 = vpop.f32.mrb[0].mxu0
  %v3662 = vadd.f32 0.0, %v3661
  %v3663 = vpop.f32.mrb[0].mxu0
  %3664 = vdwg.mxu0
  %v3666 = vsel %vm748, %v3620, 0
  %3668 = vmatprep.subr.bf16.mxu0 0
  %3669 = vmatpush1.bf16.msra.mxu0 %v3140
  %3670 = vmatprep.subr.bf16.mxu0 0
  %3671 = vmatpush1.bf16.msra.mxu0 %v3141
  %3672 = vmatprep.subr.bf16.mxu0 0
  %3673 = vmatpush1.bf16.msra.mxu0 %v3142
  %3674 = vmatprep.subr.bf16.mxu0 0
  %3675 = vmatpush1.bf16.msra.mxu0 %v3143
  %3676 = vmatprep.subr.bf16.mxu0 0
  %3677 = vmatpush1.bf16.msra.mxu0 0
  %3678 = vmatprep.subr.bf16.mxu0 0
  %3679 = vmatpush1.bf16.msra.mxu0 0
  %3680 = vmatprep.subr.bf16.mxu0 0
  %3681 = vmatpush1.bf16.msra.mxu0 0
  %3682 = vmatprep.subr.bf16.mxu0 0
  %3683 = vmatpush1.bf16.msra.mxu0 0
  %3684 = vmatprep.subr.bf16.mxu0 0
  %3685 = vmatpush1.bf16.msra.mxu0 0
  %3686 = vmatprep.subr.bf16.mxu0 0
  %3687 = vmatpush1.bf16.msra.mxu0 0
  %3688 = vmatprep.subr.bf16.mxu0 0
  %3689 = vmatpush1.bf16.msra.mxu0 0
  %3690 = vmatprep.subr.bf16.mxu0 0
  %3691 = vmatpush1.bf16.msra.mxu0 0
  %3692 = vmatprep.subr.bf16.mxu0 0
  %3693 = vmatpush1.bf16.msra.mxu0 0
  %3694 = vmatprep.subr.bf16.mxu0 0
  %3695 = vmatpush1.bf16.msra.mxu0 0
  %3696 = vmatprep.subr.bf16.mxu0 0
  %3697 = vmatpush1.bf16.msra.mxu0 0
  %3698 = vmatprep.subr.bf16.mxu0 0
  %3699 = vmatpush1.bf16.msra.mxu0 0
  %3700 = vmatprep.mubr.bf16.mxu0 0
  %3701 = vmatmul.mubr.bf16.gmra.mrb[0].mxu0 %v3666
  %v3702 = vpop.f32.mrb[0].mxu0
  %v3703 = vadd.f32 0.0, %v3702
  %v3704 = vpop.f32.mrb[0].mxu0
  %v3705 = vpop.f32.mrb[0].mxu0
  %v3706 = vadd.f32 0.0, %v3705
  %v3707 = vpop.f32.mrb[0].mxu0
  %3708 = vdwg.mxu0
  %v3709 = vpack.c.bf16 %v3662, %v3659
  %v3710 = vpack.c.bf16 %v3706, %v3703
  %v3711 = vld [vmem:[%s9] sm:$0xff]
  %v3712 = vld [vmem:[%s9 + $0x8] sm:$0xff]
  %v3713 = vld [vmem:[%s9 + $0x10] sm:$0xff]
  %v3714 = vld [vmem:[%s9 + $0x18] sm:$0xff]
  %v3715 = vld [vmem:[%s9 + $0x20] sm:$0xff]
  %v3716 = vld [vmem:[%s9 + $0x28] sm:$0xff]
  %v3717 = vld [vmem:[%s9 + $0x30] sm:$0xff]
  %v3718 = vld [vmem:[%s9 + $0x38] sm:$0xff]
  %v3719 = vld [vmem:[%s10] sm:$0xf]
  %v3721 = vlaneseq
  %v3722 = vshrl.u32 %v3721, 7
  %v3723 = vsub.s32 0, %v3722
  %v3724 = vrot.slane %v3719, %v3723
  %v3725 = vlaneseq
  %v3726 = vshrl.u32 %v3725, 7
  %v3727 = vsub.s32 1, %v3726
  %v3728 = vrot.slane %v3719, %v3727
  %v3729 = vlaneseq
  %v3730 = vshrl.u32 %v3729, 7
  %v3731 = vsub.s32 2, %v3730
  %v3732 = vrot.slane %v3719, %v3731
  %v3733 = vlaneseq
  %v3734 = vshrl.u32 %v3733, 7
  %v3735 = vsub.s32 3, %v3734
  %v3736 = vrot.slane %v3719, %v3735
  %v3749 = vunpack.c.l.b16 %v3711
  %v3750 = vunpack.c.h.b16 %v3711
  %v3751 = vunpack.c.l.b16 %v3712
  %v3752 = vunpack.c.h.b16 %v3712
  %v3753 = vunpack.c.l.b16 %v3713
  %v3754 = vunpack.c.h.b16 %v3713
  %v3755 = vunpack.c.l.b16 %v3714
  %v3756 = vunpack.c.h.b16 %v3714
  %v3757 = vunpack.c.l.b16 %v3715
  %v3758 = vunpack.c.h.b16 %v3715
  %v3759 = vunpack.c.l.b16 %v3716
  %v3760 = vunpack.c.h.b16 %v3716
  %v3761 = vunpack.c.l.b16 %v3717
  %v3762 = vunpack.c.h.b16 %v3717
  %v3763 = vunpack.c.l.b16 %v3718
  %v3764 = vunpack.c.h.b16 %v3718
  %v3765 = vpack.c.b16 %v3753, %v3749
  %v3766 = vpack.c.b16 %v3754, %v3750
  %v3767 = vpack.c.b16 %v3755, %v3751
  %v3768 = vpack.c.b16 %v3756, %v3752
  %v3769 = vpack.c.b16 %v3761, %v3757
  %v3770 = vpack.c.b16 %v3762, %v3758
  %v3771 = vpack.c.b16 %v3763, %v3759
  %v3772 = vpack.c.b16 %v3764, %v3760
  %v3782 = vsel %vm66, %v3709, 0
  %v3785 = vsel %vm66, %v3710, 0
  %3787 = vmatprep.subr.bf16.mxu0 %v3766
  %3788 = vmatpush1.bf16.msra.mxu0 %v3765
  %3789 = vmatprep.subr.bf16.mxu0 %v3770
  %3790 = vmatpush1.bf16.msra.mxu0 %v3769
  %3791 = vmatprep.subr.bf16.mxu0 0
  %3792 = vmatpush1.bf16.msra.mxu0 0
  %3793 = vmatprep.subr.bf16.mxu0 0
  %3794 = vmatpush1.bf16.msra.mxu0 0
  %3795 = vmatprep.subr.bf16.mxu0 0
  %3796 = vmatpush1.bf16.msra.mxu0 0
  %3797 = vmatprep.subr.bf16.mxu0 0
  %3798 = vmatpush1.bf16.msra.mxu0 0
  %3799 = vmatprep.subr.bf16.mxu0 0
  %3800 = vmatpush1.bf16.msra.mxu0 0
  %3801 = vmatprep.subr.bf16.mxu0 0
  %3802 = vmatpush1.bf16.msra.mxu0 0
  %3803 = vmatprep.subr.bf16.mxu0 0
  %3804 = vmatpush1.bf16.msra.mxu0 0
  %3805 = vmatprep.subr.bf16.mxu0 0
  %3806 = vmatpush1.bf16.msra.mxu0 0
  %3807 = vmatprep.subr.bf16.mxu0 0
  %3808 = vmatpush1.bf16.msra.mxu0 0
  %3809 = vmatprep.subr.bf16.mxu0 0
  %3810 = vmatpush1.bf16.msra.mxu0 0
  %3811 = vmatprep.subr.bf16.mxu0 0
  %3812 = vmatpush1.bf16.msra.mxu0 0
  %3813 = vmatprep.subr.bf16.mxu0 0
  %3814 = vmatpush1.bf16.msra.mxu0 0
  %3815 = vmatprep.subr.bf16.mxu0 0
  %3816 = vmatpush1.bf16.msra.mxu0 0
  %3817 = vmatprep.subr.bf16.mxu0 0
  %3818 = vmatpush1.bf16.msra.mxu0 0
  %3819 = vmatprep.mubr.bf16.mxu0 0
  %3820 = vmatmul.mubr.bf16.gmra.mrb[0].mxu0 %v3782
  %v3821 = vpop.f32.mrb[0].mxu0
  %v3822 = vadd.f32 %v3724, %v3821
  %v3823 = vpop.f32.mrb[0].mxu0
  %v3824 = vadd.f32 %v3728, %v3823
  %v3825 = vpop.f32.mrb[0].mxu0
  %v3826 = vadd.f32 %v3724, %v3825
  %v3827 = vpop.f32.mrb[0].mxu0
  %v3828 = vadd.f32 %v3728, %v3827
  %3829 = vmatprep.mubr.bf16.mxu0 0
  %3830 = vmatmul.mubr.bf16.gmra.mrb[0].mxu0 %v3785
  %v3831 = vpop.f32.mrb[0].mxu0
  %v3832 = vadd.f32 %v3724, %v3831
  %v3833 = vpop.f32.mrb[0].mxu0
  %v3834 = vadd.f32 %v3728, %v3833
  %v3835 = vpop.f32.mrb[0].mxu0
  %v3836 = vadd.f32 %v3724, %v3835
  %v3837 = vpop.f32.mrb[0].mxu0
  %v3838 = vadd.f32 %v3728, %v3837
  %3839 = vdwg.mxu0
  %3840 = vmatprep.subr.bf16.mxu0 %v3768
  %3841 = vmatpush1.bf16.msra.mxu0 %v3767
  %3842 = vmatprep.subr.bf16.mxu0 %v3772
  %3843 = vmatpush1.bf16.msra.mxu0 %v3771
  %3844 = vmatprep.subr.bf16.mxu0 0
  %3845 = vmatpush1.bf16.msra.mxu0 0
  %3846 = vmatprep.subr.bf16.mxu0 0
  %3847 = vmatpush1.bf16.msra.mxu0 0
  %3848 = vmatprep.subr.bf16.mxu0 0
  %3849 = vmatpush1.bf16.msra.mxu0 0
  %3850 = vmatprep.subr.bf16.mxu0 0
  %3851 = vmatpush1.bf16.msra.mxu0 0
  %3852 = vmatprep.subr.bf16.mxu0 0
  %3853 = vmatpush1.bf16.msra.mxu0 0
  %3854 = vmatprep.subr.bf16.mxu0 0
  %3855 = vmatpush1.bf16.msra.mxu0 0
  %3856 = vmatprep.subr.bf16.mxu0 0
  %3857 = vmatpush1.bf16.msra.mxu0 0
  %3858 = vmatprep.subr.bf16.mxu0 0
  %3859 = vmatpush1.bf16.msra.mxu0 0
  %3860 = vmatprep.subr.bf16.mxu0 0
  %3861 = vmatpush1.bf16.msra.mxu0 0
  %3862 = vmatprep.subr.bf16.mxu0 0
  %3863 = vmatpush1.bf16.msra.mxu0 0
  %3864 = vmatprep.subr.bf16.mxu0 0
  %3865 = vmatpush1.bf16.msra.mxu0 0
  %3866 = vmatprep.subr.bf16.mxu0 0
  %3867 = vmatpush1.bf16.msra.mxu0 0
  %3868 = vmatprep.subr.bf16.mxu0 0
  %3869 = vmatpush1.bf16.msra.mxu0 0
  %3870 = vmatprep.subr.bf16.mxu0 0
  %3871 = vmatpush1.bf16.msra.mxu0 0
  %3872 = vmatprep.mubr.bf16.mxu0 0
  %3873 = vmatmul.mubr.bf16.gmra.mrb[0].mxu0 %v3782
  %v3874 = vpop.f32.mrb[0].mxu0
  %v3875 = vadd.f32 %v3732, %v3874
  %v3876 = vpop.f32.mrb[0].mxu0
  %v3877 = vadd.f32 %v3736, %v3876
  %v3878 = vpop.f32.mrb[0].mxu0
  %v3879 = vadd.f32 %v3732, %v3878
  %v3880 = vpop.f32.mrb[0].mxu0
  %v3881 = vadd.f32 %v3736, %v3880
  %3882 = vmatprep.mubr.bf16.mxu0 0
  %3883 = vmatmul.mubr.bf16.gmra.mrb[0].mxu0 %v3785
  %v3884 = vpop.f32.mrb[0].mxu0
  %v3885 = vadd.f32 %v3732, %v3884
  %v3886 = vpop.f32.mrb[0].mxu0
  %v3887 = vadd.f32 %v3736, %v3886
  %v3888 = vpop.f32.mrb[0].mxu0
  %v3889 = vadd.f32 %v3732, %v3888
  %v3890 = vpop.f32.mrb[0].mxu0
  %v3891 = vadd.f32 %v3736, %v3890
  %3892 = vdwg.mxu0
  %v3893 = vmul.f32 %v3822, 0.5
  %v3894 = vmul.f32 %v3824, 0.5
  %v3895 = vmul.f32 %v3875, 0.5
  %v3896 = vmul.f32 %v3877, 0.5
  %v3897 = vmul.f32 %v3826, 0.5
  %v3898 = vmul.f32 %v3828, 0.5
  %v3899 = vmul.f32 %v3879, 0.5
  %v3900 = vmul.f32 %v3881, 0.5
  %v3901 = vmul.f32 %v3832, 0.5
  %v3902 = vmul.f32 %v3834, 0.5
  %v3903 = vmul.f32 %v3885, 0.5
  %v3904 = vmul.f32 %v3887, 0.5
  %v3905 = vmul.f32 %v3836, 0.5
  %v3906 = vmul.f32 %v3838, 0.5
  %v3907 = vmul.f32 %v3889, 0.5
  %v3908 = vmul.f32 %v3891, 0.5
  %v3909 = vmul.f32 %v3822, %v3822
  %v3910 = vmul.f32 %v3824, %v3824
  %v3911 = vmul.f32 %v3875, %v3875
  %v3912 = vmul.f32 %v3877, %v3877
  %v3913 = vmul.f32 %v3826, %v3826
  %v3914 = vmul.f32 %v3828, %v3828
  %v3915 = vmul.f32 %v3879, %v3879
  %v3916 = vmul.f32 %v3881, %v3881
  %v3917 = vmul.f32 %v3832, %v3832
  %v3918 = vmul.f32 %v3834, %v3834
  %v3919 = vmul.f32 %v3885, %v3885
  %v3920 = vmul.f32 %v3887, %v3887
  %v3921 = vmul.f32 %v3836, %v3836
  %v3922 = vmul.f32 %v3838, %v3838
  %v3923 = vmul.f32 %v3889, %v3889
  %v3924 = vmul.f32 %v3891, %v3891
  %v3925 = vmul.f32 %v3909, %v3822
  %v3926 = vmul.f32 %v3910, %v3824
  %v3927 = vmul.f32 %v3911, %v3875
  %v3928 = vmul.f32 %v3912, %v3877
  %v3929 = vmul.f32 %v3913, %v3826
  %v3930 = vmul.f32 %v3914, %v3828
  %v3931 = vmul.f32 %v3915, %v3879
  %v3932 = vmul.f32 %v3916, %v3881
  %v3933 = vmul.f32 %v3917, %v3832
  %v3934 = vmul.f32 %v3918, %v3834
  %v3935 = vmul.f32 %v3919, %v3885
  %v3936 = vmul.f32 %v3920, %v3887
  %v3937 = vmul.f32 %v3921, %v3836
  %v3938 = vmul.f32 %v3922, %v3838
  %v3939 = vmul.f32 %v3923, %v3889
  %v3940 = vmul.f32 %v3924, %v3891
  %v3941 = vmul.f32 %v3925, 0.044715
  %v3942 = vmul.f32 %v3926, 0.044715
  %v3943 = vmul.f32 %v3927, 0.044715
  %v3944 = vmul.f32 %v3928, 0.044715
  %v3945 = vmul.f32 %v3929, 0.044715
  %v3946 = vmul.f32 %v3930, 0.044715
  %v3947 = vmul.f32 %v3931, 0.044715
  %v3948 = vmul.f32 %v3932, 0.044715
  %v3949 = vmul.f32 %v3933, 0.044715
  %v3950 = vmul.f32 %v3934, 0.044715
  %v3951 = vmul.f32 %v3935, 0.044715
  %v3952 = vmul.f32 %v3936, 0.044715
  %v3953 = vmul.f32 %v3937, 0.044715
  %v3954 = vmul.f32 %v3938, 0.044715
  %v3955 = vmul.f32 %v3939, 0.044715
  %v3956 = vmul.f32 %v3940, 0.044715
  %v3957 = vadd.f32 %v3822, %v3941
  %v3958 = vadd.f32 %v3824, %v3942
  %v3959 = vadd.f32 %v3875, %v3943
  %v3960 = vadd.f32 %v3877, %v3944
  %v3961 = vadd.f32 %v3826, %v3945
  %v3962 = vadd.f32 %v3828, %v3946
  %v3963 = vadd.f32 %v3879, %v3947
  %v3964 = vadd.f32 %v3881, %v3948
  %v3965 = vadd.f32 %v3832, %v3949
  %v3966 = vadd.f32 %v3834, %v3950
  %v3967 = vadd.f32 %v3885, %v3951
  %v3968 = vadd.f32 %v3887, %v3952
  %v3969 = vadd.f32 %v3836, %v3953
  %v3970 = vadd.f32 %v3838, %v3954
  %v3971 = vadd.f32 %v3889, %v3955
  %v3972 = vadd.f32 %v3891, %v3956
  %v3973 = vmul.f32 %v3957, 0.7978846
  %v3974 = vmul.f32 %v3958, 0.7978846
  %v3975 = vmul.f32 %v3959, 0.7978846
  %v3976 = vmul.f32 %v3960, 0.7978846
  %v3977 = vmul.f32 %v3961, 0.7978846
  %v3978 = vmul.f32 %v3962, 0.7978846
  %v3979 = vmul.f32 %v3963, 0.7978846
  %v3980 = vmul.f32 %v3964, 0.7978846
  %v3981 = vmul.f32 %v3965, 0.7978846
  %v3982 = vmul.f32 %v3966, 0.7978846
  %v3983 = vmul.f32 %v3967, 0.7978846
  %v3984 = vmul.f32 %v3968, 0.7978846
  %v3985 = vmul.f32 %v3969, 0.7978846
  %v3986 = vmul.f32 %v3970, 0.7978846
  %v3987 = vmul.f32 %v3971, 0.7978846
  %v3988 = vmul.f32 %v3972, 0.7978846
  %v3989 = vtanh.pop %v3973
  %v3990 = vtanh.pop %v3974
  %v3991 = vtanh.pop %v3975
  %v3992 = vtanh.pop %v3976
  %v3993 = vtanh.pop %v3977
  %v3994 = vtanh.pop %v3978
  %v3995 = vtanh.pop %v3979
  %v3996 = vtanh.pop %v3980
  %v3997 = vtanh.pop %v3981
  %v3998 = vtanh.pop %v3982
  %v3999 = vtanh.pop %v3983
  %v4000 = vtanh.pop %v3984
  %v4001 = vtanh.pop %v3985
  %v4002 = vtanh.pop %v3986
  %v4003 = vtanh.pop %v3987
  %v4004 = vtanh.pop %v3988
  %v4005 = vadd.f32 %v3989, 1.0
  %v4006 = vadd.f32 %v3990, 1.0
  %v4007 = vadd.f32 %v3991, 1.0
  %v4008 = vadd.f32 %v3992, 1.0
  %v4009 = vadd.f32 %v3993, 1.0
  %v4010 = vadd.f32 %v3994, 1.0
  %v4011 = vadd.f32 %v3995, 1.0
  %v4012 = vadd.f32 %v3996, 1.0
  %v4013 = vadd.f32 %v3997, 1.0
  %v4014 = vadd.f32 %v3998, 1.0
  %v4015 = vadd.f32 %v3999, 1.0
  %v4016 = vadd.f32 %v4000, 1.0
  %v4017 = vadd.f32 %v4001, 1.0
  %v4018 = vadd.f32 %v4002, 1.0
  %v4019 = vadd.f32 %v4003, 1.0
  %v4020 = vadd.f32 %v4004, 1.0
  %v4021 = vmul.f32 %v3893, %v4005
  %v4022 = vmul.f32 %v3894, %v4006
  %v4023 = vmul.f32 %v3895, %v4007
  %v4024 = vmul.f32 %v3896, %v4008
  %v4025 = vmul.f32 %v3897, %v4009
  %v4026 = vmul.f32 %v3898, %v4010
  %v4027 = vmul.f32 %v3899, %v4011
  %v4028 = vmul.f32 %v3900, %v4012
  %v4029 = vmul.f32 %v3901, %v4013
  %v4030 = vmul.f32 %v3902, %v4014
  %v4031 = vmul.f32 %v3903, %v4015
  %v4032 = vmul.f32 %v3904, %v4016
  %v4033 = vmul.f32 %v3905, %v4017
  %v4034 = vmul.f32 %v3906, %v4018
  %v4035 = vmul.f32 %v3907, %v4019
  %v4036 = vmul.f32 %v3908, %v4020
  %v4037 = vld [vmem:[%s11] sm:$0xff]
  %v4038 = vld [vmem:[%s11 + $0x8] sm:$0xff]
  %v4039 = vld [vmem:[%s11 + $0x10] sm:$0xff]
  %v4040 = vld [vmem:[%s11 + $0x18] sm:$0xff]
  %v4041 = vld [vmem:[%s11 + $0x20] sm:$0xff]
  %v4042 = vld [vmem:[%s11 + $0x28] sm:$0xff]
  %v4043 = vld [vmem:[%s11 + $0x30] sm:$0xff]
  %v4044 = vld [vmem:[%s11 + $0x38] sm:$0xff]
  %v4045 = vld [vmem:[%s11 + $0x40] sm:$0xff]
  %v4046 = vld [vmem:[%s11 + $0x48] sm:$0xff]
  %v4047 = vld [vmem:[%s11 + $0x50] sm:$0xff]
  %v4048 = vld [vmem:[%s11 + $0x58] sm:$0xff]
  %v4049 = vld [vmem:[%s11 + $0x60] sm:$0xff]
  %v4050 = vld [vmem:[%s11 + $0x68] sm:$0xff]
  %v4051 = vld [vmem:[%s11 + $0x70] sm:$0xff]
  %v4052 = vld [vmem:[%s11 + $0x78] sm:$0xff]
  %v4053 = vmul.f32 %v4021, %v4037
  %v4054 = vmul.f32 %v4022, %v4038
  %v4055 = vmul.f32 %v4023, %v4039
  %v4056 = vmul.f32 %v4024, %v4040
  %v4057 = vmul.f32 %v4025, %v4041
  %v4058 = vmul.f32 %v4026, %v4042
  %v4059 = vmul.f32 %v4027, %v4043
  %v4060 = vmul.f32 %v4028, %v4044
  %v4061 = vmul.f32 %v4029, %v4045
  %v4062 = vmul.f32 %v4030, %v4046
  %v4063 = vmul.f32 %v4031, %v4047
  %v4064 = vmul.f32 %v4032, %v4048
  %v4065 = vmul.f32 %v4033, %v4049
  %v4066 = vmul.f32 %v4034, %v4050
  %v4067 = vmul.f32 %v4035, %v4051
  %v4068 = vmul.f32 %v4036, %v4052
  %v4069 = vpack.c.bf16 %v4057, %v4053
  %v4070 = vpack.c.bf16 %v4058, %v4054
  %v4071 = vpack.c.bf16 %v4059, %v4055
  %v4072 = vpack.c.bf16 %v4060, %v4056
  %v4073 = vpack.c.bf16 %v4065, %v4061
  %v4074 = vpack.c.bf16 %v4066, %v4062
  %v4075 = vpack.c.bf16 %v4067, %v4063
  %v4076 = vpack.c.bf16 %v4068, %v4064
  %v4077 = vld [vmem:[%s12] sm:$0xf]
  %v4078 = vld [vmem:[%s12 + $0x4] sm:$0xf]
  %v4079 = vld [vmem:[%s12 + $0x8] sm:$0xf]
  %v4080 = vld [vmem:[%s12 + $0xc] sm:$0xf]
  %v4081 = vld [vmem:[%s12 + $0x10] sm:$0xf]
  %v4082 = vld [vmem:[%s12 + $0x14] sm:$0xf]
  %v4083 = vld [vmem:[%s12 + $0x18] sm:$0xf]
  %v4084 = vld [vmem:[%s12 + $0x1c] sm:$0xf]
  %v4085 = vld [vmem:[%s12 + $0x20] sm:$0xf]
  %v4086 = vld [vmem:[%s12 + $0x24] sm:$0xf]
  %v4087 = vld [vmem:[%s12 + $0x28] sm:$0xf]
  %v4088 = vld [vmem:[%s12 + $0x2c] sm:$0xf]
  %v4089 = vld [vmem:[%s12 + $0x30] sm:$0xf]
  %v4090 = vld [vmem:[%s12 + $0x34] sm:$0xf]
  %v4091 = vld [vmem:[%s12 + $0x38] sm:$0xf]
  %v4092 = vld [vmem:[%s12 + $0x3c] sm:$0xf]
  %v4093 = vld [vmem:[%s12 + $0x40] sm:$0xf]
  %v4094 = vld [vmem:[%s12 + $0x44] sm:$0xf]
  %v4095 = vld [vmem:[%s12 + $0x48] sm:$0xf]
  %v4096 = vld [vmem:[%s12 + $0x4c] sm:$0xf]
  %v4097 = vld [vmem:[%s12 + $0x50] sm:$0xf]
  %v4098 = vld [vmem:[%s12 + $0x54] sm:$0xf]
  %v4099 = vld [vmem:[%s12 + $0x58] sm:$0xf]
  %v4100 = vld [vmem:[%s12 + $0x5c] sm:$0xf]
  %v4101 = vld [vmem:[%s12 + $0x60] sm:$0xf]
  %v4102 = vld [vmem:[%s12 + $0x64] sm:$0xf]
  %v4103 = vld [vmem:[%s12 + $0x68] sm:$0xf]
  %v4104 = vld [vmem:[%s12 + $0x6c] sm:$0xf]
  %v4105 = vld [vmem:[%s12 + $0x70] sm:$0xf]
  %v4106 = vld [vmem:[%s12 + $0x74] sm:$0xf]
  %v4107 = vld [vmem:[%s12 + $0x78] sm:$0xf]
  %v4108 = vld [vmem:[%s12 + $0x7c] sm:$0xf]
  %v4109 = vld [vmem:[%s12 + $0x80] sm:$0xf]
  %v4110 = vld [vmem:[%s12 + $0x84] sm:$0xf]
  %v4111 = vld [vmem:[%s12 + $0x88] sm:$0xf]
  %v4112 = vld [vmem:[%s12 + $0x8c] sm:$0xf]
  %v4113 = vld [vmem:[%s12 + $0x90] sm:$0xf]
  %v4114 = vld [vmem:[%s12 + $0x94] sm:$0xf]
  %v4115 = vld [vmem:[%s12 + $0x98] sm:$0xf]
  %v4116 = vld [vmem:[%s12 + $0x9c] sm:$0xf]
  %v4117 = vld [vmem:[%s12 + $0xa0] sm:$0xf]
  %v4118 = vld [vmem:[%s12 + $0xa4] sm:$0xf]
  %v4119 = vld [vmem:[%s12 + $0xa8] sm:$0xf]
  %v4120 = vld [vmem:[%s12 + $0xac] sm:$0xf]
  %v4121 = vld [vmem:[%s12 + $0xb0] sm:$0xf]
  %v4122 = vld [vmem:[%s12 + $0xb4] sm:$0xf]
  %v4123 = vld [vmem:[%s12 + $0xb8] sm:$0xf]
  %v4124 = vld [vmem:[%s12 + $0xbc] sm:$0xf]
  %v4125 = vld [vmem:[%s12 + $0xc0] sm:$0xf]
  %v4126 = vld [vmem:[%s12 + $0xc4] sm:$0xf]
  %v4127 = vld [vmem:[%s12 + $0xc8] sm:$0xf]
  %v4128 = vld [vmem:[%s12 + $0xcc] sm:$0xf]
  %v4129 = vld [vmem:[%s12 + $0xd0] sm:$0xf]
  %v4130 = vld [vmem:[%s12 + $0xd4] sm:$0xf]
  %v4131 = vld [vmem:[%s12 + $0xd8] sm:$0xf]
  %v4132 = vld [vmem:[%s12 + $0xdc] sm:$0xf]
  %v4133 = vld [vmem:[%s12 + $0xe0] sm:$0xf]
  %v4134 = vld [vmem:[%s12 + $0xe4] sm:$0xf]
  %v4135 = vld [vmem:[%s12 + $0xe8] sm:$0xf]
  %v4136 = vld [vmem:[%s12 + $0xec] sm:$0xf]
  %v4137 = vld [vmem:[%s12 + $0xf0] sm:$0xf]
  %v4138 = vld [vmem:[%s12 + $0xf4] sm:$0xf]
  %v4139 = vld [vmem:[%s12 + $0xf8] sm:$0xf]
  %v4140 = vld [vmem:[%s12 + $0xfc] sm:$0xf]
  %v4141 = vld [vmem:[%s13] sm:$0xff]
  %v4142 = vld [vmem:[%s13 + $0x8] sm:$0xff]
  %v4143 = vld [vmem:[%s13 + $0x10] sm:$0xff]
  %v4144 = vld [vmem:[%s13 + $0x18] sm:$0xff]
  %v4209 = vunpack.c.l.b16 %v4077
  %v4210 = vunpack.c.l.b16 %v4078
  %v4211 = vunpack.c.l.b16 %v4079
  %v4212 = vunpack.c.l.b16 %v4080
  %v4213 = vunpack.c.l.b16 %v4081
  %v4214 = vunpack.c.l.b16 %v4082
  %v4215 = vunpack.c.l.b16 %v4083
  %v4216 = vunpack.c.l.b16 %v4084
  %v4217 = vunpack.c.l.b16 %v4085
  %v4218 = vunpack.c.l.b16 %v4086
  %v4219 = vunpack.c.l.b16 %v4087
  %v4220 = vunpack.c.l.b16 %v4088
  %v4221 = vunpack.c.l.b16 %v4089
  %v4222 = vunpack.c.l.b16 %v4090
  %v4223 = vunpack.c.l.b16 %v4091
  %v4224 = vunpack.c.l.b16 %v4092
  %v4225 = vunpack.c.l.b16 %v4093
  %v4226 = vunpack.c.l.b16 %v4094
  %v4227 = vunpack.c.l.b16 %v4095
  %v4228 = vunpack.c.l.b16 %v4096
  %v4229 = vunpack.c.l.b16 %v4097
  %v4230 = vunpack.c.l.b16 %v4098
  %v4231 = vunpack.c.l.b16 %v4099
  %v4232 = vunpack.c.l.b16 %v4100
  %v4233 = vunpack.c.l.b16 %v4101
  %v4234 = vunpack.c.l.b16 %v4102
  %v4235 = vunpack.c.l.b16 %v4103
  %v4236 = vunpack.c.l.b16 %v4104
  %v4237 = vunpack.c.l.b16 %v4105
  %v4238 = vunpack.c.l.b16 %v4106
  %v4239 = vunpack.c.l.b16 %v4107
  %v4240 = vunpack.c.l.b16 %v4108
  %v4241 = vunpack.c.l.b16 %v4109
  %v4242 = vunpack.c.l.b16 %v4110
  %v4243 = vunpack.c.l.b16 %v4111
  %v4244 = vunpack.c.l.b16 %v4112
  %v4245 = vunpack.c.l.b16 %v4113
  %v4246 = vunpack.c.l.b16 %v4114
  %v4247 = vunpack.c.l.b16 %v4115
  %v4248 = vunpack.c.l.b16 %v4116
  %v4249 = vunpack.c.l.b16 %v4117
  %v4250 = vunpack.c.l.b16 %v4118
  %v4251 = vunpack.c.l.b16 %v4119
  %v4252 = vunpack.c.l.b16 %v4120
  %v4253 = vunpack.c.l.b16 %v4121
  %v4254 = vunpack.c.l.b16 %v4122
  %v4255 = vunpack.c.l.b16 %v4123
  %v4256 = vunpack.c.l.b16 %v4124
  %v4257 = vunpack.c.l.b16 %v4125
  %v4258 = vunpack.c.l.b16 %v4126
  %v4259 = vunpack.c.l.b16 %v4127
  %v4260 = vunpack.c.l.b16 %v4128
  %v4261 = vunpack.c.l.b16 %v4129
  %v4262 = vunpack.c.l.b16 %v4130
  %v4263 = vunpack.c.l.b16 %v4131
  %v4264 = vunpack.c.l.b16 %v4132
  %v4265 = vunpack.c.l.b16 %v4133
  %v4266 = vunpack.c.l.b16 %v4134
  %v4267 = vunpack.c.l.b16 %v4135
  %v4268 = vunpack.c.l.b16 %v4136
  %v4269 = vunpack.c.l.b16 %v4137
  %v4270 = vunpack.c.l.b16 %v4138
  %v4271 = vunpack.c.l.b16 %v4139
  %v4272 = vunpack.c.l.b16 %v4140
  %v4273 = vpack.c.b16 %v4210, %v4209
  %v4274 = vpack.c.b16 %v4212, %v4211
  %v4275 = vpack.c.b16 %v4214, %v4213
  %v4276 = vpack.c.b16 %v4216, %v4215
  %v4277 = vpack.c.b16 %v4218, %v4217
  %v4278 = vpack.c.b16 %v4220, %v4219
  %v4279 = vpack.c.b16 %v4222, %v4221
  %v4280 = vpack.c.b16 %v4224, %v4223
  %v4281 = vpack.c.b16 %v4226, %v4225
  %v4282 = vpack.c.b16 %v4228, %v4227
  %v4283 = vpack.c.b16 %v4230, %v4229
  %v4284 = vpack.c.b16 %v4232, %v4231
  %v4285 = vpack.c.b16 %v4234, %v4233
  %v4286 = vpack.c.b16 %v4236, %v4235
  %v4287 = vpack.c.b16 %v4238, %v4237
  %v4288 = vpack.c.b16 %v4240, %v4239
  %v4289 = vpack.c.b16 %v4242, %v4241
  %v4290 = vpack.c.b16 %v4244, %v4243
  %v4291 = vpack.c.b16 %v4246, %v4245
  %v4292 = vpack.c.b16 %v4248, %v4247
  %v4293 = vpack.c.b16 %v4250, %v4249
  %v4294 = vpack.c.b16 %v4252, %v4251
  %v4295 = vpack.c.b16 %v4254, %v4253
  %v4296 = vpack.c.b16 %v4256, %v4255
  %v4297 = vpack.c.b16 %v4258, %v4257
  %v4298 = vpack.c.b16 %v4260, %v4259
  %v4299 = vpack.c.b16 %v4262, %v4261
  %v4300 = vpack.c.b16 %v4264, %v4263
  %v4301 = vpack.c.b16 %v4266, %v4265
  %v4302 = vpack.c.b16 %v4268, %v4267
  %v4303 = vpack.c.b16 %v4270, %v4269
  %v4304 = vpack.c.b16 %v4272, %v4271
  %4337 = vmatprep.subr.bf16.mxu0 0
  %4338 = vmatpush1.bf16.msra.mxu0 %v4273
  %4339 = vmatprep.subr.bf16.mxu0 0
  %4340 = vmatpush1.bf16.msra.mxu0 %v4274
  %4341 = vmatprep.subr.bf16.mxu0 0
  %4342 = vmatpush1.bf16.msra.mxu0 %v4275
  %4343 = vmatprep.subr.bf16.mxu0 0
  %4344 = vmatpush1.bf16.msra.mxu0 %v4276
  %4345 = vmatprep.subr.bf16.mxu0 0
  %4346 = vmatpush1.bf16.msra.mxu0 %v4277
  %4347 = vmatprep.subr.bf16.mxu0 0
  %4348 = vmatpush1.bf16.msra.mxu0 %v4278
  %4349 = vmatprep.subr.bf16.mxu0 0
  %4350 = vmatpush1.bf16.msra.mxu0 %v4279
  %4351 = vmatprep.subr.bf16.mxu0 0
  %4352 = vmatpush1.bf16.msra.mxu0 %v4280
  %4353 = vmatprep.subr.bf16.mxu0 0
  %4354 = vmatpush1.bf16.msra.mxu0 %v4281
  %4355 = vmatprep.subr.bf16.mxu0 0
  %4356 = vmatpush1.bf16.msra.mxu0 %v4282
  %4357 = vmatprep.subr.bf16.mxu0 0
  %4358 = vmatpush1.bf16.msra.mxu0 %v4283
  %4359 = vmatprep.subr.bf16.mxu0 0
  %4360 = vmatpush1.bf16.msra.mxu0 %v4284
  %4361 = vmatprep.subr.bf16.mxu0 0
  %4362 = vmatpush1.bf16.msra.mxu0 %v4285
  %4363 = vmatprep.subr.bf16.mxu0 0
  %4364 = vmatpush1.bf16.msra.mxu0 %v4286
  %4365 = vmatprep.subr.bf16.mxu0 0
  %4366 = vmatpush1.bf16.msra.mxu0 %v4287
  %4367 = vmatprep.subr.bf16.mxu0 0
  %4368 = vmatpush1.bf16.msra.mxu0 %v4288
  %4369 = vmatprep.mubr.bf16.mxu0 %v4070
  %4370 = vmatmul.mubr.bf16.gmra.mrb[0].mxu0 %v4069
  %v4371 = vpop.f32.mrb[0].mxu0
  %v4372 = vadd.f32 %v4141, %v4371
  %v4373 = vpop.f32.mrb[0].mxu0
  %v4374 = vpop.f32.mrb[0].mxu0
  %v4375 = vadd.f32 %v4142, %v4374
  %v4376 = vpop.f32.mrb[0].mxu0
  %4377 = vmatprep.mubr.bf16.mxu0 %v4074
  %4378 = vmatmul.mubr.bf16.gmra.mrb[0].mxu0 %v4073
  %v4379 = vpop.f32.mrb[0].mxu0
  %v4380 = vadd.f32 %v4143, %v4379
  %v4381 = vpop.f32.mrb[0].mxu0
  %v4382 = vpop.f32.mrb[0].mxu0
  %v4383 = vadd.f32 %v4144, %v4382
  %v4384 = vpop.f32.mrb[0].mxu0
  %4385 = vdwg.mxu0
  %4386 = vmatprep.subr.bf16.mxu0 0
  %4387 = vmatpush1.bf16.msra.mxu0 %v4289
  %4388 = vmatprep.subr.bf16.mxu0 0
  %4389 = vmatpush1.bf16.msra.mxu0 %v4290
  %4390 = vmatprep.subr.bf16.mxu0 0
  %4391 = vmatpush1.bf16.msra.mxu0 %v4291
  %4392 = vmatprep.subr.bf16.mxu0 0
  %4393 = vmatpush1.bf16.msra.mxu0 %v4292
  %4394 = vmatprep.subr.bf16.mxu0 0
  %4395 = vmatpush1.bf16.msra.mxu0 %v4293
  %4396 = vmatprep.subr.bf16.mxu0 0
  %4397 = vmatpush1.bf16.msra.mxu0 %v4294
  %4398 = vmatprep.subr.bf16.mxu0 0
  %4399 = vmatpush1.bf16.msra.mxu0 %v4295
  %4400 = vmatprep.subr.bf16.mxu0 0
  %4401 = vmatpush1.bf16.msra.mxu0 %v4296
  %4402 = vmatprep.subr.bf16.mxu0 0
  %4403 = vmatpush1.bf16.msra.mxu0 %v4297
  %4404 = vmatprep.subr.bf16.mxu0 0
  %4405 = vmatpush1.bf16.msra.mxu0 %v4298
  %4406 = vmatprep.subr.bf16.mxu0 0
  %4407 = vmatpush1.bf16.msra.mxu0 %v4299
  %4408 = vmatprep.subr.bf16.mxu0 0
  %4409 = vmatpush1.bf16.msra.mxu0 %v4300
  %4410 = vmatprep.subr.bf16.mxu0 0
  %4411 = vmatpush1.bf16.msra.mxu0 %v4301
  %4412 = vmatprep.subr.bf16.mxu0 0
  %4413 = vmatpush1.bf16.msra.mxu0 %v4302
  %4414 = vmatprep.subr.bf16.mxu0 0
  %4415 = vmatpush1.bf16.msra.mxu0 %v4303
  %4416 = vmatprep.subr.bf16.mxu0 0
  %4417 = vmatpush1.bf16.msra.mxu0 %v4304
  %4418 = vmatprep.mubr.bf16.mxu0 %v4072
  %4419 = vmatmul.mubr.bf16.gmra.mrb[0].mxu0 %v4071
  %v4420 = vpop.f32.mrb[0].mxu0
  %v4421 = vadd.f32 %v4372, %v4420
  %v4422 = vpop.f32.mrb[0].mxu0
  %v4423 = vpop.f32.mrb[0].mxu0
  %v4424 = vadd.f32 %v4375, %v4423
  %v4425 = vpop.f32.mrb[0].mxu0
  %4426 = vmatprep.mubr.bf16.mxu0 %v4076
  %4427 = vmatmul.mubr.bf16.gmra.mrb[0].mxu0 %v4075
  %v4428 = vpop.f32.mrb[0].mxu0
  %v4429 = vadd.f32 %v4380, %v4428
  %v4430 = vpop.f32.mrb[0].mxu0
  %v4431 = vpop.f32.mrb[0].mxu0
  %v4432 = vadd.f32 %v4383, %v4431
  %v4433 = vpop.f32.mrb[0].mxu0
  %4434 = vdwg.mxu0
  %v4435 = vpack.c.bf16 %v4424, %v4421
  %v4436 = vpack.c.bf16 %v4432, %v4429
  %v4437 = vpack.c.bf16 %v3604, %v3603
  %v4438 = vpack.c.bf16 %v3606, %v3605
  %v4439 = vpack.c.bf16 %v3608, %v3607
  %v4440 = vpack.c.bf16 %v3610, %v3609
  %v4441 = vpack.c.bf16 %v3612, %v3611
  %v4442 = vpack.c.bf16 %v3614, %v3613
  %v4443 = vpack.c.bf16 %v3616, %v3615
  %v4444 = vpack.c.bf16 %v3618, %v3617
  %v4446 = vsel %vm3442, %v4437, 0
  %v4449 = vsel %vm3442, %v4438, 0
  %v4452 = vsel %vm3442, %v4439, 0
  %v4455 = vsel %vm3442, %v4440, 0
  %4457 = vmatprep.subr.bf16.mxu0 0
  %4458 = vmatpush1.bf16.msra.mxu0 %v4435
  %4459 = vmatprep.subr.bf16.mxu0 0
  %4460 = vmatpush1.bf16.msra.mxu0 0
  %4461 = vmatprep.subr.bf16.mxu0 0
  %4462 = vmatpush1.bf16.msra.mxu0 0
  %4463 = vmatprep.subr.bf16.mxu0 0
  %4464 = vmatpush1.bf16.msra.mxu0 0
  %4465 = vmatprep.subr.bf16.mxu0 0
  %4466 = vmatpush1.bf16.msra.mxu0 0
  %4467 = vmatprep.subr.bf16.mxu0 0
  %4468 = vmatpush1.bf16.msra.mxu0 0
  %4469 = vmatprep.subr.bf16.mxu0 0
  %4470 = vmatpush1.bf16.msra.mxu0 0
  %4471 = vmatprep.subr.bf16.mxu0 0
  %4472 = vmatpush1.bf16.msra.mxu0 0
  %4473 = vmatprep.subr.bf16.mxu0 0
  %4474 = vmatpush1.bf16.msra.mxu0 0
  %4475 = vmatprep.subr.bf16.mxu0 0
  %4476 = vmatpush1.bf16.msra.mxu0 0
  %4477 = vmatprep.subr.bf16.mxu0 0
  %4478 = vmatpush1.bf16.msra.mxu0 0
  %4479 = vmatprep.subr.bf16.mxu0 0
  %4480 = vmatpush1.bf16.msra.mxu0 0
  %4481 = vmatprep.subr.bf16.mxu0 0
  %4482 = vmatpush1.bf16.msra.mxu0 0
  %4483 = vmatprep.subr.bf16.mxu0 0
  %4484 = vmatpush1.bf16.msra.mxu0 0
  %4485 = vmatprep.subr.bf16.mxu0 0
  %4486 = vmatpush1.bf16.msra.mxu0 0
  %4487 = vmatprep.subr.bf16.mxu0 0
  %4488 = vmatpush1.bf16.msra.mxu0 0
  %4489 = vmatprep.mubr.bf16.mxu0 0
  %4490 = vmatmul.mubr.bf16.gmra.mrb[0].mxu0 %v4446
  %v4491 = vpop.f32.mrb[0].mxu0
  %v4492 = vadd.f32 0.0, %v4491
  %v4493 = vpop.f32.mrb[0].mxu0
  %v4494 = vpop.f32.mrb[0].mxu0
  %v4495 = vadd.f32 0.0, %v4494
  %v4496 = vpop.f32.mrb[0].mxu0
  %4497 = vmatprep.mubr.bf16.mxu0 0
  %4498 = vmatmul.mubr.bf16.gmra.mrb[0].mxu0 %v4449
  %v4499 = vpop.f32.mrb[0].mxu0
  %v4500 = vadd.f32 0.0, %v4499
  %v4501 = vpop.f32.mrb[0].mxu0
  %v4502 = vpop.f32.mrb[0].mxu0
  %v4503 = vadd.f32 0.0, %v4502
  %v4504 = vpop.f32.mrb[0].mxu0
  %4505 = vmatprep.mubr.bf16.mxu0 0
  %4506 = vmatmul.mubr.bf16.gmra.mrb[0].mxu0 %v4452
  %v4507 = vpop.f32.mrb[0].mxu0
  %v4508 = vadd.f32 0.0, %v4507
  %v4509 = vpop.f32.mrb[0].mxu0
  %v4510 = vpop.f32.mrb[0].mxu0
  %v4511 = vadd.f32 0.0, %v4510
  %v4512 = vpop.f32.mrb[0].mxu0
  %4513 = vmatprep.mubr.bf16.mxu0 0
  %4514 = vmatmul.mubr.bf16.gmra.mrb[0].mxu0 %v4455
  %v4515 = vpop.f32.mrb[0].mxu0
  %v4516 = vadd.f32 0.0, %v4515
  %v4517 = vpop.f32.mrb[0].mxu0
  %v4518 = vpop.f32.mrb[0].mxu0
  %v4519 = vadd.f32 0.0, %v4518
  %v4520 = vpop.f32.mrb[0].mxu0
  %4521 = vdwg.mxu0
  %v4523 = vsel %vm3442, %v4441, 0
  %v4526 = vsel %vm3442, %v4442, 0
  %v4529 = vsel %vm3442, %v4443, 0
  %v4532 = vsel %vm3442, %v4444, 0
  %4534 = vmatprep.subr.bf16.mxu0 0
  %4535 = vmatpush1.bf16.msra.mxu0 %v4436
  %4536 = vmatprep.subr.bf16.mxu0 0
  %4537 = vmatpush1.bf16.msra.mxu0 0
  %4538 = vmatprep.subr.bf16.mxu0 0
  %4539 = vmatpush1.bf16.msra.mxu0 0
  %4540 = vmatprep.subr.bf16.mxu0 0
  %4541 = vmatpush1.bf16.msra.mxu0 0
  %4542 = vmatprep.subr.bf16.mxu0 0
  %4543 = vmatpush1.bf16.msra.mxu0 0
  %4544 = vmatprep.subr.bf16.mxu0 0
  %4545 = vmatpush1.bf16.msra.mxu0 0
  %4546 = vmatprep.subr.bf16.mxu0 0
  %4547 = vmatpush1.bf16.msra.mxu0 0
  %4548 = vmatprep.subr.bf16.mxu0 0
  %4549 = vmatpush1.bf16.msra.mxu0 0
  %4550 = vmatprep.subr.bf16.mxu0 0
  %4551 = vmatpush1.bf16.msra.mxu0 0
  %4552 = vmatprep.subr.bf16.mxu0 0
  %4553 = vmatpush1.bf16.msra.mxu0 0
  %4554 = vmatprep.subr.bf16.mxu0 0
  %4555 = vmatpush1.bf16.msra.mxu0 0
  %4556 = vmatprep.subr.bf16.mxu0 0
  %4557 = vmatpush1.bf16.msra.mxu0 0
  %4558 = vmatprep.subr.bf16.mxu0 0
  %4559 = vmatpush1.bf16.msra.mxu0 0
  %4560 = vmatprep.subr.bf16.mxu0 0
  %4561 = vmatpush1.bf16.msra.mxu0 0
  %4562 = vmatprep.subr.bf16.mxu0 0
  %4563 = vmatpush1.bf16.msra.mxu0 0
  %4564 = vmatprep.subr.bf16.mxu0 0
  %4565 = vmatpush1.bf16.msra.mxu0 0
  %4566 = vmatprep.mubr.bf16.mxu0 0
  %4567 = vmatmul.mubr.bf16.gmra.mrb[0].mxu0 %v4523
  %v4568 = vpop.f32.mrb[0].mxu0
  %v4569 = vadd.f32 0.0, %v4568
  %v4570 = vpop.f32.mrb[0].mxu0
  %v4571 = vpop.f32.mrb[0].mxu0
  %v4572 = vadd.f32 0.0, %v4571
  %v4573 = vpop.f32.mrb[0].mxu0
  %4574 = vmatprep.mubr.bf16.mxu0 0
  %4575 = vmatmul.mubr.bf16.gmra.mrb[0].mxu0 %v4526
  %v4576 = vpop.f32.mrb[0].mxu0
  %v4577 = vadd.f32 0.0, %v4576
  %v4578 = vpop.f32.mrb[0].mxu0
  %v4579 = vpop.f32.mrb[0].mxu0
  %v4580 = vadd.f32 0.0, %v4579
  %v4581 = vpop.f32.mrb[0].mxu0
  %4582 = vmatprep.mubr.bf16.mxu0 0
  %4583 = vmatmul.mubr.bf16.gmra.mrb[0].mxu0 %v4529
  %v4584 = vpop.f32.mrb[0].mxu0
  %v4585 = vadd.f32 0.0, %v4584
  %v4586 = vpop.f32.mrb[0].mxu0
  %v4587 = vpop.f32.mrb[0].mxu0
  %v4588 = vadd.f32 0.0, %v4587
  %v4589 = vpop.f32.mrb[0].mxu0
  %4590 = vmatprep.mubr.bf16.mxu0 0
  %4591 = vmatmul.mubr.bf16.gmra.mrb[0].mxu0 %v4532
  %v4592 = vpop.f32.mrb[0].mxu0
  %v4593 = vadd.f32 0.0, %v4592
  %v4594 = vpop.f32.mrb[0].mxu0
  %v4595 = vpop.f32.mrb[0].mxu0
  %v4596 = vadd.f32 0.0, %v4595
  %v4597 = vpop.f32.mrb[0].mxu0
  %4598 = vdwg.mxu0
  %v4599 = vadd.f32 %v2754, %v4492
  %v4600 = vadd.f32 %v2755, %v4495
  %v4601 = vadd.f32 %v2756, %v4500
  %v4602 = vadd.f32 %v2757, %v4503
  %v4603 = vadd.f32 %v2758, %v4508
  %v4604 = vadd.f32 %v2759, %v4511
  %v4605 = vadd.f32 %v2760, %v4516
  %v4606 = vadd.f32 %v2761, %v4519
  %v4607 = vadd.f32 %v2762, %v4569
  %v4608 = vadd.f32 %v2763, %v4572
  %v4609 = vadd.f32 %v2764, %v4577
  %v4610 = vadd.f32 %v2765, %v4580
  %v4611 = vadd.f32 %v2766, %v4585
  %v4612 = vadd.f32 %v2767, %v4588
  %v4613 = vadd.f32 %v2768, %v4593
  %v4614 = vadd.f32 %v2769, %v4596
  %4615 = vst.msk [vmem:[%s14] sm:$0xff] %vm66, %v4599
  %4616 = vst.msk [vmem:[%s14 + $0x8] sm:$0xff] %vm66, %v4600
  %4617 = vst.msk [vmem:[%s14 + $0x10] sm:$0xff] %vm66, %v4601
  %4618 = vst.msk [vmem:[%s14 + $0x18] sm:$0xff] %vm66, %v4602
  %4619 = vst.msk [vmem:[%s14 + $0x20] sm:$0xff] %vm66, %v4603
  %4620 = vst.msk [vmem:[%s14 + $0x28] sm:$0xff] %vm66, %v4604
  %4621 = vst.msk [vmem:[%s14 + $0x30] sm:$0xff] %vm66, %v4605
  %4622 = vst.msk [vmem:[%s14 + $0x38] sm:$0xff] %vm66, %v4606
  %4623 = vst.msk [vmem:[%s14 + $0x40] sm:$0xff] %vm66, %v4607
  %4624 = vst.msk [vmem:[%s14 + $0x48] sm:$0xff] %vm66, %v4608
  %4625 = vst.msk [vmem:[%s14 + $0x50] sm:$0xff] %vm66, %v4609
  %4626 = vst.msk [vmem:[%s14 + $0x58] sm:$0xff] %vm66, %v4610
  %4627 = vst.msk [vmem:[%s14 + $0x60] sm:$0xff] %vm66, %v4611
  %4628 = vst.msk [vmem:[%s14 + $0x68] sm:$0xff] %vm66, %v4612
  %4629 = vst.msk [vmem:[%s14 + $0x70] sm:$0xff] %vm66, %v4613
  %4630 = vst.msk [vmem:[%s14 + $0x78] sm:$0xff] %vm66, %v4614
  // Predicated region
  $region58: #{tpu_custom_call.1} parent=0 // pred_check
    _
  $region59: #{tpu_custom_call.1} parent=0 // pred_check_branch
    %4632 = sbr.rel (0) target = $region61
  $region60: #{tpu_custom_call.1} parent=0 // pred_region
    _
  $region61: #{tpu_custom_call.1} parent=0 // pred_fallthru
    _
  // Predicated region
  $region62: #{tpu_custom_call.1} parent=0 // pred_check
    _
  $region63: #{tpu_custom_call.1} parent=0 // pred_check_branch
    %4634 = sbr.rel (0) target = $region65
  $region64: #{tpu_custom_call.1} parent=0 // pred_region
    _
  $region65: #{tpu_custom_call.1} parent=0 // pred_fallthru
    _

</llo_original>
